<compile_context>
chip_gen: v5e
topology: v5e:2x2
jax: 0.10.0
libtpu: 0.0.40
codegen_flags: <defaults>
</compile_context>

<pallas_src>
import functools
import math

import jax
import jax.numpy as jnp
from jax import lax
from jax.experimental import pallas as pl
from jax.experimental.pallas import tpu as pltpu

EMB_S = 32          # per-head embedding
HEADS = 8           # head count
EMB = EMB_S * HEADS # 256
LN_EPS = 1e-5


# ---------------------------------------------------------------------------
# elementwise helpers (usable both inside the kernel and in the JAX reference)
# ---------------------------------------------------------------------------
def _recip_exact(v):
    return 1.0 / v


def _erf_nonneg(x, recip=_recip_exact):
    # Abramowitz & Stegun 7.1.26 (valid for x >= 0), max abs err ~1.5e-7.
    a1, a2, a3, a4, a5 = (0.254829592, -0.284496736, 1.421413741,
                          -1.453152027, 1.061405429)
    p = 0.3275911
    t = recip(1.0 + p * x)
    poly = ((((a5 * t + a4) * t + a3) * t + a2) * t + a1) * t
    return 1.0 - poly * jnp.exp(-x * x)


def _softplus(x):
    # branch-free, overflow-safe: softplus(x) = max(x, 0) + log(1 + exp(-|x|))
    return jnp.maximum(x, 0.0) + jnp.log(1.0 + jnp.exp(-jnp.abs(x)))


def _serf(x, recip=_recip_exact):
    # SERF(x) = x * erf(softplus(x)); softplus(x) >= 0 so the A&S erf branch holds.
    return x * _erf_nonneg(_softplus(x), recip)


def _layernorm(x, gamma, beta):
    mu = jnp.mean(x, axis=-1, keepdims=True)
    xc = x - mu
    var = jnp.mean(xc * xc, axis=-1, keepdims=True)
    return xc * lax.rsqrt(var + LN_EPS) * gamma + beta


# ---------------------------------------------------------------------------
# Pallas kernel: one grid step == one block of B_blk batch elements in VMEM
# ---------------------------------------------------------------------------
def _res_encoder_kernel(x_ref, prev_ref, wkqv_bd_ref, wproj_ref,
                        g1_ref, be1_ref, w1_ref, b1_ref,
                        w2_ref, b2_ref, g2_ref, be2_ref,
                        xo_ref, prevo_ref):
    # TODO(synk): the optional `mask` argument of forward() is not implemented
    # (default mask=None path only).
    Bb, T, E = x_ref.shape
    H = prev_ref.shape[1]
    S = E // H
    recip = lambda v: pl.reciprocal(v, approx=True)
    bqk_dims = (((2,), (2,)), ((0,), (0,)))   # (B,T,S) x (B,T,S) -> (B,T,T)
    bpv_dims = (((2,), (1,)), ((0,), (0,)))   # (B,T,T) x (B,T,S) -> (B,T,S)

    x = x_ref[...]                                   # (Bb, T, E) f32
    xf = x.reshape(Bb * T, E)                        # rows = Bb*T

    # fused per-head kqv: one (rows, E) @ (E, 3E) bf16 matmul (f32 accumulation)
    # against a block-diagonal weight; columns [h*3S:(h+1)*3S] = [k_h | q_h | v_h],
    # 1/sqrt(S) already folded into the q columns by the wrapper.
    kqv = jnp.dot(xf.astype(jnp.bfloat16), wkqv_bd_ref[...],
                  preferred_element_type=jnp.float32)        # (rows, 3E) f32

    # residual multi-head attention, batched over the batch dim; bounded static
    # 8-iteration head loop (score matmuls are inherently per-head).
    head_outs = []
    for h in range(H):
        c = h * 3 * S
        k = kqv[:, c:c + S].reshape(Bb, T, S)
        q = kqv[:, c + S:c + 2 * S].reshape(Bb, T, S)
        v = kqv[:, c + 2 * S:c + 3 * S].reshape(Bb, T, S)
        # q @ k^T kept in f32 (returned residual scores accumulate across layers)
        att = lax.dot_general(q, k, bqk_dims,
                              preferred_element_type=jnp.float32)     # (Bb,T,T)
        att = att + prev_ref[:, h, :, :]             # residual attention scores
        prevo_ref[:, h, :, :] = att                  # pre-softmax scores returned
        # TODO(synk): if production T < 128 a lane-dense (B, H*T*T) score layout
        # would avoid masked partial stores here.
        # softmax over the key axis (last axis here == torch dim=2)
        att = att - jnp.max(att, axis=-1, keepdims=True)
        num = jnp.exp(att)
        p = num * recip(jnp.sum(num, axis=-1, keepdims=True))
        ho = lax.dot_general(p.astype(jnp.bfloat16), v.astype(jnp.bfloat16),
                             bpv_dims, preferred_element_type=jnp.float32)
        head_outs.append(ho.reshape(Bb * T, S).astype(jnp.bfloat16))
    res = jnp.concatenate(head_outs, axis=-1)        # (rows, E) bf16

    # single fused output projection: K = E (full MXU depth), bf16 ops, f32 acc.
    proj = jnp.dot(res, wproj_ref[...], preferred_element_type=jnp.float32)

    # dp1 dropout: identity (eval mode)
    x1 = _layernorm(xf + proj, g1_ref[...], be1_ref[...])             # (rows, E)

    # --- feed-forward: Linear -> SERF -> Linear (bf16 operands, f32 accum) ---
    h1 = jnp.dot(x1.astype(jnp.bfloat16), w1_ref[...],
                 preferred_element_type=jnp.float32) + b1_ref[...]    # (rows, 4E)
    # TODO(synk): on v6e/v7x the SERF chain could run in bf16 (~2x VPU/EUP);
    # kept f32 so the same kernel stays correct/fast on v5e (no bf16 VPU/EUP).
    h1 = _serf(h1, recip)
    h2 = jnp.dot(h1.astype(jnp.bfloat16), w2_ref[...],
                 preferred_element_type=jnp.float32) + b2_ref[...]    # (rows, E)
    # dp2 dropout: identity (eval mode)
    xo_ref[...] = _layernorm(x1 + h2, g2_ref[...], be2_ref[...]).reshape(Bb, T, E)


# ---------------------------------------------------------------------------
# wrapper
# ---------------------------------------------------------------------------
@functools.lru_cache(maxsize=None)
def _vmem_limit_bytes():
    """Generation-aware scoped-VMEM limit: 3/4 of physical, capped at 96 MiB
    (v7x: 64 MiB physical -> 48 MiB; v5e/v6e: 128 MiB -> 96 MiB)."""
    phys = 64 * 1024 * 1024                          # conservative default (v7x)
    try:
        phys = int(pltpu.get_tpu_info().vmem_capacity_bytes)
    except Exception:
        pass
    return max(32 * 1024 * 1024, min((phys * 3) // 4, 96 * 1024 * 1024))


def _choose_b_blk(B, T, H, emb, vmem_limit):
    """Largest divisor of B whose block fits the VMEM budget; keeps >= 2 grid
    steps when B >= 2 so v7x's two TensorCores both get work."""
    w_elems = emb * 3 * emb + emb * emb + emb * 4 * emb + 4 * emb * emb
    weight_bytes = 2 * (2 * w_elems) + 64 * 1024     # bf16 weights, double-buffered
    budget = vmem_limit - weight_bytes - (4 << 20)   # margin for spills / temps
    max_blk = B if B < 2 else B // 2                 # >= 2 grid steps when B >= 2
    best = 1
    for cand in range(1, max_blk + 1):
        if B % cand:
            continue
        rows = cand * T
        att = cand * H * T * T * 4                   # one f32 (Bb,H,T,T)
        io = 4 * att + 4 * rows * emb * 4            # prev/x, in+out, double-buffered
        live = (2 * rows * 3 * emb * 4               # kqv + per-head slice copies
                + 4 * att                            # scores / exp / p (+ bf16 p)
                + 3 * rows * emb * 4                 # head outs / concat / res
                + 4 * rows * emb * 4                 # proj / x1 / LN temps
                + 6 * rows * 4 * emb * 4             # h1 + SERF temps + bf16 copy
                + 2 * rows * emb * 4)                # h2 / out
        if io + live <= budget:
            best = cand
    return best


@jax.jit
def _res_encoder_block_call(x, prev_bhtt, params):
    B, T, emb = x.shape
    H = prev_bhtt.shape[1]
    S = emb // H
    vmem_limit = _vmem_limit_bytes()
    b_blk = _choose_b_blk(B, T, H, emb, vmem_limit)
    grid = (B // b_blk,)

    # fused kqv weight: block-diagonal (emb, 3*emb), same (S, 3S) block per head;
    # 1/sqrt(S) folded into the q columns; bf16 MXU operand (f32 accumulation).
    wkqv_t = params["wkqv_t"]
    wkqv_t = wkqv_t.at[:, S:2 * S].multiply(1.0 / math.sqrt(S))
    wkqv_bd = jnp.kron(jnp.eye(H, dtype=wkqv_t.dtype), wkqv_t).astype(jnp.bfloat16)
    # bf16 MXU operands for proj / FFN (f32 accumulation inside the kernel)
    wproj_bf = params["wproj_t"].astype(jnp.bfloat16)
    w1_bf = params["w1_t"].astype(jnp.bfloat16)
    w2_bf = params["w2_t"].astype(jnp.bfloat16)

    # TODO(synk): constant-weight inputs could use pipeline_mode=pl.Buffered(1)
    # to skip double-buffering (~1.6 MiB VMEM); left at the default for safety.
    def full2d(arr):
        return pl.BlockSpec(arr.shape, lambda g: (0, 0))

    in_specs = [
        pl.BlockSpec((b_blk, T, emb), lambda g: (g, 0, 0)),      # x
        pl.BlockSpec((b_blk, H, T, T), lambda g: (g, 0, 0, 0)),  # prev (B,H,T,T)
        full2d(wkqv_bd),
        full2d(wproj_bf),
        full2d(params["g1"]),
        full2d(params["be1"]),
        full2d(w1_bf),
        full2d(params["b1"]),
        full2d(w2_bf),
        full2d(params["b2"]),
        full2d(params["g2"]),
        full2d(params["be2"]),
    ]
    out_specs = [
        pl.BlockSpec((b_blk, T, emb), lambda g: (g, 0, 0)),
        pl.BlockSpec((b_blk, H, T, T), lambda g: (g, 0, 0, 0)),
    ]
    out_shape = (jax.ShapeDtypeStruct((B, T, emb), jnp.float32),
                 jax.ShapeDtypeStruct((B, H, T, T), jnp.float32))

    fn = pl.pallas_call(
        _res_encoder_kernel,
        out_shape=out_shape,
        grid_spec=pltpu.PrefetchScalarGridSpec(
            num_scalar_prefetch=0,
            grid=grid,
            in_specs=in_specs,
            out_specs=out_specs,
        ),
        compiler_params=pltpu.CompilerParams(
            dimension_semantics=("parallel",),
            vmem_limit_bytes=vmem_limit),
    )
    return fn(x, prev_bhtt, wkqv_bd, wproj_bf,
              params["g1"], params["be1"],
              w1_bf, params["b1"],
              w2_bf, params["b2"],
              params["g2"], params["be2"])


def res_encoder_forward(x, params, prev=None):
    """Matches ResEncoderBlock.forward(x, prev=None, mask=None) semantics."""
    B, T, _ = x.shape
    if prev is None:
        prev_bhtt = jnp.zeros((B, HEADS, T, T), jnp.float32)
    else:
        # TODO(synk): on v5e (lowest HBM BW) the prev scores stream could be bf16
        # if multi-layer accuracy permits; kept f32 here.
        prev_bhtt = jnp.transpose(prev, (0, 3, 1, 2))     # (B,T,T,H)->(B,H,T,T)
    x_out, prev_bhtt_out = _res_encoder_block_call(x, prev_bhtt, params)
    return x_out, jnp.transpose(prev_bhtt_out, (0, 2, 3, 1))  # back to (B,T,T,H)


# ---------------------------------------------------------------------------
# deterministic parameter init (shapes from the module's __init__)
# ---------------------------------------------------------------------------
def init_params(key, emb_s=EMB_S, head_cnt=HEADS):
    emb = emb_s * head_cnt
    ks = jax.random.split(key, 6)

    def lin(k, fan_in, shape):
        bound = 1.0 / math.sqrt(fan_in)
        return jax.random.uniform(k, shape, jnp.float32, -bound, bound)

    return dict(
        # stored pre-transposed (right-multiply form): y = x @ W_t (+ b)
        wkqv_t=lin(ks[0], emb_s, (emb_s, 3 * emb_s)),      # kqv: Linear(32, 96)
        wproj_t=lin(ks[1], emb, (emb, emb)),               # proj: Linear(256, 256)
        w1_t=lin(ks[2], emb, (emb, 4 * emb)),              # ff[0]: Linear(256, 1024)
        b1=lin(ks[3], emb, (1, 4 * emb)),
        w2_t=lin(ks[4], 4 * emb, (4 * emb, emb)),          # ff[2]: Linear(1024, 256)
        b2=lin(ks[5], 4 * emb, (1, emb)),
        g1=jnp.ones((1, emb), jnp.float32),                # ln1
        be1=jnp.zeros((1, emb), jnp.float32),
        g2=jnp.ones((1, emb), jnp.float32),                # ln2
        be2=jnp.zeros((1, emb), jnp.float32),
    )


# ---------------------------------------------------------------------------
# pure-JAX reference (mirrors the PyTorch forward) for verification
# ---------------------------------------------------------------------------
def ref_forward(x, params, prev=None):
    B, T, emb = x.shape
    H, S = HEADS, EMB_S
    xh = x.reshape(B, T, H, S)
    kqv = jnp.einsum("bths,sk->bthk", xh, params["wkqv_t"])
    k, q, v = kqv[..., :S], kqv[..., S:2 * S], kqv[..., 2 * S:]
    att_score = jnp.einsum("bihk,bjhk->bijh", q, k) / math.sqrt(S)
    if prev is not None:
        att_score = att_score + prev
    att = jax.nn.softmax(att_score, axis=2)
    res = jnp.einsum("btih,bihs->bths", att, v).reshape(B, T, emb)
    proj = res @ params["wproj_t"]
    x1 = _layernorm(x + proj, params["g1"], params["be1"])
    h1 = _serf(x1 @ params["w1_t"] + params["b1"])
    h2 = h1 @ params["w2_t"] + params["b2"]
    x2 = _layernorm(x1 + h2, params["g2"], params["be2"])
    return x2, att_score


if __name__ == "__main__":
    key = jax.random.PRNGKey(0)
    pkey, xkey = jax.random.split(key)
    params = init_params(pkey)

    B, T = 2, 8
    x = jax.random.normal(xkey, (B, T, EMB), jnp.float32)

    # first call: prev=None
    out_x, out_prev = res_encoder_forward(x, params, prev=None)
    jax.block_until_ready((out_x, out_prev))
    ref_x, ref_prev = ref_forward(x, params, prev=None)
    assert out_x.shape == (B, T, EMB) and out_prev.shape == (B, T, T, HEADS)
    assert jnp.allclose(out_x, ref_x, atol=2e-2, rtol=2e-2), \
        float(jnp.max(jnp.abs(out_x - ref_x)))
    assert jnp.allclose(out_prev, ref_prev, atol=2e-2, rtol=2e-2), \
        float(jnp.max(jnp.abs(out_prev - ref_prev)))

    # second call: residual attention scores fed back (prev path)
    out_x2, out_prev2 = res_encoder_forward(out_x, params, prev=out_prev)
    jax.block_until_ready((out_x2, out_prev2))
    ref_x2, ref_prev2 = ref_forward(ref_x, params, prev=ref_prev)
    assert jnp.allclose(out_x2, ref_x2, atol=2e-2, rtol=2e-2)
    assert jnp.allclose(out_prev2, ref_prev2, atol=2e-2, rtol=2e-2)

    print("KERNEL_OK")
</pallas_src>

<mosaic_0001>
module attributes {stable_mosaic.version = 11 : i64} {
  func.func @_res_encoder_kernel(%arg0: i32, %arg1: memref<1x8x256xf32, #tpu.memory_space<vmem>>, %arg2: memref<1x8x8x8xf32, #tpu.memory_space<vmem>>, %arg3: memref<256x768xbf16, #tpu.memory_space<vmem>>, %arg4: memref<256x256xbf16, #tpu.memory_space<vmem>>, %arg5: memref<1x256xf32, #tpu.memory_space<vmem>>, %arg6: memref<1x256xf32, #tpu.memory_space<vmem>>, %arg7: memref<256x1024xbf16, #tpu.memory_space<vmem>>, %arg8: memref<1x1024xf32, #tpu.memory_space<vmem>>, %arg9: memref<1024x256xbf16, #tpu.memory_space<vmem>>, %arg10: memref<1x256xf32, #tpu.memory_space<vmem>>, %arg11: memref<1x256xf32, #tpu.memory_space<vmem>>, %arg12: memref<1x256xf32, #tpu.memory_space<vmem>>, %arg13: memref<1x8x256xf32, #tpu.memory_space<vmem>>, %arg14: memref<1x8x8x8xf32, #tpu.memory_space<vmem>>) attributes {dimension_semantics = [#tpu.dimension_semantics<parallel>], iteration_bounds = array<i64: 2>, scalar_prefetch = 0 : i64, scratch_operands = 0 : i64, tpu.core_type = #tpu.core_type<tc>, window_params = [{transform_indices = @transform_0, window_bounds = array<i64: 1, 8, 256>}, {transform_indices = @transform_1, window_bounds = array<i64: 1, 8, 8, 8>}, {pipeline_mode = #tpu.pipeline_mode<synchronous>, transform_indices = @transform_2, window_bounds = array<i64: 256, 768>}, {pipeline_mode = #tpu.pipeline_mode<synchronous>, transform_indices = @transform_3, window_bounds = array<i64: 256, 256>}, {pipeline_mode = #tpu.pipeline_mode<synchronous>, transform_indices = @transform_4, window_bounds = array<i64: 1, 256>}, {pipeline_mode = #tpu.pipeline_mode<synchronous>, transform_indices = @transform_5, window_bounds = array<i64: 1, 256>}, {pipeline_mode = #tpu.pipeline_mode<synchronous>, transform_indices = @transform_6, window_bounds = array<i64: 256, 1024>}, {pipeline_mode = #tpu.pipeline_mode<synchronous>, transform_indices = @transform_7, window_bounds = array<i64: 1, 1024>}, {pipeline_mode = #tpu.pipeline_mode<synchronous>, transform_indices = @transform_8, window_bounds = array<i64: 1024, 256>}, {pipeline_mode = #tpu.pipeline_mode<synchronous>, transform_indices = @transform_9, window_bounds = array<i64: 1, 256>}, {pipeline_mode = #tpu.pipeline_mode<synchronous>, transform_indices = @transform_10, window_bounds = array<i64: 1, 256>}, {pipeline_mode = #tpu.pipeline_mode<synchronous>, transform_indices = @transform_11, window_bounds = array<i64: 1, 256>}, {transform_indices = @transform_12, window_bounds = array<i64: 1, 8, 256>}, {transform_indices = @transform_13, window_bounds = array<i64: 1, 8, 8, 8>}]} {
    %c0 = arith.constant 0 : index
    %c0_0 = arith.constant 0 : index
    %c0_1 = arith.constant 0 : index
    %0 = vector.load %arg1[%c0, %c0_0, %c0_1] : memref<1x8x256xf32, #tpu.memory_space<vmem>>, vector<1x8x256xf32>
    %1 = vector.shape_cast %0 : vector<1x8x256xf32> to vector<8x256xf32>
    %2 = arith.truncf %1 : vector<8x256xf32> to vector<8x256xbf16>
    %c0_2 = arith.constant 0 : index
    %c0_3 = arith.constant 0 : index
    %3 = vector.load %arg3[%c0_2, %c0_3] : memref<256x768xbf16, #tpu.memory_space<vmem>>, vector<256x768xbf16>
    %cst = arith.constant dense<0.000000e+00> : vector<8x768xf32>
    %4 = tpu.matmul %2, %3, %cst {dimension_numbers = #tpu.dot_dimension_numbers<[1], [0], [0], [1], [0, 0, 1, 1], [], []>} : vector<8x256xbf16>, vector<256x768xbf16>, vector<8x768xf32> -> vector<8x768xf32>
    %5 = vector.extract_strided_slice %4 {offsets = [0, 0], sizes = [8, 32], strides = [1, 1]} : vector<8x768xf32> to vector<8x32xf32>
    %6 = vector.shape_cast %5 : vector<8x32xf32> to vector<1x8x32xf32>
    %7 = vector.extract_strided_slice %4 {offsets = [0, 32], sizes = [8, 32], strides = [1, 1]} : vector<8x768xf32> to vector<8x32xf32>
    %8 = vector.shape_cast %7 : vector<8x32xf32> to vector<1x8x32xf32>
    %9 = vector.extract_strided_slice %4 {offsets = [0, 64], sizes = [8, 32], strides = [1, 1]} : vector<8x768xf32> to vector<8x32xf32>
    %10 = vector.shape_cast %9 : vector<8x32xf32> to vector<1x8x32xf32>
    %cst_4 = arith.constant dense<0.000000e+00> : vector<1x8x8xf32>
    %11 = tpu.matmul %8, %6, %cst_4 {dimension_numbers = #tpu.dot_dimension_numbers<[2], [2], [1], [1], [0, 0, 0, 1, 1, 1], [0], [0]>} : vector<1x8x32xf32>, vector<1x8x32xf32>, vector<1x8x8xf32> -> vector<1x8x8xf32>
    %c0_5 = arith.constant 0 : index
    %c0_6 = arith.constant 0 : index
    %c0_7 = arith.constant 0 : index
    %c0_8 = arith.constant 0 : index
    %12 = vector.load %arg2[%c0_5, %c0_6, %c0_7, %c0_8] : memref<1x8x8x8xf32, #tpu.memory_space<vmem>>, vector<1x1x8x8xf32>
    %13 = vector.shape_cast %12 : vector<1x1x8x8xf32> to vector<1x8x8xf32>
    %14 = arith.addf %11, %13 : vector<1x8x8xf32>
    %c0_9 = arith.constant 0 : index
    %c0_10 = arith.constant 0 : index
    %c0_11 = arith.constant 0 : index
    %c0_12 = arith.constant 0 : index
    %15 = vector.load %arg14[%c0_9, %c0_10, %c0_11, %c0_12] : memref<1x8x8x8xf32, #tpu.memory_space<vmem>>, vector<1x1x8x8xf32>
    %16 = vector.shape_cast %15 : vector<1x1x8x8xf32> to vector<1x8x8xf32>
    %17 = vector.shape_cast %14 : vector<1x8x8xf32> to vector<1x1x8x8xf32>
    tpu.vector_store %arg14[%c0_9, %c0_10, %c0_11, %c0_12], %17 {strides = array<i32>} : memref<1x8x8x8xf32, #tpu.memory_space<vmem>>, vector<1x1x8x8xf32>,
    %cst_13 = arith.constant dense<0xFF800000> : vector<1x8xf32>
    %18 = vector.multi_reduction <maximumf>, %14, %cst_13 [2] : vector<1x8x8xf32> to vector<1x8xf32>
    %19 = vector.shape_cast %18 : vector<1x8xf32> to vector<1x8x1xf32>
    %20 = vector.broadcast %19 : vector<1x8x1xf32> to vector<1x8x8xf32>
    %21 = arith.subf %14, %20 : vector<1x8x8xf32>
    %22 = math.exp %21 : vector<1x8x8xf32>
    %cst_14 = arith.constant dense<0.000000e+00> : vector<1x8xf32>
    %23 = vector.multi_reduction <add>, %22, %cst_14 [2] : vector<1x8x8xf32> to vector<1x8xf32>
    %24 = vector.shape_cast %23 : vector<1x8xf32> to vector<1x8x1xf32>
    %25 = tpu.reciprocal %24 {approx = true} : vector<1x8x1xf32> -> vector<1x8x1xf32>
    %26 = vector.broadcast %25 : vector<1x8x1xf32> to vector<1x8x8xf32>
    %27 = arith.mulf %22, %26 : vector<1x8x8xf32>
    %28 = arith.truncf %27 : vector<1x8x8xf32> to vector<1x8x8xbf16>
    %29 = arith.truncf %10 : vector<1x8x32xf32> to vector<1x8x32xbf16>
    %cst_15 = arith.constant dense<0.000000e+00> : vector<1x8x32xf32>
    %30 = tpu.matmul %28, %29, %cst_15 {dimension_numbers = #tpu.dot_dimension_numbers<[2], [1], [1], [2], [0, 0, 0, 1, 1, 2], [0], [0]>} : vector<1x8x8xbf16>, vector<1x8x32xbf16>, vector<1x8x32xf32> -> vector<1x8x32xf32>
    %31 = vector.shape_cast %30 : vector<1x8x32xf32> to vector<8x32xf32>
    %32 = arith.truncf %31 : vector<8x32xf32> to vector<8x32xbf16>
    %33 = vector.extract_strided_slice %4 {offsets = [0, 96], sizes = [8, 32], strides = [1, 1]} : vector<8x768xf32> to vector<8x32xf32>
    %34 = vector.shape_cast %33 : vector<8x32xf32> to vector<1x8x32xf32>
    %35 = vector.extract_strided_slice %4 {offsets = [0, 128], sizes = [8, 32], strides = [1, 1]} : vector<8x768xf32> to vector<8x32xf32>
    %36 = vector.shape_cast %35 : vector<8x32xf32> to vector<1x8x32xf32>
    %37 = vector.extract_strided_slice %4 {offsets = [0, 160], sizes = [8, 32], strides = [1, 1]} : vector<8x768xf32> to vector<8x32xf32>
    %38 = vector.shape_cast %37 : vector<8x32xf32> to vector<1x8x32xf32>
    %cst_16 = arith.constant dense<0.000000e+00> : vector<1x8x8xf32>
    %39 = tpu.matmul %36, %34, %cst_16 {dimension_numbers = #tpu.dot_dimension_numbers<[2], [2], [1], [1], [0, 0, 0, 1, 1, 1], [0], [0]>} : vector<1x8x32xf32>, vector<1x8x32xf32>, vector<1x8x8xf32> -> vector<1x8x8xf32>
    %c0_17 = arith.constant 0 : index
    %c1 = arith.constant 1 : index
    %c0_18 = arith.constant 0 : index
    %c0_19 = arith.constant 0 : index
    %40 = vector.load %arg2[%c0_17, %c1, %c0_18, %c0_19] : memref<1x8x8x8xf32, #tpu.memory_space<vmem>>, vector<1x1x8x8xf32>
    %41 = vector.shape_cast %40 : vector<1x1x8x8xf32> to vector<1x8x8xf32>
    %42 = arith.addf %39, %41 : vector<1x8x8xf32>
    %c0_20 = arith.constant 0 : index
    %c1_21 = arith.constant 1 : index
    %c0_22 = arith.constant 0 : index
    %c0_23 = arith.constant 0 : index
    %43 = vector.load %arg14[%c0_20, %c1_21, %c0_22, %c0_23] : memref<1x8x8x8xf32, #tpu.memory_space<vmem>>, vector<1x1x8x8xf32>
    %44 = vector.shape_cast %43 : vector<1x1x8x8xf32> to vector<1x8x8xf32>
    %45 = vector.shape_cast %42 : vector<1x8x8xf32> to vector<1x1x8x8xf32>
    tpu.vector_store %arg14[%c0_20, %c1_21, %c0_22, %c0_23], %45 {strides = array<i32>} : memref<1x8x8x8xf32, #tpu.memory_space<vmem>>, vector<1x1x8x8xf32>,
    %cst_24 = arith.constant dense<0xFF800000> : vector<1x8xf32>
    %46 = vector.multi_reduction <maximumf>, %42, %cst_24 [2] : vector<1x8x8xf32> to vector<1x8xf32>
    %47 = vector.shape_cast %46 : vector<1x8xf32> to vector<1x8x1xf32>
    %48 = vector.broadcast %47 : vector<1x8x1xf32> to vector<1x8x8xf32>
    %49 = arith.subf %42, %48 : vector<1x8x8xf32>
    %50 = math.exp %49 : vector<1x8x8xf32>
    %cst_25 = arith.constant dense<0.000000e+00> : vector<1x8xf32>
    %51 = vector.multi_reduction <add>, %50, %cst_25 [2] : vector<1x8x8xf32> to vector<1x8xf32>
    %52 = vector.shape_cast %51 : vector<1x8xf32> to vector<1x8x1xf32>
    %53 = tpu.reciprocal %52 {approx = true} : vector<1x8x1xf32> -> vector<1x8x1xf32>
    %54 = vector.broadcast %53 : vector<1x8x1xf32> to vector<1x8x8xf32>
    %55 = arith.mulf %50, %54 : vector<1x8x8xf32>
    %56 = arith.truncf %55 : vector<1x8x8xf32> to vector<1x8x8xbf16>
    %57 = arith.truncf %38 : vector<1x8x32xf32> to vector<1x8x32xbf16>
    %cst_26 = arith.constant dense<0.000000e+00> : vector<1x8x32xf32>
    %58 = tpu.matmul %56, %57, %cst_26 {dimension_numbers = #tpu.dot_dimension_numbers<[2], [1], [1], [2], [0, 0, 0, 1, 1, 2], [0], [0]>} : vector<1x8x8xbf16>, vector<1x8x32xbf16>, vector<1x8x32xf32> -> vector<1x8x32xf32>
    %59 = vector.shape_cast %58 : vector<1x8x32xf32> to vector<8x32xf32>
    %60 = arith.truncf %59 : vector<8x32xf32> to vector<8x32xbf16>
    %61 = vector.extract_strided_slice %4 {offsets = [0, 192], sizes = [8, 32], strides = [1, 1]} : vector<8x768xf32> to vector<8x32xf32>
    %62 = vector.shape_cast %61 : vector<8x32xf32> to vector<1x8x32xf32>
    %63 = vector.extract_strided_slice %4 {offsets = [0, 224], sizes = [8, 32], strides = [1, 1]} : vector<8x768xf32> to vector<8x32xf32>
    %64 = vector.shape_cast %63 : vector<8x32xf32> to vector<1x8x32xf32>
    %65 = vector.extract_strided_slice %4 {offsets = [0, 256], sizes = [8, 32], strides = [1, 1]} : vector<8x768xf32> to vector<8x32xf32>
    %66 = vector.shape_cast %65 : vector<8x32xf32> to vector<1x8x32xf32>
    %cst_27 = arith.constant dense<0.000000e+00> : vector<1x8x8xf32>
    %67 = tpu.matmul %64, %62, %cst_27 {dimension_numbers = #tpu.dot_dimension_numbers<[2], [2], [1], [1], [0, 0, 0, 1, 1, 1], [0], [0]>} : vector<1x8x32xf32>, vector<1x8x32xf32>, vector<1x8x8xf32> -> vector<1x8x8xf32>
    %c0_28 = arith.constant 0 : index
    %c2 = arith.constant 2 : index
    %c0_29 = arith.constant 0 : index
    %c0_30 = arith.constant 0 : index
    %68 = vector.load %arg2[%c0_28, %c2, %c0_29, %c0_30] : memref<1x8x8x8xf32, #tpu.memory_space<vmem>>, vector<1x1x8x8xf32>
    %69 = vector.shape_cast %68 : vector<1x1x8x8xf32> to vector<1x8x8xf32>
    %70 = arith.addf %67, %69 : vector<1x8x8xf32>
    %c0_31 = arith.constant 0 : index
    %c2_32 = arith.constant 2 : index
    %c0_33 = arith.constant 0 : index
    %c0_34 = arith.constant 0 : index
    %71 = vector.load %arg14[%c0_31, %c2_32, %c0_33, %c0_34] : memref<1x8x8x8xf32, #tpu.memory_space<vmem>>, vector<1x1x8x8xf32>
    %72 = vector.shape_cast %71 : vector<1x1x8x8xf32> to vector<1x8x8xf32>
    %73 = vector.shape_cast %70 : vector<1x8x8xf32> to vector<1x1x8x8xf32>
    tpu.vector_store %arg14[%c0_31, %c2_32, %c0_33, %c0_34], %73 {strides = array<i32>} : memref<1x8x8x8xf32, #tpu.memory_space<vmem>>, vector<1x1x8x8xf32>,
    %cst_35 = arith.constant dense<0xFF800000> : vector<1x8xf32>
    %74 = vector.multi_reduction <maximumf>, %70, %cst_35 [2] : vector<1x8x8xf32> to vector<1x8xf32>
    %75 = vector.shape_cast %74 : vector<1x8xf32> to vector<1x8x1xf32>
    %76 = vector.broadcast %75 : vector<1x8x1xf32> to vector<1x8x8xf32>
    %77 = arith.subf %70, %76 : vector<1x8x8xf32>
    %78 = math.exp %77 : vector<1x8x8xf32>
    %cst_36 = arith.constant dense<0.000000e+00> : vector<1x8xf32>
    %79 = vector.multi_reduction <add>, %78, %cst_36 [2] : vector<1x8x8xf32> to vector<1x8xf32>
    %80 = vector.shape_cast %79 : vector<1x8xf32> to vector<1x8x1xf32>
    %81 = tpu.reciprocal %80 {approx = true} : vector<1x8x1xf32> -> vector<1x8x1xf32>
    %82 = vector.broadcast %81 : vector<1x8x1xf32> to vector<1x8x8xf32>
    %83 = arith.mulf %78, %82 : vector<1x8x8xf32>
    %84 = arith.truncf %83 : vector<1x8x8xf32> to vector<1x8x8xbf16>
    %85 = arith.truncf %66 : vector<1x8x32xf32> to vector<1x8x32xbf16>
    %cst_37 = arith.constant dense<0.000000e+00> : vector<1x8x32xf32>
    %86 = tpu.matmul %84, %85, %cst_37 {dimension_numbers = #tpu.dot_dimension_numbers<[2], [1], [1], [2], [0, 0, 0, 1, 1, 2], [0], [0]>} : vector<1x8x8xbf16>, vector<1x8x32xbf16>, vector<1x8x32xf32> -> vector<1x8x32xf32>
    %87 = vector.shape_cast %86 : vector<1x8x32xf32> to vector<8x32xf32>
    %88 = arith.truncf %87 : vector<8x32xf32> to vector<8x32xbf16>
    %89 = vector.extract_strided_slice %4 {offsets = [0, 288], sizes = [8, 32], strides = [1, 1]} : vector<8x768xf32> to vector<8x32xf32>
    %90 = vector.shape_cast %89 : vector<8x32xf32> to vector<1x8x32xf32>
    %91 = vector.extract_strided_slice %4 {offsets = [0, 320], sizes = [8, 32], strides = [1, 1]} : vector<8x768xf32> to vector<8x32xf32>
    %92 = vector.shape_cast %91 : vector<8x32xf32> to vector<1x8x32xf32>
    %93 = vector.extract_strided_slice %4 {offsets = [0, 352], sizes = [8, 32], strides = [1, 1]} : vector<8x768xf32> to vector<8x32xf32>
    %94 = vector.shape_cast %93 : vector<8x32xf32> to vector<1x8x32xf32>
    %cst_38 = arith.constant dense<0.000000e+00> : vector<1x8x8xf32>
    %95 = tpu.matmul %92, %90, %cst_38 {dimension_numbers = #tpu.dot_dimension_numbers<[2], [2], [1], [1], [0, 0, 0, 1, 1, 1], [0], [0]>} : vector<1x8x32xf32>, vector<1x8x32xf32>, vector<1x8x8xf32> -> vector<1x8x8xf32>
    %c0_39 = arith.constant 0 : index
    %c3 = arith.constant 3 : index
    %c0_40 = arith.constant 0 : index
    %c0_41 = arith.constant 0 : index
    %96 = vector.load %arg2[%c0_39, %c3, %c0_40, %c0_41] : memref<1x8x8x8xf32, #tpu.memory_space<vmem>>, vector<1x1x8x8xf32>
    %97 = vector.shape_cast %96 : vector<1x1x8x8xf32> to vector<1x8x8xf32>
    %98 = arith.addf %95, %97 : vector<1x8x8xf32>
    %c0_42 = arith.constant 0 : index
    %c3_43 = arith.constant 3 : index
    %c0_44 = arith.constant 0 : index
    %c0_45 = arith.constant 0 : index
    %99 = vector.load %arg14[%c0_42, %c3_43, %c0_44, %c0_45] : memref<1x8x8x8xf32, #tpu.memory_space<vmem>>, vector<1x1x8x8xf32>
    %100 = vector.shape_cast %99 : vector<1x1x8x8xf32> to vector<1x8x8xf32>
    %101 = vector.shape_cast %98 : vector<1x8x8xf32> to vector<1x1x8x8xf32>
    tpu.vector_store %arg14[%c0_42, %c3_43, %c0_44, %c0_45], %101 {strides = array<i32>} : memref<1x8x8x8xf32, #tpu.memory_space<vmem>>, vector<1x1x8x8xf32>,
    %cst_46 = arith.constant dense<0xFF800000> : vector<1x8xf32>
    %102 = vector.multi_reduction <maximumf>, %98, %cst_46 [2] : vector<1x8x8xf32> to vector<1x8xf32>
    %103 = vector.shape_cast %102 : vector<1x8xf32> to vector<1x8x1xf32>
    %104 = vector.broadcast %103 : vector<1x8x1xf32> to vector<1x8x8xf32>
    %105 = arith.subf %98, %104 : vector<1x8x8xf32>
    %106 = math.exp %105 : vector<1x8x8xf32>
    %cst_47 = arith.constant dense<0.000000e+00> : vector<1x8xf32>
    %107 = vector.multi_reduction <add>, %106, %cst_47 [2] : vector<1x8x8xf32> to vector<1x8xf32>
    %108 = vector.shape_cast %107 : vector<1x8xf32> to vector<1x8x1xf32>
    %109 = tpu.reciprocal %108 {approx = true} : vector<1x8x1xf32> -> vector<1x8x1xf32>
    %110 = vector.broadcast %109 : vector<1x8x1xf32> to vector<1x8x8xf32>
    %111 = arith.mulf %106, %110 : vector<1x8x8xf32>
    %112 = arith.truncf %111 : vector<1x8x8xf32> to vector<1x8x8xbf16>
    %113 = arith.truncf %94 : vector<1x8x32xf32> to vector<1x8x32xbf16>
    %cst_48 = arith.constant dense<0.000000e+00> : vector<1x8x32xf32>
    %114 = tpu.matmul %112, %113, %cst_48 {dimension_numbers = #tpu.dot_dimension_numbers<[2], [1], [1], [2], [0, 0, 0, 1, 1, 2], [0], [0]>} : vector<1x8x8xbf16>, vector<1x8x32xbf16>, vector<1x8x32xf32> -> vector<1x8x32xf32>
    %115 = vector.shape_cast %114 : vector<1x8x32xf32> to vector<8x32xf32>
    %116 = arith.truncf %115 : vector<8x32xf32> to vector<8x32xbf16>
    %117 = vector.extract_strided_slice %4 {offsets = [0, 384], sizes = [8, 32], strides = [1, 1]} : vector<8x768xf32> to vector<8x32xf32>
    %118 = vector.shape_cast %117 : vector<8x32xf32> to vector<1x8x32xf32>
    %119 = vector.extract_strided_slice %4 {offsets = [0, 416], sizes = [8, 32], strides = [1, 1]} : vector<8x768xf32> to vector<8x32xf32>
    %120 = vector.shape_cast %119 : vector<8x32xf32> to vector<1x8x32xf32>
    %121 = vector.extract_strided_slice %4 {offsets = [0, 448], sizes = [8, 32], strides = [1, 1]} : vector<8x768xf32> to vector<8x32xf32>
    %122 = vector.shape_cast %121 : vector<8x32xf32> to vector<1x8x32xf32>
    %cst_49 = arith.constant dense<0.000000e+00> : vector<1x8x8xf32>
    %123 = tpu.matmul %120, %118, %cst_49 {dimension_numbers = #tpu.dot_dimension_numbers<[2], [2], [1], [1], [0, 0, 0, 1, 1, 1], [0], [0]>} : vector<1x8x32xf32>, vector<1x8x32xf32>, vector<1x8x8xf32> -> vector<1x8x8xf32>
    %c0_50 = arith.constant 0 : index
    %c4 = arith.constant 4 : index
    %c0_51 = arith.constant 0 : index
    %c0_52 = arith.constant 0 : index
    %124 = vector.load %arg2[%c0_50, %c4, %c0_51, %c0_52] : memref<1x8x8x8xf32, #tpu.memory_space<vmem>>, vector<1x1x8x8xf32>
    %125 = vector.shape_cast %124 : vector<1x1x8x8xf32> to vector<1x8x8xf32>
    %126 = arith.addf %123, %125 : vector<1x8x8xf32>
    %c0_53 = arith.constant 0 : index
    %c4_54 = arith.constant 4 : index
    %c0_55 = arith.constant 0 : index
    %c0_56 = arith.constant 0 : index
    %127 = vector.load %arg14[%c0_53, %c4_54, %c0_55, %c0_56] : memref<1x8x8x8xf32, #tpu.memory_space<vmem>>, vector<1x1x8x8xf32>
    %128 = vector.shape_cast %127 : vector<1x1x8x8xf32> to vector<1x8x8xf32>
    %129 = vector.shape_cast %126 : vector<1x8x8xf32> to vector<1x1x8x8xf32>
    tpu.vector_store %arg14[%c0_53, %c4_54, %c0_55, %c0_56], %129 {strides = array<i32>} : memref<1x8x8x8xf32, #tpu.memory_space<vmem>>, vector<1x1x8x8xf32>,
    %cst_57 = arith.constant dense<0xFF800000> : vector<1x8xf32>
    %130 = vector.multi_reduction <maximumf>, %126, %cst_57 [2] : vector<1x8x8xf32> to vector<1x8xf32>
    %131 = vector.shape_cast %130 : vector<1x8xf32> to vector<1x8x1xf32>
    %132 = vector.broadcast %131 : vector<1x8x1xf32> to vector<1x8x8xf32>
    %133 = arith.subf %126, %132 : vector<1x8x8xf32>
    %134 = math.exp %133 : vector<1x8x8xf32>
    %cst_58 = arith.constant dense<0.000000e+00> : vector<1x8xf32>
    %135 = vector.multi_reduction <add>, %134, %cst_58 [2] : vector<1x8x8xf32> to vector<1x8xf32>
    %136 = vector.shape_cast %135 : vector<1x8xf32> to vector<1x8x1xf32>
    %137 = tpu.reciprocal %136 {approx = true} : vector<1x8x1xf32> -> vector<1x8x1xf32>
    %138 = vector.broadcast %137 : vector<1x8x1xf32> to vector<1x8x8xf32>
    %139 = arith.mulf %134, %138 : vector<1x8x8xf32>
    %140 = arith.truncf %139 : vector<1x8x8xf32> to vector<1x8x8xbf16>
    %141 = arith.truncf %122 : vector<1x8x32xf32> to vector<1x8x32xbf16>
    %cst_59 = arith.constant dense<0.000000e+00> : vector<1x8x32xf32>
    %142 = tpu.matmul %140, %141, %cst_59 {dimension_numbers = #tpu.dot_dimension_numbers<[2], [1], [1], [2], [0, 0, 0, 1, 1, 2], [0], [0]>} : vector<1x8x8xbf16>, vector<1x8x32xbf16>, vector<1x8x32xf32> -> vector<1x8x32xf32>
    %143 = vector.shape_cast %142 : vector<1x8x32xf32> to vector<8x32xf32>
    %144 = arith.truncf %143 : vector<8x32xf32> to vector<8x32xbf16>
    %145 = vector.extract_strided_slice %4 {offsets = [0, 480], sizes = [8, 32], strides = [1, 1]} : vector<8x768xf32> to vector<8x32xf32>
    %146 = vector.shape_cast %145 : vector<8x32xf32> to vector<1x8x32xf32>
    %147 = vector.extract_strided_slice %4 {offsets = [0, 512], sizes = [8, 32], strides = [1, 1]} : vector<8x768xf32> to vector<8x32xf32>
    %148 = vector.shape_cast %147 : vector<8x32xf32> to vector<1x8x32xf32>
    %149 = vector.extract_strided_slice %4 {offsets = [0, 544], sizes = [8, 32], strides = [1, 1]} : vector<8x768xf32> to vector<8x32xf32>
    %150 = vector.shape_cast %149 : vector<8x32xf32> to vector<1x8x32xf32>
    %cst_60 = arith.constant dense<0.000000e+00> : vector<1x8x8xf32>
    %151 = tpu.matmul %148, %146, %cst_60 {dimension_numbers = #tpu.dot_dimension_numbers<[2], [2], [1], [1], [0, 0, 0, 1, 1, 1], [0], [0]>} : vector<1x8x32xf32>, vector<1x8x32xf32>, vector<1x8x8xf32> -> vector<1x8x8xf32>
    %c0_61 = arith.constant 0 : index
    %c5 = arith.constant 5 : index
    %c0_62 = arith.constant 0 : index
    %c0_63 = arith.constant 0 : index
    %152 = vector.load %arg2[%c0_61, %c5, %c0_62, %c0_63] : memref<1x8x8x8xf32, #tpu.memory_space<vmem>>, vector<1x1x8x8xf32>
    %153 = vector.shape_cast %152 : vector<1x1x8x8xf32> to vector<1x8x8xf32>
    %154 = arith.addf %151, %153 : vector<1x8x8xf32>
    %c0_64 = arith.constant 0 : index
    %c5_65 = arith.constant 5 : index
    %c0_66 = arith.constant 0 : index
    %c0_67 = arith.constant 0 : index
    %155 = vector.load %arg14[%c0_64, %c5_65, %c0_66, %c0_67] : memref<1x8x8x8xf32, #tpu.memory_space<vmem>>, vector<1x1x8x8xf32>
    %156 = vector.shape_cast %155 : vector<1x1x8x8xf32> to vector<1x8x8xf32>
    %157 = vector.shape_cast %154 : vector<1x8x8xf32> to vector<1x1x8x8xf32>
    tpu.vector_store %arg14[%c0_64, %c5_65, %c0_66, %c0_67], %157 {strides = array<i32>} : memref<1x8x8x8xf32, #tpu.memory_space<vmem>>, vector<1x1x8x8xf32>,
    %cst_68 = arith.constant dense<0xFF800000> : vector<1x8xf32>
    %158 = vector.multi_reduction <maximumf>, %154, %cst_68 [2] : vector<1x8x8xf32> to vector<1x8xf32>
    %159 = vector.shape_cast %158 : vector<1x8xf32> to vector<1x8x1xf32>
    %160 = vector.broadcast %159 : vector<1x8x1xf32> to vector<1x8x8xf32>
    %161 = arith.subf %154, %160 : vector<1x8x8xf32>
    %162 = math.exp %161 : vector<1x8x8xf32>
    %cst_69 = arith.constant dense<0.000000e+00> : vector<1x8xf32>
    %163 = vector.multi_reduction <add>, %162, %cst_69 [2] : vector<1x8x8xf32> to vector<1x8xf32>
    %164 = vector.shape_cast %163 : vector<1x8xf32> to vector<1x8x1xf32>
    %165 = tpu.reciprocal %164 {approx = true} : vector<1x8x1xf32> -> vector<1x8x1xf32>
    %166 = vector.broadcast %165 : vector<1x8x1xf32> to vector<1x8x8xf32>
    %167 = arith.mulf %162, %166 : vector<1x8x8xf32>
    %168 = arith.truncf %167 : vector<1x8x8xf32> to vector<1x8x8xbf16>
    %169 = arith.truncf %150 : vector<1x8x32xf32> to vector<1x8x32xbf16>
    %cst_70 = arith.constant dense<0.000000e+00> : vector<1x8x32xf32>
    %170 = tpu.matmul %168, %169, %cst_70 {dimension_numbers = #tpu.dot_dimension_numbers<[2], [1], [1], [2], [0, 0, 0, 1, 1, 2], [0], [0]>} : vector<1x8x8xbf16>, vector<1x8x32xbf16>, vector<1x8x32xf32> -> vector<1x8x32xf32>
    %171 = vector.shape_cast %170 : vector<1x8x32xf32> to vector<8x32xf32>
    %172 = arith.truncf %171 : vector<8x32xf32> to vector<8x32xbf16>
    %173 = vector.extract_strided_slice %4 {offsets = [0, 576], sizes = [8, 32], strides = [1, 1]} : vector<8x768xf32> to vector<8x32xf32>
    %174 = vector.shape_cast %173 : vector<8x32xf32> to vector<1x8x32xf32>
    %175 = vector.extract_strided_slice %4 {offsets = [0, 608], sizes = [8, 32], strides = [1, 1]} : vector<8x768xf32> to vector<8x32xf32>
    %176 = vector.shape_cast %175 : vector<8x32xf32> to vector<1x8x32xf32>
    %177 = vector.extract_strided_slice %4 {offsets = [0, 640], sizes = [8, 32], strides = [1, 1]} : vector<8x768xf32> to vector<8x32xf32>
    %178 = vector.shape_cast %177 : vector<8x32xf32> to vector<1x8x32xf32>
    %cst_71 = arith.constant dense<0.000000e+00> : vector<1x8x8xf32>
    %179 = tpu.matmul %176, %174, %cst_71 {dimension_numbers = #tpu.dot_dimension_numbers<[2], [2], [1], [1], [0, 0, 0, 1, 1, 1], [0], [0]>} : vector<1x8x32xf32>, vector<1x8x32xf32>, vector<1x8x8xf32> -> vector<1x8x8xf32>
    %c0_72 = arith.constant 0 : index
    %c6 = arith.constant 6 : index
    %c0_73 = arith.constant 0 : index
    %c0_74 = arith.constant 0 : index
    %180 = vector.load %arg2[%c0_72, %c6, %c0_73, %c0_74] : memref<1x8x8x8xf32, #tpu.memory_space<vmem>>, vector<1x1x8x8xf32>
    %181 = vector.shape_cast %180 : vector<1x1x8x8xf32> to vector<1x8x8xf32>
    %182 = arith.addf %179, %181 : vector<1x8x8xf32>
    %c0_75 = arith.constant 0 : index
    %c6_76 = arith.constant 6 : index
    %c0_77 = arith.constant 0 : index
    %c0_78 = arith.constant 0 : index
    %183 = vector.load %arg14[%c0_75, %c6_76, %c0_77, %c0_78] : memref<1x8x8x8xf32, #tpu.memory_space<vmem>>, vector<1x1x8x8xf32>
    %184 = vector.shape_cast %183 : vector<1x1x8x8xf32> to vector<1x8x8xf32>
    %185 = vector.shape_cast %182 : vector<1x8x8xf32> to vector<1x1x8x8xf32>
    tpu.vector_store %arg14[%c0_75, %c6_76, %c0_77, %c0_78], %185 {strides = array<i32>} : memref<1x8x8x8xf32, #tpu.memory_space<vmem>>, vector<1x1x8x8xf32>,
    %cst_79 = arith.constant dense<0xFF800000> : vector<1x8xf32>
    %186 = vector.multi_reduction <maximumf>, %182, %cst_79 [2] : vector<1x8x8xf32> to vector<1x8xf32>
    %187 = vector.shape_cast %186 : vector<1x8xf32> to vector<1x8x1xf32>
    %188 = vector.broadcast %187 : vector<1x8x1xf32> to vector<1x8x8xf32>
    %189 = arith.subf %182, %188 : vector<1x8x8xf32>
    %190 = math.exp %189 : vector<1x8x8xf32>
    %cst_80 = arith.constant dense<0.000000e+00> : vector<1x8xf32>
    %191 = vector.multi_reduction <add>, %190, %cst_80 [2] : vector<1x8x8xf32> to vector<1x8xf32>
    %192 = vector.shape_cast %191 : vector<1x8xf32> to vector<1x8x1xf32>
    %193 = tpu.reciprocal %192 {approx = true} : vector<1x8x1xf32> -> vector<1x8x1xf32>
    %194 = vector.broadcast %193 : vector<1x8x1xf32> to vector<1x8x8xf32>
    %195 = arith.mulf %190, %194 : vector<1x8x8xf32>
    %196 = arith.truncf %195 : vector<1x8x8xf32> to vector<1x8x8xbf16>
    %197 = arith.truncf %178 : vector<1x8x32xf32> to vector<1x8x32xbf16>
    %cst_81 = arith.constant dense<0.000000e+00> : vector<1x8x32xf32>
    %198 = tpu.matmul %196, %197, %cst_81 {dimension_numbers = #tpu.dot_dimension_numbers<[2], [1], [1], [2], [0, 0, 0, 1, 1, 2], [0], [0]>} : vector<1x8x8xbf16>, vector<1x8x32xbf16>, vector<1x8x32xf32> -> vector<1x8x32xf32>
    %199 = vector.shape_cast %198 : vector<1x8x32xf32> to vector<8x32xf32>
    %200 = arith.truncf %199 : vector<8x32xf32> to vector<8x32xbf16>
    %201 = vector.extract_strided_slice %4 {offsets = [0, 672], sizes = [8, 32], strides = [1, 1]} : vector<8x768xf32> to vector<8x32xf32>
    %202 = vector.shape_cast %201 : vector<8x32xf32> to vector<1x8x32xf32>
    %203 = vector.extract_strided_slice %4 {offsets = [0, 704], sizes = [8, 32], strides = [1, 1]} : vector<8x768xf32> to vector<8x32xf32>
    %204 = vector.shape_cast %203 : vector<8x32xf32> to vector<1x8x32xf32>
    %205 = vector.extract_strided_slice %4 {offsets = [0, 736], sizes = [8, 32], strides = [1, 1]} : vector<8x768xf32> to vector<8x32xf32>
    %206 = vector.shape_cast %205 : vector<8x32xf32> to vector<1x8x32xf32>
    %cst_82 = arith.constant dense<0.000000e+00> : vector<1x8x8xf32>
    %207 = tpu.matmul %204, %202, %cst_82 {dimension_numbers = #tpu.dot_dimension_numbers<[2], [2], [1], [1], [0, 0, 0, 1, 1, 1], [0], [0]>} : vector<1x8x32xf32>, vector<1x8x32xf32>, vector<1x8x8xf32> -> vector<1x8x8xf32>
    %c0_83 = arith.constant 0 : index
    %c7 = arith.constant 7 : index
    %c0_84 = arith.constant 0 : index
    %c0_85 = arith.constant 0 : index
    %208 = vector.load %arg2[%c0_83, %c7, %c0_84, %c0_85] : memref<1x8x8x8xf32, #tpu.memory_space<vmem>>, vector<1x1x8x8xf32>
    %209 = vector.shape_cast %208 : vector<1x1x8x8xf32> to vector<1x8x8xf32>
    %210 = arith.addf %207, %209 : vector<1x8x8xf32>
    %c0_86 = arith.constant 0 : index
    %c7_87 = arith.constant 7 : index
    %c0_88 = arith.constant 0 : index
    %c0_89 = arith.constant 0 : index
    %211 = vector.load %arg14[%c0_86, %c7_87, %c0_88, %c0_89] : memref<1x8x8x8xf32, #tpu.memory_space<vmem>>, vector<1x1x8x8xf32>
    %212 = vector.shape_cast %211 : vector<1x1x8x8xf32> to vector<1x8x8xf32>
    %213 = vector.shape_cast %210 : vector<1x8x8xf32> to vector<1x1x8x8xf32>
    tpu.vector_store %arg14[%c0_86, %c7_87, %c0_88, %c0_89], %213 {strides = array<i32>} : memref<1x8x8x8xf32, #tpu.memory_space<vmem>>, vector<1x1x8x8xf32>,
    %cst_90 = arith.constant dense<0xFF800000> : vector<1x8xf32>
    %214 = vector.multi_reduction <maximumf>, %210, %cst_90 [2] : vector<1x8x8xf32> to vector<1x8xf32>
    %215 = vector.shape_cast %214 : vector<1x8xf32> to vector<1x8x1xf32>
    %216 = vector.broadcast %215 : vector<1x8x1xf32> to vector<1x8x8xf32>
    %217 = arith.subf %210, %216 : vector<1x8x8xf32>
    %218 = math.exp %217 : vector<1x8x8xf32>
    %cst_91 = arith.constant dense<0.000000e+00> : vector<1x8xf32>
    %219 = vector.multi_reduction <add>, %218, %cst_91 [2] : vector<1x8x8xf32> to vector<1x8xf32>
    %220 = vector.shape_cast %219 : vector<1x8xf32> to vector<1x8x1xf32>
    %221 = tpu.reciprocal %220 {approx = true} : vector<1x8x1xf32> -> vector<1x8x1xf32>
    %222 = vector.broadcast %221 : vector<1x8x1xf32> to vector<1x8x8xf32>
    %223 = arith.mulf %218, %222 : vector<1x8x8xf32>
    %224 = arith.truncf %223 : vector<1x8x8xf32> to vector<1x8x8xbf16>
    %225 = arith.truncf %206 : vector<1x8x32xf32> to vector<1x8x32xbf16>
    %cst_92 = arith.constant dense<0.000000e+00> : vector<1x8x32xf32>
    %226 = tpu.matmul %224, %225, %cst_92 {dimension_numbers = #tpu.dot_dimension_numbers<[2], [1], [1], [2], [0, 0, 0, 1, 1, 2], [0], [0]>} : vector<1x8x8xbf16>, vector<1x8x32xbf16>, vector<1x8x32xf32> -> vector<1x8x32xf32>
    %227 = vector.shape_cast %226 : vector<1x8x32xf32> to vector<8x32xf32>
    %228 = arith.truncf %227 : vector<8x32xf32> to vector<8x32xbf16>
    %229 = tpu.concatenate %32, %60, %88, %116, %144, %172, %200, %228 in 1 : vector<8x32xbf16>, vector<8x32xbf16>, vector<8x32xbf16>, vector<8x32xbf16>, vector<8x32xbf16>, vector<8x32xbf16>, vector<8x32xbf16>, vector<8x32xbf16> -> vector<8x256xbf16>
    %c0_93 = arith.constant 0 : index
    %c0_94 = arith.constant 0 : index
    %230 = vector.load %arg4[%c0_93, %c0_94] : memref<256x256xbf16, #tpu.memory_space<vmem>>, vector<256x256xbf16>
    %cst_95 = arith.constant dense<0.000000e+00> : vector<8x256xf32>
    %231 = tpu.matmul %229, %230, %cst_95 {dimension_numbers = #tpu.dot_dimension_numbers<[1], [0], [0], [1], [0, 0, 1, 1], [], []>} : vector<8x256xbf16>, vector<256x256xbf16>, vector<8x256xf32> -> vector<8x256xf32>
    %232 = arith.addf %1, %231 : vector<8x256xf32>
    %c0_96 = arith.constant 0 : index
    %c0_97 = arith.constant 0 : index
    %233 = vector.load %arg5[%c0_96, %c0_97] : memref<1x256xf32, #tpu.memory_space<vmem>>, vector<1x256xf32>
    %c0_98 = arith.constant 0 : index
    %c0_99 = arith.constant 0 : index
    %234 = vector.load %arg6[%c0_98, %c0_99] : memref<1x256xf32, #tpu.memory_space<vmem>>, vector<1x256xf32>
    %cst_100 = arith.constant dense<0.000000e+00> : vector<8xf32>
    %235 = vector.multi_reduction <add>, %232, %cst_100 [1] : vector<8x256xf32> to vector<8xf32>
    %236 = vector.shape_cast %235 : vector<8xf32> to vector<8x1xf32>
    %cst_101 = arith.constant 2.560000e+02 : f32
    %237 = vector.broadcast %cst_101 : f32 to vector<8x1xf32>
    %238 = arith.divf %236, %237 : vector<8x1xf32>
    %239 = vector.broadcast %238 : vector<8x1xf32> to vector<8x256xf32>
    %240 = arith.subf %232, %239 : vector<8x256xf32>
    %241 = arith.mulf %240, %240 : vector<8x256xf32>
    %cst_102 = arith.constant dense<0.000000e+00> : vector<8xf32>
    %242 = vector.multi_reduction <add>, %241, %cst_102 [1] : vector<8x256xf32> to vector<8xf32>
    %243 = vector.shape_cast %242 : vector<8xf32> to vector<8x1xf32>
    %cst_103 = arith.constant 2.560000e+02 : f32
    %244 = vector.broadcast %cst_103 : f32 to vector<8x1xf32>
    %245 = arith.divf %243, %244 : vector<8x1xf32>
    %cst_104 = arith.constant 9.99999974E-6 : f32
    %246 = vector.broadcast %cst_104 : f32 to vector<8x1xf32>
    %247 = arith.addf %245, %246 : vector<8x1xf32>
    %248 = math.rsqrt %247 : vector<8x1xf32>
    %249 = vector.broadcast %248 : vector<8x1xf32> to vector<8x256xf32>
    %250 = arith.mulf %240, %249 : vector<8x256xf32>
    %251 = vector.broadcast %233 : vector<1x256xf32> to vector<8x256xf32>
    %252 = arith.mulf %250, %251 : vector<8x256xf32>
    %253 = vector.broadcast %234 : vector<1x256xf32> to vector<8x256xf32>
    %254 = arith.addf %252, %253 : vector<8x256xf32>
    %255 = arith.truncf %254 : vector<8x256xf32> to vector<8x256xbf16>
    %c0_105 = arith.constant 0 : index
    %c0_106 = arith.constant 0 : index
    %256 = vector.load %arg7[%c0_105, %c0_106] : memref<256x1024xbf16, #tpu.memory_space<vmem>>, vector<256x1024xbf16>
    %cst_107 = arith.constant dense<0.000000e+00> : vector<8x1024xf32>
    %257 = tpu.matmul %255, %256, %cst_107 {dimension_numbers = #tpu.dot_dimension_numbers<[1], [0], [0], [1], [0, 0, 1, 1], [], []>} : vector<8x256xbf16>, vector<256x1024xbf16>, vector<8x1024xf32> -> vector<8x1024xf32>
    %c0_108 = arith.constant 0 : index
    %c0_109 = arith.constant 0 : index
    %258 = vector.load %arg8[%c0_108, %c0_109] : memref<1x1024xf32, #tpu.memory_space<vmem>>, vector<1x1024xf32>
    %259 = vector.broadcast %258 : vector<1x1024xf32> to vector<8x1024xf32>
    %260 = arith.addf %257, %259 : vector<8x1024xf32>
    %cst_110 = arith.constant 0.000000e+00 : f32
    %261 = vector.broadcast %cst_110 : f32 to vector<8x1024xf32>
    %262 = arith.maximumf %260, %261 : vector<8x1024xf32>
    %263 = math.absf %260 : vector<8x1024xf32>
    %cst_111 = arith.constant 0.000000e+00 : f32
    %264 = vector.broadcast %cst_111 : f32 to vector<8x1024xf32>
    %265 = arith.subf %264, %263 : vector<8x1024xf32>
    %266 = math.exp %265 : vector<8x1024xf32>
    %cst_112 = arith.constant 1.000000e+00 : f32
    %267 = vector.broadcast %cst_112 : f32 to vector<8x1024xf32>
    %268 = arith.addf %267, %266 : vector<8x1024xf32>
    %269 = math.log %268 : vector<8x1024xf32>
    %270 = arith.addf %262, %269 : vector<8x1024xf32>
    %cst_113 = arith.constant 0.327591091 : f32
    %271 = vector.broadcast %cst_113 : f32 to vector<8x1024xf32>
    %272 = arith.mulf %271, %270 : vector<8x1024xf32>
    %cst_114 = arith.constant 1.000000e+00 : f32
    %273 = vector.broadcast %cst_114 : f32 to vector<8x1024xf32>
    %274 = arith.addf %273, %272 : vector<8x1024xf32>
    %275 = tpu.reciprocal %274 {approx = true} : vector<8x1024xf32> -> vector<8x1024xf32>
    %cst_115 = arith.constant 1.06140542 : f32
    %276 = vector.broadcast %cst_115 : f32 to vector<8x1024xf32>
    %277 = arith.mulf %276, %275 : vector<8x1024xf32>
    %cst_116 = arith.constant -1.45315206 : f32
    %278 = vector.broadcast %cst_116 : f32 to vector<8x1024xf32>
    %279 = arith.addf %277, %278 : vector<8x1024xf32>
    %280 = arith.mulf %279, %275 : vector<8x1024xf32>
    %cst_117 = arith.constant 1.42141378 : f32
    %281 = vector.broadcast %cst_117 : f32 to vector<8x1024xf32>
    %282 = arith.addf %280, %281 : vector<8x1024xf32>
    %283 = arith.mulf %282, %275 : vector<8x1024xf32>
    %cst_118 = arith.constant -0.284496725 : f32
    %284 = vector.broadcast %cst_118 : f32 to vector<8x1024xf32>
    %285 = arith.addf %283, %284 : vector<8x1024xf32>
    %286 = arith.mulf %285, %275 : vector<8x1024xf32>
    %cst_119 = arith.constant 0.254829586 : f32
    %287 = vector.broadcast %cst_119 : f32 to vector<8x1024xf32>
    %288 = arith.addf %286, %287 : vector<8x1024xf32>
    %289 = arith.mulf %288, %275 : vector<8x1024xf32>
    %cst_120 = arith.constant 0.000000e+00 : f32
    %290 = vector.broadcast %cst_120 : f32 to vector<8x1024xf32>
    %291 = arith.subf %290, %270 : vector<8x1024xf32>
    %292 = arith.mulf %291, %270 : vector<8x1024xf32>
    %293 = math.exp %292 : vector<8x1024xf32>
    %294 = arith.mulf %289, %293 : vector<8x1024xf32>
    %cst_121 = arith.constant 1.000000e+00 : f32
    %295 = vector.broadcast %cst_121 : f32 to vector<8x1024xf32>
    %296 = arith.subf %295, %294 : vector<8x1024xf32>
    %297 = arith.mulf %260, %296 : vector<8x1024xf32>
    %298 = arith.truncf %297 : vector<8x1024xf32> to vector<8x1024xbf16>
    %c0_122 = arith.constant 0 : index
    %c0_123 = arith.constant 0 : index
    %299 = vector.load %arg9[%c0_122, %c0_123] : memref<1024x256xbf16, #tpu.memory_space<vmem>>, vector<1024x256xbf16>
    %cst_124 = arith.constant dense<0.000000e+00> : vector<8x256xf32>
    %300 = tpu.matmul %298, %299, %cst_124 {dimension_numbers = #tpu.dot_dimension_numbers<[1], [0], [0], [1], [0, 0, 1, 1], [], []>} : vector<8x1024xbf16>, vector<1024x256xbf16>, vector<8x256xf32> -> vector<8x256xf32>
    %c0_125 = arith.constant 0 : index
    %c0_126 = arith.constant 0 : index
    %301 = vector.load %arg10[%c0_125, %c0_126] : memref<1x256xf32, #tpu.memory_space<vmem>>, vector<1x256xf32>
    %302 = vector.broadcast %301 : vector<1x256xf32> to vector<8x256xf32>
    %303 = arith.addf %300, %302 : vector<8x256xf32>
    %304 = arith.addf %254, %303 : vector<8x256xf32>
    %c0_127 = arith.constant 0 : index
    %c0_128 = arith.constant 0 : index
    %305 = vector.load %arg11[%c0_127, %c0_128] : memref<1x256xf32, #tpu.memory_space<vmem>>, vector<1x256xf32>
    %c0_129 = arith.constant 0 : index
    %c0_130 = arith.constant 0 : index
    %306 = vector.load %arg12[%c0_129, %c0_130] : memref<1x256xf32, #tpu.memory_space<vmem>>, vector<1x256xf32>
    %cst_131 = arith.constant dense<0.000000e+00> : vector<8xf32>
    %307 = vector.multi_reduction <add>, %304, %cst_131 [1] : vector<8x256xf32> to vector<8xf32>
    %308 = vector.shape_cast %307 : vector<8xf32> to vector<8x1xf32>
    %cst_132 = arith.constant 2.560000e+02 : f32
    %309 = vector.broadcast %cst_132 : f32 to vector<8x1xf32>
    %310 = arith.divf %308, %309 : vector<8x1xf32>
    %311 = vector.broadcast %310 : vector<8x1xf32> to vector<8x256xf32>
    %312 = arith.subf %304, %311 : vector<8x256xf32>
    %313 = arith.mulf %312, %312 : vector<8x256xf32>
    %cst_133 = arith.constant dense<0.000000e+00> : vector<8xf32>
    %314 = vector.multi_reduction <add>, %313, %cst_133 [1] : vector<8x256xf32> to vector<8xf32>
    %315 = vector.shape_cast %314 : vector<8xf32> to vector<8x1xf32>
    %cst_134 = arith.constant 2.560000e+02 : f32
    %316 = vector.broadcast %cst_134 : f32 to vector<8x1xf32>
    %317 = arith.divf %315, %316 : vector<8x1xf32>
    %cst_135 = arith.constant 9.99999974E-6 : f32
    %318 = vector.broadcast %cst_135 : f32 to vector<8x1xf32>
    %319 = arith.addf %317, %318 : vector<8x1xf32>
    %320 = math.rsqrt %319 : vector<8x1xf32>
    %321 = vector.broadcast %320 : vector<8x1xf32> to vector<8x256xf32>
    %322 = arith.mulf %312, %321 : vector<8x256xf32>
    %323 = vector.broadcast %305 : vector<1x256xf32> to vector<8x256xf32>
    %324 = arith.mulf %322, %323 : vector<8x256xf32>
    %325 = vector.broadcast %306 : vector<1x256xf32> to vector<8x256xf32>
    %326 = arith.addf %324, %325 : vector<8x256xf32>
    %327 = vector.shape_cast %326 : vector<8x256xf32> to vector<1x8x256xf32>
    %c0_136 = arith.constant 0 : index
    %c0_137 = arith.constant 0 : index
    %c0_138 = arith.constant 0 : index
    %328 = vector.load %arg13[%c0_136, %c0_137, %c0_138] : memref<1x8x256xf32, #tpu.memory_space<vmem>>, vector<1x8x256xf32>
    tpu.vector_store %arg13[%c0_136, %c0_137, %c0_138], %327 {strides = array<i32>} : memref<1x8x256xf32, #tpu.memory_space<vmem>>, vector<1x8x256xf32>,
    return
  }
  func.func @transform_0(%arg0: i32) -> (i32, i32, i32) {
    %c0_i32 = arith.constant 0 : i32
    %c0_i32_0 = arith.constant 0 : i32
    %c0_i32_1 = arith.constant 0 : i32
    return %arg0, %c0_i32, %c0_i32_0 : i32, i32, i32
  }
  func.func @transform_1(%arg0: i32) -> (i32, i32, i32, i32) {
    %c0_i32 = arith.constant 0 : i32
    %c0_i32_0 = arith.constant 0 : i32
    %c0_i32_1 = arith.constant 0 : i32
    %c0_i32_2 = arith.constant 0 : i32
    return %arg0, %c0_i32, %c0_i32_0, %c0_i32_1 : i32, i32, i32, i32
  }
  func.func @transform_2(%arg0: i32) -> (i32, i32) {
    %c0_i32 = arith.constant 0 : i32
    %c0_i32_0 = arith.constant 0 : i32
    %c0_i32_1 = arith.constant 0 : i32
    return %c0_i32, %c0_i32_0 : i32, i32
  }
  func.func @transform_3(%arg0: i32) -> (i32, i32) {
    %c0_i32 = arith.constant 0 : i32
    %c0_i32_0 = arith.constant 0 : i32
    %c0_i32_1 = arith.constant 0 : i32
    return %c0_i32, %c0_i32_0 : i32, i32
  }
  func.func @transform_4(%arg0: i32) -> (i32, i32) {
    %c0_i32 = arith.constant 0 : i32
    %c0_i32_0 = arith.constant 0 : i32
    %c0_i32_1 = arith.constant 0 : i32
    return %c0_i32, %c0_i32_0 : i32, i32
  }
  func.func @transform_5(%arg0: i32) -> (i32, i32) {
    %c0_i32 = arith.constant 0 : i32
    %c0_i32_0 = arith.constant 0 : i32
    %c0_i32_1 = arith.constant 0 : i32
    return %c0_i32, %c0_i32_0 : i32, i32
  }
  func.func @transform_6(%arg0: i32) -> (i32, i32) {
    %c0_i32 = arith.constant 0 : i32
    %c0_i32_0 = arith.constant 0 : i32
    %c0_i32_1 = arith.constant 0 : i32
    return %c0_i32, %c0_i32_0 : i32, i32
  }
  func.func @transform_7(%arg0: i32) -> (i32, i32) {
    %c0_i32 = arith.constant 0 : i32
    %c0_i32_0 = arith.constant 0 : i32
    %c0_i32_1 = arith.constant 0 : i32
    return %c0_i32, %c0_i32_0 : i32, i32
  }
  func.func @transform_8(%arg0: i32) -> (i32, i32) {
    %c0_i32 = arith.constant 0 : i32
    %c0_i32_0 = arith.constant 0 : i32
    %c0_i32_1 = arith.constant 0 : i32
    return %c0_i32, %c0_i32_0 : i32, i32
  }
  func.func @transform_9(%arg0: i32) -> (i32, i32) {
    %c0_i32 = arith.constant 0 : i32
    %c0_i32_0 = arith.constant 0 : i32
    %c0_i32_1 = arith.constant 0 : i32
    return %c0_i32, %c0_i32_0 : i32, i32
  }
  func.func @transform_10(%arg0: i32) -> (i32, i32) {
    %c0_i32 = arith.constant 0 : i32
    %c0_i32_0 = arith.constant 0 : i32
    %c0_i32_1 = arith.constant 0 : i32
    return %c0_i32, %c0_i32_0 : i32, i32
  }
  func.func @transform_11(%arg0: i32) -> (i32, i32) {
    %c0_i32 = arith.constant 0 : i32
    %c0_i32_0 = arith.constant 0 : i32
    %c0_i32_1 = arith.constant 0 : i32
    return %c0_i32, %c0_i32_0 : i32, i32
  }
  func.func @transform_12(%arg0: i32) -> (i32, i32, i32) {
    %c0_i32 = arith.constant 0 : i32
    %c0_i32_0 = arith.constant 0 : i32
    %c0_i32_1 = arith.constant 0 : i32
    return %arg0, %c0_i32, %c0_i32_0 : i32, i32, i32
  }
  func.func @transform_13(%arg0: i32) -> (i32, i32, i32, i32) {
    %c0_i32 = arith.constant 0 : i32
    %c0_i32_0 = arith.constant 0 : i32
    %c0_i32_1 = arith.constant 0 : i32
    %c0_i32_2 = arith.constant 0 : i32
    return %arg0, %c0_i32, %c0_i32_0, %c0_i32_1 : i32, i32, i32, i32
  }
}

</mosaic_0001>

<llo_original>
// kernel: _res_encoder_block_call.1
$region0: #{_res_encoder_block_call.1}
  #allocation0 [shape = 'u32[]', space=smem, size = 0x4, offset = 0x4, fixed_abs, tag = 'smem constant byte address 0x4 - core index']
  #allocation1 [shape = 'u32[72,128]{1,0:T(1,128)}', space=vmem, size = 0x9000, scoped, tag = 'internal scratch']
  %s0 = inlined_call_operand.vmem [shape: f32[2,8,256], index: 0, kind: input, shape index: {}]
  %s1 = inlined_call_operand.vmem [shape: f32[2,8,8,8], index: 1, kind: input, shape index: {}]
  %s2 = inlined_call_operand.vmem [shape: bf16[256,768], index: 2, kind: input, shape index: {}]
  %s3 = inlined_call_operand.vmem [shape: bf16[256,256], index: 3, kind: input, shape index: {}]
  %s4 = inlined_call_operand.vmem [shape: f32[1,256], index: 4, kind: input, shape index: {}]
  %s5 = inlined_call_operand.vmem [shape: f32[1,256], index: 5, kind: input, shape index: {}]
  %s6 = inlined_call_operand.vmem [shape: bf16[256,1024], index: 6, kind: input, shape index: {}]
  %s7 = inlined_call_operand.vmem [shape: f32[1,1024], index: 7, kind: input, shape index: {}]
  %s8 = inlined_call_operand.vmem [shape: bf16[1024,256], index: 8, kind: input, shape index: {}]
  %s9 = inlined_call_operand.vmem [shape: f32[1,256], index: 9, kind: input, shape index: {}]
  %s10 = inlined_call_operand.vmem [shape: f32[1,256], index: 10, kind: input, shape index: {}]
  %s11 = inlined_call_operand.vmem [shape: f32[1,256], index: 11, kind: input, shape index: {}]
  %s12 = inlined_call_operand.hbm [shape: f32[2,8,256], index: 12, kind: output, shape index: {0}]
  %s13 = inlined_call_operand.hbm [shape: f32[2,8,8,8], index: 13, kind: output, shape index: {1}]
  %14 = xla_tuple %s12, %s13
  %s15 = sld [smem:[#allocation0]]
  $region89: #{_res_encoder_block_call.1} parent=0
    _
  %s17 = ssub.s32 1, %s15
  %s18 = scalar_select 0, %s17, %s15
  $region1: #{_res_encoder_block_call.1} parent=0
    #allocation2 [shape = 'u8[16384]{0}', space=vmem, size = 0x4000, scoped, tag = 'output window, operand 0']
    #allocation3 [shape = 's32[2]{0}', space=sflag, size = 0x8, scoped, tag = 'scoped memory for _res_encoder_block_call.1']
    #allocation4 [shape = 'u8[65536]{0}', space=vmem, size = 0x10000, scoped, tag = 'output window, operand 1']
    #allocation5 [shape = 's32[2]{0}', space=sflag, size = 0x8, scoped, tag = 'scoped memory for _res_encoder_block_call.1']
    %19 = vsyncpa [#allocation3], 0
    %s20 = scalar_lea.sflag [#allocation3], 1
    %21 = vsyncpa %s20, 0
    %22 = vsyncpa [#allocation5], 0
    %s23 = scalar_lea.sflag [#allocation5], 1
    %24 = vsyncpa %s23, 0
    loop: start=0, step=1, limit=4
    $region2: #{_res_encoder_block_call.1} parent=1 // loop_pre_header
      _
    $region3: #{_res_encoder_block_call.1} parent=1 // loop_header
      %s26 = sphi 0, %s30
      %p27 = scmp.ge.s32.totalorder %s26, 4
      %s36 = sphi 0, %s38
      %s39 = sphi 0, %s36
      %s40 = sphi 0, %s39
      %s56 = sphi 0, %s40
      %s62 = sphi 0, %s64
      %s65 = sphi 0, %s62
      %s66 = sphi 0, %s65
      %s82 = sphi 0, %s66
      %s86 = sphi 0, %s86
      %s88 = sphi 0, %s86
      %s89 = sphi 0, %s88
      %s103 = sphi 0, %s89
      %s107 = sphi 0, %s107
      %s109 = sphi 0, %s107
      %s110 = sphi 0, %s109
      %s124 = sphi 0, %s110
      %s128 = sphi 0, %s128
      %s130 = sphi 0, %s128
      %s131 = sphi 0, %s130
      %s145 = sphi 0, %s131
      %s149 = sphi 0, %s149
      %s151 = sphi 0, %s149
      %s152 = sphi 0, %s151
      %s166 = sphi 0, %s152
      %s170 = sphi 0, %s170
      %s172 = sphi 0, %s170
      %s173 = sphi 0, %s172
      %s187 = sphi 0, %s173
      %s191 = sphi 0, %s191
      %s193 = sphi 0, %s191
      %s194 = sphi 0, %s193
      %s208 = sphi 0, %s194
      %s212 = sphi 0, %s212
      %s214 = sphi 0, %s212
      %s215 = sphi 0, %s214
      %s229 = sphi 0, %s215
      %s233 = sphi 0, %s233
      %s235 = sphi 0, %s233
      %s236 = sphi 0, %s235
      %s250 = sphi 0, %s236
      %s254 = sphi 0, %s254
      %s256 = sphi 0, %s254
      %s257 = sphi 0, %s256
      %s271 = sphi 0, %s257
      %s275 = sphi 0, %s275
      %s277 = sphi 0, %s275
      %s278 = sphi 0, %s277
      %s292 = sphi 0, %s278
      %s298 = sphi 0, %s300
      %s301 = sphi 0, %s298
      %s302 = sphi 0, %s301
      %s318 = sphi 0, %s302
      %s324 = sphi 0, %s326
      %s327 = sphi 0, %s324
      %s328 = sphi 0, %s327
      %s344 = sphi 0, %s328
    $region4: #{_res_encoder_block_call.1} parent=1 // loop_header_branch
      %29 = sbr.rel (%p27) target = $region8
    $region5: #{_res_encoder_block_call.1} parent=1 // loop_body
      %s31 = ssub.s32 %s26, 1
      %s32 = ssub.s32 %s26, 2
      %s33 = sadd.s32 %s26, 1
      %s34 = ssub.s32 %s26, %s33
      %p35 = scmp.eq.s32.totalorder %s34, 0
      %s37 = sadd.s32 %s36, 1
      %s38 = scalar_select %p35, %s36, %s37
      %p41 = pneg %p35
      %p42 = scmp.eq.s32.totalorder %s26, 1
      %p43 = por %p41, %p42
      %p44 = scmp.ne.s32.totalorder %s36, %s39
      %p45 = scmp.eq.s32.totalorder %s26, 0
      %p46 = por %p44, %p45
      %p47 = scmp.ne.s32.totalorder %s36, %s39
      %p48 = scmp.eq.s32.totalorder %s31, 1
      %p49 = por %p47, %p48
      %p50 = scmp.ne.s32.totalorder %s39, %s40
      %p51 = scmp.eq.s32.totalorder %s31, 0
      %p52 = por %p50, %p51
      %p53 = scmp.ne.s32.totalorder %s39, %s40
      %p54 = scmp.eq.s32.totalorder %s32, 1
      %p55 = por %p53, %p54
      %p57 = scmp.ne.s32.totalorder %s40, %s56
      %p58 = scmp.eq.s32.totalorder %s32, 0
      %p59 = por %p57, %p58
      %s60 = ssub.s32 %s26, %s33
      %p61 = scmp.eq.s32.totalorder %s60, 0
      %s63 = sadd.s32 %s62, 1
      %s64 = scalar_select %p61, %s62, %s63
      %p67 = pneg %p61
      %p68 = scmp.eq.s32.totalorder %s26, 1
      %p69 = por %p67, %p68
      %p70 = scmp.ne.s32.totalorder %s62, %s65
      %p71 = scmp.eq.s32.totalorder %s26, 0
      %p72 = por %p70, %p71
      %p73 = scmp.ne.s32.totalorder %s62, %s65
      %p74 = scmp.eq.s32.totalorder %s31, 1
      %p75 = por %p73, %p74
      %p76 = scmp.ne.s32.totalorder %s65, %s66
      %p77 = scmp.eq.s32.totalorder %s31, 0
      %p78 = por %p76, %p77
      %p79 = scmp.ne.s32.totalorder %s65, %s66
      %p80 = scmp.eq.s32.totalorder %s32, 1
      %p81 = por %p79, %p80
      %p83 = scmp.ne.s32.totalorder %s66, %s82
      %p84 = scmp.eq.s32.totalorder %s32, 0
      %p85 = por %p83, %p84
      %s87 = sadd.s32 %s86, 1
      %p90 = scmp.eq.s32.totalorder %s26, 1
      %p91 = scmp.ne.s32.totalorder %s86, %s88
      %p92 = scmp.eq.s32.totalorder %s26, 0
      %p93 = por %p91, %p92
      %p94 = scmp.ne.s32.totalorder %s86, %s88
      %p95 = scmp.eq.s32.totalorder %s31, 1
      %p96 = por %p94, %p95
      %p97 = scmp.ne.s32.totalorder %s88, %s89
      %p98 = scmp.eq.s32.totalorder %s31, 0
      %p99 = por %p97, %p98
      %p100 = scmp.ne.s32.totalorder %s88, %s89
      %p101 = scmp.eq.s32.totalorder %s32, 1
      %p102 = por %p100, %p101
      %p104 = scmp.ne.s32.totalorder %s89, %s103
      %p105 = scmp.eq.s32.totalorder %s32, 0
      %p106 = por %p104, %p105
      %s108 = sadd.s32 %s107, 1
      %p111 = scmp.eq.s32.totalorder %s26, 1
      %p112 = scmp.ne.s32.totalorder %s107, %s109
      %p113 = scmp.eq.s32.totalorder %s26, 0
      %p114 = por %p112, %p113
      %p115 = scmp.ne.s32.totalorder %s107, %s109
      %p116 = scmp.eq.s32.totalorder %s31, 1
      %p117 = por %p115, %p116
      %p118 = scmp.ne.s32.totalorder %s109, %s110
      %p119 = scmp.eq.s32.totalorder %s31, 0
      %p120 = por %p118, %p119
      %p121 = scmp.ne.s32.totalorder %s109, %s110
      %p122 = scmp.eq.s32.totalorder %s32, 1
      %p123 = por %p121, %p122
      %p125 = scmp.ne.s32.totalorder %s110, %s124
      %p126 = scmp.eq.s32.totalorder %s32, 0
      %p127 = por %p125, %p126
      %s129 = sadd.s32 %s128, 1
      %p132 = scmp.eq.s32.totalorder %s26, 1
      %p133 = scmp.ne.s32.totalorder %s128, %s130
      %p134 = scmp.eq.s32.totalorder %s26, 0
      %p135 = por %p133, %p134
      %p136 = scmp.ne.s32.totalorder %s128, %s130
      %p137 = scmp.eq.s32.totalorder %s31, 1
      %p138 = por %p136, %p137
      %p139 = scmp.ne.s32.totalorder %s130, %s131
      %p140 = scmp.eq.s32.totalorder %s31, 0
      %p141 = por %p139, %p140
      %p142 = scmp.ne.s32.totalorder %s130, %s131
      %p143 = scmp.eq.s32.totalorder %s32, 1
      %p144 = por %p142, %p143
      %p146 = scmp.ne.s32.totalorder %s131, %s145
      %p147 = scmp.eq.s32.totalorder %s32, 0
      %p148 = por %p146, %p147
      %s150 = sadd.s32 %s149, 1
      %p153 = scmp.eq.s32.totalorder %s26, 1
      %p154 = scmp.ne.s32.totalorder %s149, %s151
      %p155 = scmp.eq.s32.totalorder %s26, 0
      %p156 = por %p154, %p155
      %p157 = scmp.ne.s32.totalorder %s149, %s151
      %p158 = scmp.eq.s32.totalorder %s31, 1
      %p159 = por %p157, %p158
      %p160 = scmp.ne.s32.totalorder %s151, %s152
      %p161 = scmp.eq.s32.totalorder %s31, 0
      %p162 = por %p160, %p161
      %p163 = scmp.ne.s32.totalorder %s151, %s152
      %p164 = scmp.eq.s32.totalorder %s32, 1
      %p165 = por %p163, %p164
      %p167 = scmp.ne.s32.totalorder %s152, %s166
      %p168 = scmp.eq.s32.totalorder %s32, 0
      %p169 = por %p167, %p168
      %s171 = sadd.s32 %s170, 1
      %p174 = scmp.eq.s32.totalorder %s26, 1
      %p175 = scmp.ne.s32.totalorder %s170, %s172
      %p176 = scmp.eq.s32.totalorder %s26, 0
      %p177 = por %p175, %p176
      %p178 = scmp.ne.s32.totalorder %s170, %s172
      %p179 = scmp.eq.s32.totalorder %s31, 1
      %p180 = por %p178, %p179
      %p181 = scmp.ne.s32.totalorder %s172, %s173
      %p182 = scmp.eq.s32.totalorder %s31, 0
      %p183 = por %p181, %p182
      %p184 = scmp.ne.s32.totalorder %s172, %s173
      %p185 = scmp.eq.s32.totalorder %s32, 1
      %p186 = por %p184, %p185
      %p188 = scmp.ne.s32.totalorder %s173, %s187
      %p189 = scmp.eq.s32.totalorder %s32, 0
      %p190 = por %p188, %p189
      %s192 = sadd.s32 %s191, 1
      %p195 = scmp.eq.s32.totalorder %s26, 1
      %p196 = scmp.ne.s32.totalorder %s191, %s193
      %p197 = scmp.eq.s32.totalorder %s26, 0
      %p198 = por %p196, %p197
      %p199 = scmp.ne.s32.totalorder %s191, %s193
      %p200 = scmp.eq.s32.totalorder %s31, 1
      %p201 = por %p199, %p200
      %p202 = scmp.ne.s32.totalorder %s193, %s194
      %p203 = scmp.eq.s32.totalorder %s31, 0
      %p204 = por %p202, %p203
      %p205 = scmp.ne.s32.totalorder %s193, %s194
      %p206 = scmp.eq.s32.totalorder %s32, 1
      %p207 = por %p205, %p206
      %p209 = scmp.ne.s32.totalorder %s194, %s208
      %p210 = scmp.eq.s32.totalorder %s32, 0
      %p211 = por %p209, %p210
      %s213 = sadd.s32 %s212, 1
      %p216 = scmp.eq.s32.totalorder %s26, 1
      %p217 = scmp.ne.s32.totalorder %s212, %s214
      %p218 = scmp.eq.s32.totalorder %s26, 0
      %p219 = por %p217, %p218
      %p220 = scmp.ne.s32.totalorder %s212, %s214
      %p221 = scmp.eq.s32.totalorder %s31, 1
      %p222 = por %p220, %p221
      %p223 = scmp.ne.s32.totalorder %s214, %s215
      %p224 = scmp.eq.s32.totalorder %s31, 0
      %p225 = por %p223, %p224
      %p226 = scmp.ne.s32.totalorder %s214, %s215
      %p227 = scmp.eq.s32.totalorder %s32, 1
      %p228 = por %p226, %p227
      %p230 = scmp.ne.s32.totalorder %s215, %s229
      %p231 = scmp.eq.s32.totalorder %s32, 0
      %p232 = por %p230, %p231
      %s234 = sadd.s32 %s233, 1
      %p237 = scmp.eq.s32.totalorder %s26, 1
      %p238 = scmp.ne.s32.totalorder %s233, %s235
      %p239 = scmp.eq.s32.totalorder %s26, 0
      %p240 = por %p238, %p239
      %p241 = scmp.ne.s32.totalorder %s233, %s235
      %p242 = scmp.eq.s32.totalorder %s31, 1
      %p243 = por %p241, %p242
      %p244 = scmp.ne.s32.totalorder %s235, %s236
      %p245 = scmp.eq.s32.totalorder %s31, 0
      %p246 = por %p244, %p245
      %p247 = scmp.ne.s32.totalorder %s235, %s236
      %p248 = scmp.eq.s32.totalorder %s32, 1
      %p249 = por %p247, %p248
      %p251 = scmp.ne.s32.totalorder %s236, %s250
      %p252 = scmp.eq.s32.totalorder %s32, 0
      %p253 = por %p251, %p252
      %s255 = sadd.s32 %s254, 1
      %p258 = scmp.eq.s32.totalorder %s26, 1
      %p259 = scmp.ne.s32.totalorder %s254, %s256
      %p260 = scmp.eq.s32.totalorder %s26, 0
      %p261 = por %p259, %p260
      %p262 = scmp.ne.s32.totalorder %s254, %s256
      %p263 = scmp.eq.s32.totalorder %s31, 1
      %p264 = por %p262, %p263
      %p265 = scmp.ne.s32.totalorder %s256, %s257
      %p266 = scmp.eq.s32.totalorder %s31, 0
      %p267 = por %p265, %p266
      %p268 = scmp.ne.s32.totalorder %s256, %s257
      %p269 = scmp.eq.s32.totalorder %s32, 1
      %p270 = por %p268, %p269
      %p272 = scmp.ne.s32.totalorder %s257, %s271
      %p273 = scmp.eq.s32.totalorder %s32, 0
      %p274 = por %p272, %p273
      %s276 = sadd.s32 %s275, 1
      %p279 = scmp.eq.s32.totalorder %s26, 1
      %p280 = scmp.ne.s32.totalorder %s275, %s277
      %p281 = scmp.eq.s32.totalorder %s26, 0
      %p282 = por %p280, %p281
      %p283 = scmp.ne.s32.totalorder %s275, %s277
      %p284 = scmp.eq.s32.totalorder %s31, 1
      %p285 = por %p283, %p284
      %p286 = scmp.ne.s32.totalorder %s277, %s278
      %p287 = scmp.eq.s32.totalorder %s31, 0
      %p288 = por %p286, %p287
      %p289 = scmp.ne.s32.totalorder %s277, %s278
      %p290 = scmp.eq.s32.totalorder %s32, 1
      %p291 = por %p289, %p290
      %p293 = scmp.ne.s32.totalorder %s278, %s292
      %p294 = scmp.eq.s32.totalorder %s32, 0
      %p295 = por %p293, %p294
      %s296 = ssub.s32 %s26, %s33
      %p297 = scmp.eq.s32.totalorder %s296, 0
      %s299 = sadd.s32 %s298, 1
      %s300 = scalar_select %p297, %s298, %s299
      %p303 = pneg %p297
      %p304 = scmp.eq.s32.totalorder %s26, 1
      %p305 = por %p303, %p304
      %p306 = scmp.ne.s32.totalorder %s298, %s301
      %p307 = scmp.eq.s32.totalorder %s26, 0
      %p308 = por %p306, %p307
      %p309 = scmp.ne.s32.totalorder %s298, %s301
      %p310 = scmp.eq.s32.totalorder %s31, 1
      %p311 = por %p309, %p310
      %p312 = scmp.ne.s32.totalorder %s301, %s302
      %p313 = scmp.eq.s32.totalorder %s31, 0
      %p314 = por %p312, %p313
      %p315 = scmp.ne.s32.totalorder %s301, %s302
      %p316 = scmp.eq.s32.totalorder %s32, 1
      %p317 = por %p315, %p316
      %p319 = scmp.ne.s32.totalorder %s302, %s318
      %p320 = scmp.eq.s32.totalorder %s32, 0
      %p321 = por %p319, %p320
      %s322 = ssub.s32 %s26, %s33
      %p323 = scmp.eq.s32.totalorder %s322, 0
      %s325 = sadd.s32 %s324, 1
      %s326 = scalar_select %p323, %s324, %s325
      %p329 = pneg %p323
      %p330 = scmp.eq.s32.totalorder %s26, 1
      %p331 = por %p329, %p330
      %p332 = scmp.ne.s32.totalorder %s324, %s327
      %p333 = scmp.eq.s32.totalorder %s26, 0
      %p334 = por %p332, %p333
      %p335 = scmp.ne.s32.totalorder %s324, %s327
      %p336 = scmp.eq.s32.totalorder %s31, 1
      %p337 = por %p335, %p336
      %p338 = scmp.ne.s32.totalorder %s327, %s328
      %p339 = scmp.eq.s32.totalorder %s31, 0
      %p340 = por %p338, %p339
      %p341 = scmp.ne.s32.totalorder %s327, %s328
      %p342 = scmp.eq.s32.totalorder %s32, 1
      %p343 = por %p341, %p342
      %p345 = scmp.ne.s32.totalorder %s328, %s344
      %p346 = scmp.eq.s32.totalorder %s32, 0
      %p347 = por %p345, %p346
      %p348 = scmp.le.s32.totalorder 1, %s26
      %p349 = scmp.lt.s32.totalorder %s26, 3
      %p350 = pnand %p348, %p349
      %p351 = pneg %p350
      // Predicated region
      $region9: #{_res_encoder_block_call.1} parent=5 // pred_check
        _
      $region10: #{_res_encoder_block_call.1} parent=5 // pred_check_branch
        %353 = sbr.rel (%p350) target = $region12
      $region11: #{_res_encoder_block_call.1} parent=5 // pred_region
        %s354 = ssub.s32 %s26, 1
        // Predicated region
        $region13: #{_res_encoder_block_call.1} parent=11 // pred_check
          %p355 = pneg %p99
        $region14: #{_res_encoder_block_call.1} parent=11 // pred_check_branch
          %357 = sbr.rel (%p355) target = $region16
        $region15: #{_res_encoder_block_call.1} parent=11 // pred_region
          _
        $region16: #{_res_encoder_block_call.1} parent=11 // pred_fallthru
          _
        // Predicated region
        $region17: #{_res_encoder_block_call.1} parent=11 // pred_check
          %p358 = pneg %p120
        $region18: #{_res_encoder_block_call.1} parent=11 // pred_check_branch
          %360 = sbr.rel (%p358) target = $region20
        $region19: #{_res_encoder_block_call.1} parent=11 // pred_region
          _
        $region20: #{_res_encoder_block_call.1} parent=11 // pred_fallthru
          _
        // Predicated region
        $region21: #{_res_encoder_block_call.1} parent=11 // pred_check
          %p361 = pneg %p141
        $region22: #{_res_encoder_block_call.1} parent=11 // pred_check_branch
          %363 = sbr.rel (%p361) target = $region24
        $region23: #{_res_encoder_block_call.1} parent=11 // pred_region
          _
        $region24: #{_res_encoder_block_call.1} parent=11 // pred_fallthru
          _
        // Predicated region
        $region25: #{_res_encoder_block_call.1} parent=11 // pred_check
          %p364 = pneg %p162
        $region26: #{_res_encoder_block_call.1} parent=11 // pred_check_branch
          %366 = sbr.rel (%p364) target = $region28
        $region27: #{_res_encoder_block_call.1} parent=11 // pred_region
          _
        $region28: #{_res_encoder_block_call.1} parent=11 // pred_fallthru
          _
        // Predicated region
        $region29: #{_res_encoder_block_call.1} parent=11 // pred_check
          %p367 = pneg %p183
        $region30: #{_res_encoder_block_call.1} parent=11 // pred_check_branch
          %369 = sbr.rel (%p367) target = $region32
        $region31: #{_res_encoder_block_call.1} parent=11 // pred_region
          _
        $region32: #{_res_encoder_block_call.1} parent=11 // pred_fallthru
          _
        // Predicated region
        $region33: #{_res_encoder_block_call.1} parent=11 // pred_check
          %p370 = pneg %p204
        $region34: #{_res_encoder_block_call.1} parent=11 // pred_check_branch
          %372 = sbr.rel (%p370) target = $region36
        $region35: #{_res_encoder_block_call.1} parent=11 // pred_region
          _
        $region36: #{_res_encoder_block_call.1} parent=11 // pred_fallthru
          _
        // Predicated region
        $region37: #{_res_encoder_block_call.1} parent=11 // pred_check
          %p373 = pneg %p225
        $region38: #{_res_encoder_block_call.1} parent=11 // pred_check_branch
          %375 = sbr.rel (%p373) target = $region40
        $region39: #{_res_encoder_block_call.1} parent=11 // pred_region
          _
        $region40: #{_res_encoder_block_call.1} parent=11 // pred_fallthru
          _
        // Predicated region
        $region41: #{_res_encoder_block_call.1} parent=11 // pred_check
          %p376 = pneg %p246
        $region42: #{_res_encoder_block_call.1} parent=11 // pred_check_branch
          %378 = sbr.rel (%p376) target = $region44
        $region43: #{_res_encoder_block_call.1} parent=11 // pred_region
          _
        $region44: #{_res_encoder_block_call.1} parent=11 // pred_fallthru
          _
        // Predicated region
        $region45: #{_res_encoder_block_call.1} parent=11 // pred_check
          %p379 = pneg %p267
        $region46: #{_res_encoder_block_call.1} parent=11 // pred_check_branch
          %381 = sbr.rel (%p379) target = $region48
        $region47: #{_res_encoder_block_call.1} parent=11 // pred_region
          _
        $region48: #{_res_encoder_block_call.1} parent=11 // pred_fallthru
          _
        // Predicated region
        $region49: #{_res_encoder_block_call.1} parent=11 // pred_check
          %p382 = pneg %p288
        $region50: #{_res_encoder_block_call.1} parent=11 // pred_check_branch
          %384 = sbr.rel (%p382) target = $region52
        $region51: #{_res_encoder_block_call.1} parent=11 // pred_region
          _
        $region52: #{_res_encoder_block_call.1} parent=11 // pred_fallthru
          _
      $region12: #{_res_encoder_block_call.1} parent=5 // pred_fallthru
        _
      %p385 = scmp.lt.s32.totalorder %s26, 2
      // Predicated region
      $region53: #{_res_encoder_block_call.1} parent=5 // pred_check
        %p386 = pneg %p385
      $region54: #{_res_encoder_block_call.1} parent=5 // pred_check_branch
        %388 = sbr.rel (%p386) target = $region56
      $region55: #{_res_encoder_block_call.1} parent=5 // pred_region
        // Predicated region
        $region57: #{_res_encoder_block_call.1} parent=55 // pred_check
          %p389 = pneg %p46
        $region58: #{_res_encoder_block_call.1} parent=55 // pred_check_branch
          %391 = sbr.rel (%p389) target = $region60
        $region59: #{_res_encoder_block_call.1} parent=55 // pred_region
          %p392 = scmp.lt.s32.totalorder %s26, 1
          %s393 = scalar_select %p392, %s26, 1
          %s394 = smul.addr %s393, 2
          %s395 = smul.addr %s394, 8
          %s396 = scalar_lea.vmem %s0, %s395
        $region60: #{_res_encoder_block_call.1} parent=55 // pred_fallthru
          _
        // Predicated region
        $region61: #{_res_encoder_block_call.1} parent=55 // pred_check
          %p397 = pneg %p72
        $region62: #{_res_encoder_block_call.1} parent=55 // pred_check_branch
          %399 = sbr.rel (%p397) target = $region64
        $region63: #{_res_encoder_block_call.1} parent=55 // pred_region
          %p400 = scmp.lt.s32.totalorder %s26, 1
          %s401 = scalar_select %p400, %s26, 1
          %s402 = smul.addr %s401, 8
          %s403 = smul.addr %s402, 8
          %s404 = scalar_lea.vmem %s1, %s403
        $region64: #{_res_encoder_block_call.1} parent=55 // pred_fallthru
          _
      $region56: #{_res_encoder_block_call.1} parent=5 // pred_fallthru
        _
      %p405 = scmp.le.s32.totalorder 1, %s26
      %p406 = scmp.lt.s32.totalorder %s26, 3
      %p407 = pnand %p405, %p406
      %p408 = pneg %p407
      // Predicated region
      $region65: #{_res_encoder_block_call.1} parent=5 // pred_check
        _
      $region66: #{_res_encoder_block_call.1} parent=5 // pred_check_branch
        %410 = sbr.rel (%p407) target = $region68
      $region67: #{_res_encoder_block_call.1} parent=5 // pred_region
        %s411 = ssub.s32 %s26, 1
        %p412 = scmp.lt.s32.totalorder %s31, 1
        %s413 = scalar_select %p412, %s31, 1
        %s414 = smul.addr %s413, 2
        %s415 = smul.addr %s414, 8
        %s416 = scalar_lea.vmem %s0, %s415
        %p417 = pneg %p52
        %p418 = pneg %p49
        %p419 = scmp.lt.s32.totalorder %s31, 1
        %s420 = scalar_select %p419, %s31, 1
        %s421 = smul.addr %s420, 8
        %s422 = smul.addr %s421, 8
        %s423 = scalar_lea.vmem %s1, %s422
        %p424 = pneg %p78
        %p425 = pneg %p75
        %p426 = pneg %p99
        %p427 = pneg %p96
        %p428 = pneg %p120
        %p429 = pneg %p117
        %p430 = pneg %p141
        %p431 = pneg %p138
        %p432 = pneg %p162
        %p433 = pneg %p159
        %p434 = pneg %p183
        %p435 = pneg %p180
        %p436 = pneg %p204
        %p437 = pneg %p201
        %p438 = pneg %p225
        %p439 = pneg %p222
        %p440 = pneg %p246
        %p441 = pneg %p243
        %p442 = pneg %p267
        %p443 = pneg %p264
        %p444 = pneg %p288
        %p445 = pneg %p285
        %p446 = pneg %p314
        %p447 = pneg %p311
        %s448 = sand.u32 %s301, 1
        %s449 = scalar_lea.sflag [#allocation3], %s448
        %s450 = sand.u32 %s301, 1
        %s451 = smul.addr %s450, 16
        %s452 = scalar_lea.vmem [#allocation2], %s451
        %p453 = pneg %p340
        %p454 = pneg %p337
        %s455 = sand.u32 %s327, 1
        %s456 = scalar_lea.sflag [#allocation5], %s455
        %s457 = sand.u32 %s327, 1
        %s458 = smul.addr %s457, 64
        %s459 = scalar_lea.vmem [#allocation4], %s458
        %p460 = scmp.lt.s32.totalorder %s31, 1
        %s461 = scalar_select %p460, %s31, 1
        %s462 = smul.addr %s461, 2
        %s463 = smul.addr %s462, 8
        %s464 = scalar_lea.vmem %s0, %s463
        %p465 = scmp.lt.s32.totalorder %s31, 1
        %s466 = scalar_select %p465, %s31, 1
        %s467 = smul.addr %s466, 8
        %s468 = smul.addr %s467, 8
        %s469 = scalar_lea.vmem %s1, %s468
        %v471 = vld [vmem:[%s464] sm:$0xff]
        %v472 = vld [vmem:[%s464 + $0x8] sm:$0xff]
        %v473 = vpack.c.bf16 %v471, %v471
        %v474 = vpack.c.bf16 %v472, %v472
        %v475 = vld [vmem:[%s2] sm:$0xff]
        %v476 = vld [vmem:[%s2 + $0x8] sm:$0xff]
        %v477 = vld [vmem:[%s2 + $0x10] sm:$0xff]
        %v478 = vld [vmem:[%s2 + $0x18] sm:$0xff]
        %v479 = vld [vmem:[%s2 + $0x20] sm:$0xff]
        %v480 = vld [vmem:[%s2 + $0x28] sm:$0xff]
        %v481 = vld [vmem:[%s2 + $0x30] sm:$0xff]
        %v482 = vld [vmem:[%s2 + $0x38] sm:$0xff]
        %v483 = vld [vmem:[%s2 + $0x40] sm:$0xff]
        %v484 = vld [vmem:[%s2 + $0x48] sm:$0xff]
        %v485 = vld [vmem:[%s2 + $0x50] sm:$0xff]
        %v486 = vld [vmem:[%s2 + $0x58] sm:$0xff]
        %v487 = vld [vmem:[%s2 + $0x60] sm:$0xff]
        %v488 = vld [vmem:[%s2 + $0x68] sm:$0xff]
        %v489 = vld [vmem:[%s2 + $0x70] sm:$0xff]
        %v490 = vld [vmem:[%s2 + $0x78] sm:$0xff]
        %v491 = vld [vmem:[%s2 + $0x80] sm:$0xff]
        %v492 = vld [vmem:[%s2 + $0x88] sm:$0xff]
        %v493 = vld [vmem:[%s2 + $0x90] sm:$0xff]
        %v494 = vld [vmem:[%s2 + $0x98] sm:$0xff]
        %v495 = vld [vmem:[%s2 + $0xa0] sm:$0xff]
        %v496 = vld [vmem:[%s2 + $0xa8] sm:$0xff]
        %v497 = vld [vmem:[%s2 + $0xb0] sm:$0xff]
        %v498 = vld [vmem:[%s2 + $0xb8] sm:$0xff]
        %v499 = vld [vmem:[%s2 + $0xc0] sm:$0xff]
        %v500 = vld [vmem:[%s2 + $0xc8] sm:$0xff]
        %v501 = vld [vmem:[%s2 + $0xd0] sm:$0xff]
        %v502 = vld [vmem:[%s2 + $0xd8] sm:$0xff]
        %v503 = vld [vmem:[%s2 + $0xe0] sm:$0xff]
        %v504 = vld [vmem:[%s2 + $0xe8] sm:$0xff]
        %v505 = vld [vmem:[%s2 + $0xf0] sm:$0xff]
        %v506 = vld [vmem:[%s2 + $0xf8] sm:$0xff]
        %v507 = vld [vmem:[%s2 + $0x100] sm:$0xff]
        %v508 = vld [vmem:[%s2 + $0x108] sm:$0xff]
        %v509 = vld [vmem:[%s2 + $0x110] sm:$0xff]
        %v510 = vld [vmem:[%s2 + $0x118] sm:$0xff]
        %v511 = vld [vmem:[%s2 + $0x120] sm:$0xff]
        %v512 = vld [vmem:[%s2 + $0x128] sm:$0xff]
        %v513 = vld [vmem:[%s2 + $0x130] sm:$0xff]
        %v514 = vld [vmem:[%s2 + $0x138] sm:$0xff]
        %v515 = vld [vmem:[%s2 + $0x140] sm:$0xff]
        %v516 = vld [vmem:[%s2 + $0x148] sm:$0xff]
        %v517 = vld [vmem:[%s2 + $0x150] sm:$0xff]
        %v518 = vld [vmem:[%s2 + $0x158] sm:$0xff]
        %v519 = vld [vmem:[%s2 + $0x160] sm:$0xff]
        %v520 = vld [vmem:[%s2 + $0x168] sm:$0xff]
        %v521 = vld [vmem:[%s2 + $0x170] sm:$0xff]
        %v522 = vld [vmem:[%s2 + $0x178] sm:$0xff]
        %v523 = vld [vmem:[%s2 + $0x180] sm:$0xff]
        %v524 = vld [vmem:[%s2 + $0x188] sm:$0xff]
        %v525 = vld [vmem:[%s2 + $0x190] sm:$0xff]
        %v526 = vld [vmem:[%s2 + $0x198] sm:$0xff]
        %v527 = vld [vmem:[%s2 + $0x1a0] sm:$0xff]
        %v528 = vld [vmem:[%s2 + $0x1a8] sm:$0xff]
        %v529 = vld [vmem:[%s2 + $0x1b0] sm:$0xff]
        %v530 = vld [vmem:[%s2 + $0x1b8] sm:$0xff]
        %v531 = vld [vmem:[%s2 + $0x1c0] sm:$0xff]
        %v532 = vld [vmem:[%s2 + $0x1c8] sm:$0xff]
        %v533 = vld [vmem:[%s2 + $0x1d0] sm:$0xff]
        %v534 = vld [vmem:[%s2 + $0x1d8] sm:$0xff]
        %v535 = vld [vmem:[%s2 + $0x1e0] sm:$0xff]
        %v536 = vld [vmem:[%s2 + $0x1e8] sm:$0xff]
        %v537 = vld [vmem:[%s2 + $0x1f0] sm:$0xff]
        %v538 = vld [vmem:[%s2 + $0x1f8] sm:$0xff]
        %v539 = vld [vmem:[%s2 + $0x200] sm:$0xff]
        %v540 = vld [vmem:[%s2 + $0x208] sm:$0xff]
        %v541 = vld [vmem:[%s2 + $0x210] sm:$0xff]
        %v542 = vld [vmem:[%s2 + $0x218] sm:$0xff]
        %v543 = vld [vmem:[%s2 + $0x220] sm:$0xff]
        %v544 = vld [vmem:[%s2 + $0x228] sm:$0xff]
        %v545 = vld [vmem:[%s2 + $0x230] sm:$0xff]
        %v546 = vld [vmem:[%s2 + $0x238] sm:$0xff]
        %v547 = vld [vmem:[%s2 + $0x240] sm:$0xff]
        %v548 = vld [vmem:[%s2 + $0x248] sm:$0xff]
        %v549 = vld [vmem:[%s2 + $0x250] sm:$0xff]
        %v550 = vld [vmem:[%s2 + $0x258] sm:$0xff]
        %v551 = vld [vmem:[%s2 + $0x260] sm:$0xff]
        %v552 = vld [vmem:[%s2 + $0x268] sm:$0xff]
        %v553 = vld [vmem:[%s2 + $0x270] sm:$0xff]
        %v554 = vld [vmem:[%s2 + $0x278] sm:$0xff]
        %v555 = vld [vmem:[%s2 + $0x280] sm:$0xff]
        %v556 = vld [vmem:[%s2 + $0x288] sm:$0xff]
        %v557 = vld [vmem:[%s2 + $0x290] sm:$0xff]
        %v558 = vld [vmem:[%s2 + $0x298] sm:$0xff]
        %v559 = vld [vmem:[%s2 + $0x2a0] sm:$0xff]
        %v560 = vld [vmem:[%s2 + $0x2a8] sm:$0xff]
        %v561 = vld [vmem:[%s2 + $0x2b0] sm:$0xff]
        %v562 = vld [vmem:[%s2 + $0x2b8] sm:$0xff]
        %v563 = vld [vmem:[%s2 + $0x2c0] sm:$0xff]
        %v564 = vld [vmem:[%s2 + $0x2c8] sm:$0xff]
        %v565 = vld [vmem:[%s2 + $0x2d0] sm:$0xff]
        %v566 = vld [vmem:[%s2 + $0x2d8] sm:$0xff]
        %v567 = vld [vmem:[%s2 + $0x2e0] sm:$0xff]
        %v568 = vld [vmem:[%s2 + $0x2e8] sm:$0xff]
        %v569 = vld [vmem:[%s2 + $0x2f0] sm:$0xff]
        %v570 = vld [vmem:[%s2 + $0x2f8] sm:$0xff]
        %v667 = vunpack.c.l.b16 %v475
        %v668 = vunpack.c.h.b16 %v475
        %v669 = vunpack.c.l.b16 %v476
        %v670 = vunpack.c.h.b16 %v476
        %v671 = vunpack.c.l.b16 %v477
        %v672 = vunpack.c.h.b16 %v477
        %v673 = vunpack.c.l.b16 %v478
        %v674 = vunpack.c.h.b16 %v478
        %v675 = vunpack.c.l.b16 %v479
        %v676 = vunpack.c.h.b16 %v479
        %v677 = vunpack.c.l.b16 %v480
        %v678 = vunpack.c.h.b16 %v480
        %v679 = vunpack.c.l.b16 %v481
        %v680 = vunpack.c.h.b16 %v481
        %v681 = vunpack.c.l.b16 %v482
        %v682 = vunpack.c.h.b16 %v482
        %v683 = vunpack.c.l.b16 %v483
        %v684 = vunpack.c.h.b16 %v483
        %v685 = vunpack.c.l.b16 %v484
        %v686 = vunpack.c.h.b16 %v484
        %v687 = vunpack.c.l.b16 %v485
        %v688 = vunpack.c.h.b16 %v485
        %v689 = vunpack.c.l.b16 %v486
        %v690 = vunpack.c.h.b16 %v486
        %v691 = vunpack.c.l.b16 %v487
        %v692 = vunpack.c.h.b16 %v487
        %v693 = vunpack.c.l.b16 %v488
        %v694 = vunpack.c.h.b16 %v488
        %v695 = vunpack.c.l.b16 %v489
        %v696 = vunpack.c.h.b16 %v489
        %v697 = vunpack.c.l.b16 %v490
        %v698 = vunpack.c.h.b16 %v490
        %v699 = vunpack.c.l.b16 %v491
        %v700 = vunpack.c.h.b16 %v491
        %v701 = vunpack.c.l.b16 %v492
        %v702 = vunpack.c.h.b16 %v492
        %v703 = vunpack.c.l.b16 %v493
        %v704 = vunpack.c.h.b16 %v493
        %v705 = vunpack.c.l.b16 %v494
        %v706 = vunpack.c.h.b16 %v494
        %v707 = vunpack.c.l.b16 %v495
        %v708 = vunpack.c.h.b16 %v495
        %v709 = vunpack.c.l.b16 %v496
        %v710 = vunpack.c.h.b16 %v496
        %v711 = vunpack.c.l.b16 %v497
        %v712 = vunpack.c.h.b16 %v497
        %v713 = vunpack.c.l.b16 %v498
        %v714 = vunpack.c.h.b16 %v498
        %v715 = vunpack.c.l.b16 %v499
        %v716 = vunpack.c.h.b16 %v499
        %v717 = vunpack.c.l.b16 %v500
        %v718 = vunpack.c.h.b16 %v500
        %v719 = vunpack.c.l.b16 %v501
        %v720 = vunpack.c.h.b16 %v501
        %v721 = vunpack.c.l.b16 %v502
        %v722 = vunpack.c.h.b16 %v502
        %v723 = vunpack.c.l.b16 %v503
        %v724 = vunpack.c.h.b16 %v503
        %v725 = vunpack.c.l.b16 %v504
        %v726 = vunpack.c.h.b16 %v504
        %v727 = vunpack.c.l.b16 %v505
        %v728 = vunpack.c.h.b16 %v505
        %v729 = vunpack.c.l.b16 %v506
        %v730 = vunpack.c.h.b16 %v506
        %v731 = vunpack.c.l.b16 %v507
        %v732 = vunpack.c.h.b16 %v507
        %v733 = vunpack.c.l.b16 %v508
        %v734 = vunpack.c.h.b16 %v508
        %v735 = vunpack.c.l.b16 %v509
        %v736 = vunpack.c.h.b16 %v509
        %v737 = vunpack.c.l.b16 %v510
        %v738 = vunpack.c.h.b16 %v510
        %v739 = vunpack.c.l.b16 %v511
        %v740 = vunpack.c.h.b16 %v511
        %v741 = vunpack.c.l.b16 %v512
        %v742 = vunpack.c.h.b16 %v512
        %v743 = vunpack.c.l.b16 %v513
        %v744 = vunpack.c.h.b16 %v513
        %v745 = vunpack.c.l.b16 %v514
        %v746 = vunpack.c.h.b16 %v514
        %v747 = vunpack.c.l.b16 %v515
        %v748 = vunpack.c.h.b16 %v515
        %v749 = vunpack.c.l.b16 %v516
        %v750 = vunpack.c.h.b16 %v516
        %v751 = vunpack.c.l.b16 %v517
        %v752 = vunpack.c.h.b16 %v517
        %v753 = vunpack.c.l.b16 %v518
        %v754 = vunpack.c.h.b16 %v518
        %v755 = vunpack.c.l.b16 %v519
        %v756 = vunpack.c.h.b16 %v519
        %v757 = vunpack.c.l.b16 %v520
        %v758 = vunpack.c.h.b16 %v520
        %v759 = vunpack.c.l.b16 %v521
        %v760 = vunpack.c.h.b16 %v521
        %v761 = vunpack.c.l.b16 %v522
        %v762 = vunpack.c.h.b16 %v522
        %v763 = vunpack.c.l.b16 %v523
        %v764 = vunpack.c.h.b16 %v523
        %v765 = vunpack.c.l.b16 %v524
        %v766 = vunpack.c.h.b16 %v524
        %v767 = vunpack.c.l.b16 %v525
        %v768 = vunpack.c.h.b16 %v525
        %v769 = vunpack.c.l.b16 %v526
        %v770 = vunpack.c.h.b16 %v526
        %v771 = vunpack.c.l.b16 %v527
        %v772 = vunpack.c.h.b16 %v527
        %v773 = vunpack.c.l.b16 %v528
        %v774 = vunpack.c.h.b16 %v528
        %v775 = vunpack.c.l.b16 %v529
        %v776 = vunpack.c.h.b16 %v529
        %v777 = vunpack.c.l.b16 %v530
        %v778 = vunpack.c.h.b16 %v530
        %v779 = vunpack.c.l.b16 %v531
        %v780 = vunpack.c.h.b16 %v531
        %v781 = vunpack.c.l.b16 %v532
        %v782 = vunpack.c.h.b16 %v532
        %v783 = vunpack.c.l.b16 %v533
        %v784 = vunpack.c.h.b16 %v533
        %v785 = vunpack.c.l.b16 %v534
        %v786 = vunpack.c.h.b16 %v534
        %v787 = vunpack.c.l.b16 %v535
        %v788 = vunpack.c.h.b16 %v535
        %v789 = vunpack.c.l.b16 %v536
        %v790 = vunpack.c.h.b16 %v536
        %v791 = vunpack.c.l.b16 %v537
        %v792 = vunpack.c.h.b16 %v537
        %v793 = vunpack.c.l.b16 %v538
        %v794 = vunpack.c.h.b16 %v538
        %v795 = vunpack.c.l.b16 %v539
        %v796 = vunpack.c.h.b16 %v539
        %v797 = vunpack.c.l.b16 %v540
        %v798 = vunpack.c.h.b16 %v540
        %v799 = vunpack.c.l.b16 %v541
        %v800 = vunpack.c.h.b16 %v541
        %v801 = vunpack.c.l.b16 %v542
        %v802 = vunpack.c.h.b16 %v542
        %v803 = vunpack.c.l.b16 %v543
        %v804 = vunpack.c.h.b16 %v543
        %v805 = vunpack.c.l.b16 %v544
        %v806 = vunpack.c.h.b16 %v544
        %v807 = vunpack.c.l.b16 %v545
        %v808 = vunpack.c.h.b16 %v545
        %v809 = vunpack.c.l.b16 %v546
        %v810 = vunpack.c.h.b16 %v546
        %v811 = vunpack.c.l.b16 %v547
        %v812 = vunpack.c.h.b16 %v547
        %v813 = vunpack.c.l.b16 %v548
        %v814 = vunpack.c.h.b16 %v548
        %v815 = vunpack.c.l.b16 %v549
        %v816 = vunpack.c.h.b16 %v549
        %v817 = vunpack.c.l.b16 %v550
        %v818 = vunpack.c.h.b16 %v550
        %v819 = vunpack.c.l.b16 %v551
        %v820 = vunpack.c.h.b16 %v551
        %v821 = vunpack.c.l.b16 %v552
        %v822 = vunpack.c.h.b16 %v552
        %v823 = vunpack.c.l.b16 %v553
        %v824 = vunpack.c.h.b16 %v553
        %v825 = vunpack.c.l.b16 %v554
        %v826 = vunpack.c.h.b16 %v554
        %v827 = vunpack.c.l.b16 %v555
        %v828 = vunpack.c.h.b16 %v555
        %v829 = vunpack.c.l.b16 %v556
        %v830 = vunpack.c.h.b16 %v556
        %v831 = vunpack.c.l.b16 %v557
        %v832 = vunpack.c.h.b16 %v557
        %v833 = vunpack.c.l.b16 %v558
        %v834 = vunpack.c.h.b16 %v558
        %v835 = vunpack.c.l.b16 %v559
        %v836 = vunpack.c.h.b16 %v559
        %v837 = vunpack.c.l.b16 %v560
        %v838 = vunpack.c.h.b16 %v560
        %v839 = vunpack.c.l.b16 %v561
        %v840 = vunpack.c.h.b16 %v561
        %v841 = vunpack.c.l.b16 %v562
        %v842 = vunpack.c.h.b16 %v562
        %v843 = vunpack.c.l.b16 %v563
        %v844 = vunpack.c.h.b16 %v563
        %v845 = vunpack.c.l.b16 %v564
        %v846 = vunpack.c.h.b16 %v564
        %v847 = vunpack.c.l.b16 %v565
        %v848 = vunpack.c.h.b16 %v565
        %v849 = vunpack.c.l.b16 %v566
        %v850 = vunpack.c.h.b16 %v566
        %v851 = vunpack.c.l.b16 %v567
        %v852 = vunpack.c.h.b16 %v567
        %v853 = vunpack.c.l.b16 %v568
        %v854 = vunpack.c.h.b16 %v568
        %v855 = vunpack.c.l.b16 %v569
        %v856 = vunpack.c.h.b16 %v569
        %v857 = vunpack.c.l.b16 %v570
        %v858 = vunpack.c.h.b16 %v570
        %v859 = vpack.c.b16 %v673, %v667
        %v860 = vpack.c.b16 %v674, %v668
        %v861 = vpack.c.b16 %v675, %v669
        %v862 = vpack.c.b16 %v676, %v670
        %v863 = vpack.c.b16 %v677, %v671
        %v864 = vpack.c.b16 %v678, %v672
        %v865 = vpack.c.b16 %v685, %v679
        %v866 = vpack.c.b16 %v686, %v680
        %v867 = vpack.c.b16 %v687, %v681
        %v868 = vpack.c.b16 %v688, %v682
        %v869 = vpack.c.b16 %v689, %v683
        %v870 = vpack.c.b16 %v690, %v684
        %v871 = vpack.c.b16 %v697, %v691
        %v872 = vpack.c.b16 %v698, %v692
        %v873 = vpack.c.b16 %v699, %v693
        %v874 = vpack.c.b16 %v700, %v694
        %v875 = vpack.c.b16 %v701, %v695
        %v876 = vpack.c.b16 %v702, %v696
        %v877 = vpack.c.b16 %v709, %v703
        %v878 = vpack.c.b16 %v710, %v704
        %v879 = vpack.c.b16 %v711, %v705
        %v880 = vpack.c.b16 %v712, %v706
        %v881 = vpack.c.b16 %v713, %v707
        %v882 = vpack.c.b16 %v714, %v708
        %v883 = vpack.c.b16 %v721, %v715
        %v884 = vpack.c.b16 %v722, %v716
        %v885 = vpack.c.b16 %v723, %v717
        %v886 = vpack.c.b16 %v724, %v718
        %v887 = vpack.c.b16 %v725, %v719
        %v888 = vpack.c.b16 %v726, %v720
        %v889 = vpack.c.b16 %v733, %v727
        %v890 = vpack.c.b16 %v734, %v728
        %v891 = vpack.c.b16 %v735, %v729
        %v892 = vpack.c.b16 %v736, %v730
        %v893 = vpack.c.b16 %v737, %v731
        %v894 = vpack.c.b16 %v738, %v732
        %v895 = vpack.c.b16 %v745, %v739
        %v896 = vpack.c.b16 %v746, %v740
        %v897 = vpack.c.b16 %v747, %v741
        %v898 = vpack.c.b16 %v748, %v742
        %v899 = vpack.c.b16 %v749, %v743
        %v900 = vpack.c.b16 %v750, %v744
        %v901 = vpack.c.b16 %v757, %v751
        %v902 = vpack.c.b16 %v758, %v752
        %v903 = vpack.c.b16 %v759, %v753
        %v904 = vpack.c.b16 %v760, %v754
        %v905 = vpack.c.b16 %v761, %v755
        %v906 = vpack.c.b16 %v762, %v756
        %v907 = vpack.c.b16 %v769, %v763
        %v908 = vpack.c.b16 %v770, %v764
        %v909 = vpack.c.b16 %v771, %v765
        %v910 = vpack.c.b16 %v772, %v766
        %v911 = vpack.c.b16 %v773, %v767
        %v912 = vpack.c.b16 %v774, %v768
        %v913 = vpack.c.b16 %v781, %v775
        %v914 = vpack.c.b16 %v782, %v776
        %v915 = vpack.c.b16 %v783, %v777
        %v916 = vpack.c.b16 %v784, %v778
        %v917 = vpack.c.b16 %v785, %v779
        %v918 = vpack.c.b16 %v786, %v780
        %v919 = vpack.c.b16 %v793, %v787
        %v920 = vpack.c.b16 %v794, %v788
        %v921 = vpack.c.b16 %v795, %v789
        %v922 = vpack.c.b16 %v796, %v790
        %v923 = vpack.c.b16 %v797, %v791
        %v924 = vpack.c.b16 %v798, %v792
        %v925 = vpack.c.b16 %v805, %v799
        %v926 = vpack.c.b16 %v806, %v800
        %v927 = vpack.c.b16 %v807, %v801
        %v928 = vpack.c.b16 %v808, %v802
        %v929 = vpack.c.b16 %v809, %v803
        %v930 = vpack.c.b16 %v810, %v804
        %v931 = vpack.c.b16 %v817, %v811
        %v932 = vpack.c.b16 %v818, %v812
        %v933 = vpack.c.b16 %v819, %v813
        %v934 = vpack.c.b16 %v820, %v814
        %v935 = vpack.c.b16 %v821, %v815
        %v936 = vpack.c.b16 %v822, %v816
        %v937 = vpack.c.b16 %v829, %v823
        %v938 = vpack.c.b16 %v830, %v824
        %v939 = vpack.c.b16 %v831, %v825
        %v940 = vpack.c.b16 %v832, %v826
        %v941 = vpack.c.b16 %v833, %v827
        %v942 = vpack.c.b16 %v834, %v828
        %v943 = vpack.c.b16 %v841, %v835
        %v944 = vpack.c.b16 %v842, %v836
        %v945 = vpack.c.b16 %v843, %v837
        %v946 = vpack.c.b16 %v844, %v838
        %v947 = vpack.c.b16 %v845, %v839
        %v948 = vpack.c.b16 %v846, %v840
        %v949 = vpack.c.b16 %v853, %v847
        %v950 = vpack.c.b16 %v854, %v848
        %v951 = vpack.c.b16 %v855, %v849
        %v952 = vpack.c.b16 %v856, %v850
        %v953 = vpack.c.b16 %v857, %v851
        %v954 = vpack.c.b16 %v858, %v852
        %1051 = vmatpush.bf16.msra.mxu0 %v901
        %1052 = vmatpush.bf16.msra.mxu0 %v895
        %1053 = vmatpush.bf16.msra.mxu0 %v889
        %1054 = vmatpush.bf16.msra.mxu0 %v883
        %1055 = vmatpush.bf16.msra.mxu0 %v877
        %1056 = vmatpush.bf16.msra.mxu0 %v871
        %1057 = vmatpush.bf16.msra.mxu0 %v865
        %1058 = vmatpush.bf16.msra.mxu0 %v859
        %1059 = vmatmul.bf16.gmra.mxu0 %v473
        %v1060 = vpop.f32.mrf.mxu0
        %v1061 = vadd.f32 0.0, %v1060
        %v1062 = vpop.f32.mrf.mxu0
        %1063 = vdwg.mxu0
        %1064 = vmatpush.bf16.msra.mxu0 %v949
        %1065 = vmatpush.bf16.msra.mxu0 %v943
        %1066 = vmatpush.bf16.msra.mxu0 %v937
        %1067 = vmatpush.bf16.msra.mxu0 %v931
        %1068 = vmatpush.bf16.msra.mxu0 %v925
        %1069 = vmatpush.bf16.msra.mxu0 %v919
        %1070 = vmatpush.bf16.msra.mxu0 %v913
        %1071 = vmatpush.bf16.msra.mxu0 %v907
        %1072 = vmatmul.bf16.gmra.mxu0 %v474
        %v1073 = vpop.f32.mrf.mxu0
        %v1074 = vadd.f32 %v1061, %v1073
        %v1075 = vpop.f32.mrf.mxu0
        %1076 = vdwg.mxu0
        %1077 = vmatpush.bf16.msra.mxu0 %v902
        %1078 = vmatpush.bf16.msra.mxu0 %v896
        %1079 = vmatpush.bf16.msra.mxu0 %v890
        %1080 = vmatpush.bf16.msra.mxu0 %v884
        %1081 = vmatpush.bf16.msra.mxu0 %v878
        %1082 = vmatpush.bf16.msra.mxu0 %v872
        %1083 = vmatpush.bf16.msra.mxu0 %v866
        %1084 = vmatpush.bf16.msra.mxu0 %v860
        %1085 = vmatmul.bf16.gmra.mxu0 %v473
        %v1086 = vpop.f32.mrf.mxu0
        %v1087 = vadd.f32 0.0, %v1086
        %v1088 = vpop.f32.mrf.mxu0
        %1089 = vdwg.mxu0
        %1090 = vmatpush.bf16.msra.mxu0 %v950
        %1091 = vmatpush.bf16.msra.mxu0 %v944
        %1092 = vmatpush.bf16.msra.mxu0 %v938
        %1093 = vmatpush.bf16.msra.mxu0 %v932
        %1094 = vmatpush.bf16.msra.mxu0 %v926
        %1095 = vmatpush.bf16.msra.mxu0 %v920
        %1096 = vmatpush.bf16.msra.mxu0 %v914
        %1097 = vmatpush.bf16.msra.mxu0 %v908
        %1098 = vmatmul.bf16.gmra.mxu0 %v474
        %v1099 = vpop.f32.mrf.mxu0
        %v1100 = vadd.f32 %v1087, %v1099
        %v1101 = vpop.f32.mrf.mxu0
        %1102 = vdwg.mxu0
        %1103 = vmatpush.bf16.msra.mxu0 %v903
        %1104 = vmatpush.bf16.msra.mxu0 %v897
        %1105 = vmatpush.bf16.msra.mxu0 %v891
        %1106 = vmatpush.bf16.msra.mxu0 %v885
        %1107 = vmatpush.bf16.msra.mxu0 %v879
        %1108 = vmatpush.bf16.msra.mxu0 %v873
        %1109 = vmatpush.bf16.msra.mxu0 %v867
        %1110 = vmatpush.bf16.msra.mxu0 %v861
        %1111 = vmatmul.bf16.gmra.mxu0 %v473
        %v1112 = vpop.f32.mrf.mxu0
        %v1113 = vadd.f32 0.0, %v1112
        %v1114 = vpop.f32.mrf.mxu0
        %1115 = vdwg.mxu0
        %1116 = vmatpush.bf16.msra.mxu0 %v951
        %1117 = vmatpush.bf16.msra.mxu0 %v945
        %1118 = vmatpush.bf16.msra.mxu0 %v939
        %1119 = vmatpush.bf16.msra.mxu0 %v933
        %1120 = vmatpush.bf16.msra.mxu0 %v927
        %1121 = vmatpush.bf16.msra.mxu0 %v921
        %1122 = vmatpush.bf16.msra.mxu0 %v915
        %1123 = vmatpush.bf16.msra.mxu0 %v909
        %1124 = vmatmul.bf16.gmra.mxu0 %v474
        %v1125 = vpop.f32.mrf.mxu0
        %v1126 = vadd.f32 %v1113, %v1125
        %v1127 = vpop.f32.mrf.mxu0
        %1128 = vdwg.mxu0
        %1129 = vmatpush.bf16.msra.mxu0 %v904
        %1130 = vmatpush.bf16.msra.mxu0 %v898
        %1131 = vmatpush.bf16.msra.mxu0 %v892
        %1132 = vmatpush.bf16.msra.mxu0 %v886
        %1133 = vmatpush.bf16.msra.mxu0 %v880
        %1134 = vmatpush.bf16.msra.mxu0 %v874
        %1135 = vmatpush.bf16.msra.mxu0 %v868
        %1136 = vmatpush.bf16.msra.mxu0 %v862
        %1137 = vmatmul.bf16.gmra.mxu0 %v473
        %v1138 = vpop.f32.mrf.mxu0
        %v1139 = vadd.f32 0.0, %v1138
        %v1140 = vpop.f32.mrf.mxu0
        %1141 = vdwg.mxu0
        %1142 = vmatpush.bf16.msra.mxu0 %v952
        %1143 = vmatpush.bf16.msra.mxu0 %v946
        %1144 = vmatpush.bf16.msra.mxu0 %v940
        %1145 = vmatpush.bf16.msra.mxu0 %v934
        %1146 = vmatpush.bf16.msra.mxu0 %v928
        %1147 = vmatpush.bf16.msra.mxu0 %v922
        %1148 = vmatpush.bf16.msra.mxu0 %v916
        %1149 = vmatpush.bf16.msra.mxu0 %v910
        %1150 = vmatmul.bf16.gmra.mxu0 %v474
        %v1151 = vpop.f32.mrf.mxu0
        %v1152 = vadd.f32 %v1139, %v1151
        %v1153 = vpop.f32.mrf.mxu0
        %1154 = vdwg.mxu0
        %1155 = vmatpush.bf16.msra.mxu0 %v905
        %1156 = vmatpush.bf16.msra.mxu0 %v899
        %1157 = vmatpush.bf16.msra.mxu0 %v893
        %1158 = vmatpush.bf16.msra.mxu0 %v887
        %1159 = vmatpush.bf16.msra.mxu0 %v881
        %1160 = vmatpush.bf16.msra.mxu0 %v875
        %1161 = vmatpush.bf16.msra.mxu0 %v869
        %1162 = vmatpush.bf16.msra.mxu0 %v863
        %1163 = vmatmul.bf16.gmra.mxu0 %v473
        %v1164 = vpop.f32.mrf.mxu0
        %v1165 = vadd.f32 0.0, %v1164
        %v1166 = vpop.f32.mrf.mxu0
        %1167 = vdwg.mxu0
        %1168 = vmatpush.bf16.msra.mxu0 %v953
        %1169 = vmatpush.bf16.msra.mxu0 %v947
        %1170 = vmatpush.bf16.msra.mxu0 %v941
        %1171 = vmatpush.bf16.msra.mxu0 %v935
        %1172 = vmatpush.bf16.msra.mxu0 %v929
        %1173 = vmatpush.bf16.msra.mxu0 %v923
        %1174 = vmatpush.bf16.msra.mxu0 %v917
        %1175 = vmatpush.bf16.msra.mxu0 %v911
        %1176 = vmatmul.bf16.gmra.mxu0 %v474
        %v1177 = vpop.f32.mrf.mxu0
        %v1178 = vadd.f32 %v1165, %v1177
        %v1179 = vpop.f32.mrf.mxu0
        %1180 = vdwg.mxu0
        %1181 = vmatpush.bf16.msra.mxu0 %v906
        %1182 = vmatpush.bf16.msra.mxu0 %v900
        %1183 = vmatpush.bf16.msra.mxu0 %v894
        %1184 = vmatpush.bf16.msra.mxu0 %v888
        %1185 = vmatpush.bf16.msra.mxu0 %v882
        %1186 = vmatpush.bf16.msra.mxu0 %v876
        %1187 = vmatpush.bf16.msra.mxu0 %v870
        %1188 = vmatpush.bf16.msra.mxu0 %v864
        %1189 = vmatmul.bf16.gmra.mxu0 %v473
        %v1190 = vpop.f32.mrf.mxu0
        %v1191 = vadd.f32 0.0, %v1190
        %v1192 = vpop.f32.mrf.mxu0
        %1193 = vdwg.mxu0
        %1194 = vmatpush.bf16.msra.mxu0 %v954
        %1195 = vmatpush.bf16.msra.mxu0 %v948
        %1196 = vmatpush.bf16.msra.mxu0 %v942
        %1197 = vmatpush.bf16.msra.mxu0 %v936
        %1198 = vmatpush.bf16.msra.mxu0 %v930
        %1199 = vmatpush.bf16.msra.mxu0 %v924
        %1200 = vmatpush.bf16.msra.mxu0 %v918
        %1201 = vmatpush.bf16.msra.mxu0 %v912
        %1202 = vmatmul.bf16.gmra.mxu0 %v474
        %v1203 = vpop.f32.mrf.mxu0
        %v1204 = vadd.f32 %v1191, %v1203
        %v1205 = vpop.f32.mrf.mxu0
        %1206 = vdwg.mxu0
        %v1207 = vld [vmem:[%s469] sm:$0xff]
        %1209 = vrot.lane.b32.xlu0 %v1074, 96
        %v1210 = vpop.permute.xlu0 %1209
        %vm1211 = vcmask 261120
        %v1212 = vsel %vm1211, %v1210, 0
        %v1214 = vsel %vm1211, %v1074, 0
        %1216 = vmatpush.xpose.msra.mxu0 0.0
        %1217 = vmatpush.xpose.msra.mxu0 0.0
        %1218 = vmatpush.xpose.msra.mxu0 0.0
        %1219 = vmatpush.xpose.msra.mxu0 0.0
        %1220 = vmatpush.xpose.msra.mxu0 0.0
        %1221 = vmatpush.xpose.msra.mxu0 0.0
        %1222 = vmatpush.xpose.msra.mxu0 0.0
        %1223 = vmatpush.xpose.msra.mxu0 0.0
        %1224 = vmatpush.xpose.msra.mxu0 0.0
        %1225 = vmatpush.xpose.msra.mxu0 0.0
        %1226 = vmatpush.xpose.msra.mxu0 0.0
        %1227 = vmatpush.xpose.msra.mxu0 0.0
        %1228 = vmatpush.xpose.msra.mxu0 0.0
        %1229 = vmatpush.xpose.msra.mxu0 0.0
        %1230 = vmatpush.xpose.msra.mxu0 0.0
        %1231 = vmatpush.xpose.msra.mxu0 %v1214
        %1232 = vmatmul.f32.gmra.mxu0 %v1212
        %v1233 = vpop.f32.mrf.mxu0
        %v1234 = vadd.f32 %v1207, %v1233
        %1235 = vdwg.mxu0
        %vm1236 = vcmask 64512
        %1237 = vst.msk [vmem:[%s459] sm:$0xff] %vm1236, %v1234
        %v1238 = vsel %vm1236, %v1234, -inf
        %1239 = vmax.xlane.f32.xlu0 %v1238
        %v1240 = vpop.xlane.xlu0 %1239
        %v1241 = vsub.f32 %v1234, %v1240
        %v1242 = vmul.f32 %v1241, 1.442695
        %v1243 = vpow.pop %v1242
        %v1244 = vsel %vm1236, %v1243, 0.0
        %1245 = vadd.xlane.f32.xlu0 %v1244
        %v1246 = vpop.xlane.xlu0 %1245
        %v1247 = vrcp.pop %v1246
        %v1248 = vmul.f32 %v1243, %v1247
        %v1249 = vpack.c.bf16 %v1248, %v1248
        %v1250 = vpack.c.bf16 %v1074, %v1074
        %v1252 = vunpack.c.l.b16 %v1250
        %v1253 = vpack.c.b16 %v1252, %v1252
        %1254 = vrot.lane.b32.xlu0 %v1253, 64
        %v1255 = vpop.permute.xlu0 %1254
        %v1257 = vsel %vm1236, %v1249, 0
        %vm1259 = vcmask 1043456
        %v1261 = vsel %vm1259, %v1255, 0
        %1263 = vmatpush.bf16.msra.mxu0 0
        %1264 = vmatpush.bf16.msra.mxu0 0
        %1265 = vmatpush.bf16.msra.mxu0 0
        %1266 = vmatpush.bf16.msra.mxu0 0
        %1267 = vmatpush.bf16.msra.mxu0 0
        %1268 = vmatpush.bf16.msra.mxu0 0
        %1269 = vmatpush.bf16.msra.mxu0 0
        %1270 = vmatpush.bf16.msra.mxu0 %v1261
        %1271 = vmatmul.bf16.gmra.mxu0 %v1257
        %v1272 = vpop.f32.mrf.mxu0
        %v1273 = vadd.f32 0.0, %v1272
        %v1274 = vpop.f32.mrf.mxu0
        %1275 = vdwg.mxu0
        %v1276 = vpack.c.bf16 %v1273, %v1273
        %s1277 = scalar_lea.vmem %s469, 8
        %v1278 = vld [vmem:[%s1277] sm:$0xff]
        %1279 = vrot.lane.b32.xlu0 %v1074, 32
        %v1280 = vpop.permute.xlu0 %1279
        %v1282 = vsel %vm1211, %v1100, 0
        %v1284 = vsel %vm1211, %v1280, 0
        %1286 = vmatpush.xpose.msra.mxu0 0.0
        %1287 = vmatpush.xpose.msra.mxu0 0.0
        %1288 = vmatpush.xpose.msra.mxu0 0.0
        %1289 = vmatpush.xpose.msra.mxu0 0.0
        %1290 = vmatpush.xpose.msra.mxu0 0.0
        %1291 = vmatpush.xpose.msra.mxu0 0.0
        %1292 = vmatpush.xpose.msra.mxu0 0.0
        %1293 = vmatpush.xpose.msra.mxu0 0.0
        %1294 = vmatpush.xpose.msra.mxu0 0.0
        %1295 = vmatpush.xpose.msra.mxu0 0.0
        %1296 = vmatpush.xpose.msra.mxu0 0.0
        %1297 = vmatpush.xpose.msra.mxu0 0.0
        %1298 = vmatpush.xpose.msra.mxu0 0.0
        %1299 = vmatpush.xpose.msra.mxu0 0.0
        %1300 = vmatpush.xpose.msra.mxu0 0.0
        %1301 = vmatpush.xpose.msra.mxu0 %v1284
        %1302 = vmatmul.f32.gmra.mxu0 %v1282
        %v1303 = vpop.f32.mrf.mxu0
        %v1304 = vadd.f32 %v1278, %v1303
        %1305 = vdwg.mxu0
        %s1306 = scalar_lea.vmem %s459, 8 [#allocation4]
        %1307 = vst.msk [vmem:[%s1306] sm:$0xff] %vm1236, %v1304
        %v1308 = vsel %vm1236, %v1304, -inf
        %1309 = vmax.xlane.f32.xlu0 %v1308
        %v1310 = vpop.xlane.xlu0 %1309
        %v1311 = vsub.f32 %v1304, %v1310
        %v1312 = vmul.f32 %v1311, 1.442695
        %v1313 = vpow.pop %v1312
        %v1314 = vsel %vm1236, %v1313, 0.0
        %1315 = vadd.xlane.f32.xlu0 %v1314
        %v1316 = vpop.xlane.xlu0 %1315
        %v1317 = vrcp.pop %v1316
        %v1318 = vmul.f32 %v1313, %v1317
        %v1319 = vpack.c.bf16 %v1318, %v1318
        %v1320 = vpack.c.bf16 %v1100, %v1100
        %v1322 = vunpack.c.l.b16 %v1320
        %v1323 = vpack.c.b16 %v1322, %v1322
        %1324 = vrot.lane.b32.xlu0 %v1323, 96
        %v1325 = vpop.permute.xlu0 %1324
        %v1327 = vsel %vm1236, %v1319, 0
        %v1330 = vsel %vm1259, %v1325, 0
        %1332 = vmatpush.bf16.msra.mxu0 0
        %1333 = vmatpush.bf16.msra.mxu0 0
        %1334 = vmatpush.bf16.msra.mxu0 0
        %1335 = vmatpush.bf16.msra.mxu0 0
        %1336 = vmatpush.bf16.msra.mxu0 0
        %1337 = vmatpush.bf16.msra.mxu0 0
        %1338 = vmatpush.bf16.msra.mxu0 0
        %1339 = vmatpush.bf16.msra.mxu0 %v1330
        %1340 = vmatmul.bf16.gmra.mxu0 %v1327
        %v1341 = vpop.f32.mrf.mxu0
        %v1342 = vadd.f32 0.0, %v1341
        %v1343 = vpop.f32.mrf.mxu0
        %1344 = vdwg.mxu0
        %v1345 = vpack.c.bf16 %v1342, %v1342
        %s1346 = scalar_lea.vmem %s469, 16
        %v1347 = vld [vmem:[%s1346] sm:$0xff]
        %1348 = vrot.lane.b32.xlu0 %v1100, 32
        %v1349 = vpop.permute.xlu0 %1348
        %1350 = vrot.lane.b32.xlu0 %v1100, 64
        %v1351 = vpop.permute.xlu0 %1350
        %v1352 = vsel %vm1211, %v1349, 0
        %v1354 = vsel %vm1211, %v1351, 0
        %1356 = vmatpush.xpose.msra.mxu0 0.0
        %1357 = vmatpush.xpose.msra.mxu0 0.0
        %1358 = vmatpush.xpose.msra.mxu0 0.0
        %1359 = vmatpush.xpose.msra.mxu0 0.0
        %1360 = vmatpush.xpose.msra.mxu0 0.0
        %1361 = vmatpush.xpose.msra.mxu0 0.0
        %1362 = vmatpush.xpose.msra.mxu0 0.0
        %1363 = vmatpush.xpose.msra.mxu0 0.0
        %1364 = vmatpush.xpose.msra.mxu0 0.0
        %1365 = vmatpush.xpose.msra.mxu0 0.0
        %1366 = vmatpush.xpose.msra.mxu0 0.0
        %1367 = vmatpush.xpose.msra.mxu0 0.0
        %1368 = vmatpush.xpose.msra.mxu0 0.0
        %1369 = vmatpush.xpose.msra.mxu0 0.0
        %1370 = vmatpush.xpose.msra.mxu0 0.0
        %1371 = vmatpush.xpose.msra.mxu0 %v1354
        %1372 = vmatmul.f32.gmra.mxu0 %v1352
        %v1373 = vpop.f32.mrf.mxu0
        %v1374 = vadd.f32 %v1347, %v1373
        %1375 = vdwg.mxu0
        %s1376 = scalar_lea.vmem %s459, 16 [#allocation4]
        %1377 = vst.msk [vmem:[%s1376] sm:$0xff] %vm1236, %v1374
        %v1378 = vsel %vm1236, %v1374, -inf
        %1379 = vmax.xlane.f32.xlu0 %v1378
        %v1380 = vpop.xlane.xlu0 %1379
        %v1381 = vsub.f32 %v1374, %v1380
        %v1382 = vmul.f32 %v1381, 1.442695
        %v1383 = vpow.pop %v1382
        %v1384 = vsel %vm1236, %v1383, 0.0
        %1385 = vadd.xlane.f32.xlu0 %v1384
        %v1386 = vpop.xlane.xlu0 %1385
        %v1387 = vrcp.pop %v1386
        %v1388 = vmul.f32 %v1383, %v1387
        %v1389 = vpack.c.bf16 %v1388, %v1388
        %v1390 = vpack.c.bf16 %v1126, %v1126
        %v1392 = vsel %vm1236, %v1389, 0
        %v1395 = vsel %vm1259, %v1390, 0
        %1397 = vmatpush.bf16.msra.mxu0 0
        %1398 = vmatpush.bf16.msra.mxu0 0
        %1399 = vmatpush.bf16.msra.mxu0 0
        %1400 = vmatpush.bf16.msra.mxu0 0
        %1401 = vmatpush.bf16.msra.mxu0 0
        %1402 = vmatpush.bf16.msra.mxu0 0
        %1403 = vmatpush.bf16.msra.mxu0 0
        %1404 = vmatpush.bf16.msra.mxu0 %v1395
        %1405 = vmatmul.bf16.gmra.mxu0 %v1392
        %v1406 = vpop.f32.mrf.mxu0
        %v1407 = vadd.f32 0.0, %v1406
        %v1408 = vpop.f32.mrf.mxu0
        %1409 = vdwg.mxu0
        %v1410 = vpack.c.bf16 %v1407, %v1407
        %s1411 = scalar_lea.vmem %s469, 24
        %v1412 = vld [vmem:[%s1411] sm:$0xff]
        %1414 = vrot.lane.b32.xlu0 %v1126, 64
        %v1415 = vpop.permute.xlu0 %1414
        %1416 = vrot.lane.b32.xlu0 %v1126, 96
        %v1417 = vpop.permute.xlu0 %1416
        %v1418 = vsel %vm1211, %v1415, 0
        %v1420 = vsel %vm1211, %v1417, 0
        %1422 = vmatpush.xpose.msra.mxu0 0.0
        %1423 = vmatpush.xpose.msra.mxu0 0.0
        %1424 = vmatpush.xpose.msra.mxu0 0.0
        %1425 = vmatpush.xpose.msra.mxu0 0.0
        %1426 = vmatpush.xpose.msra.mxu0 0.0
        %1427 = vmatpush.xpose.msra.mxu0 0.0
        %1428 = vmatpush.xpose.msra.mxu0 0.0
        %1429 = vmatpush.xpose.msra.mxu0 0.0
        %1430 = vmatpush.xpose.msra.mxu0 0.0
        %1431 = vmatpush.xpose.msra.mxu0 0.0
        %1432 = vmatpush.xpose.msra.mxu0 0.0
        %1433 = vmatpush.xpose.msra.mxu0 0.0
        %1434 = vmatpush.xpose.msra.mxu0 0.0
        %1435 = vmatpush.xpose.msra.mxu0 0.0
        %1436 = vmatpush.xpose.msra.mxu0 0.0
        %1437 = vmatpush.xpose.msra.mxu0 %v1420
        %1438 = vmatmul.f32.gmra.mxu0 %v1418
        %v1439 = vpop.f32.mrf.mxu0
        %v1440 = vadd.f32 %v1412, %v1439
        %1441 = vdwg.mxu0
        %s1442 = scalar_lea.vmem %s459, 24 [#allocation4]
        %1443 = vst.msk [vmem:[%s1442] sm:$0xff] %vm1236, %v1440
        %v1444 = vsel %vm1236, %v1440, -inf
        %1445 = vmax.xlane.f32.xlu0 %v1444
        %v1446 = vpop.xlane.xlu0 %1445
        %v1447 = vsub.f32 %v1440, %v1446
        %v1448 = vmul.f32 %v1447, 1.442695
        %v1449 = vpow.pop %v1448
        %v1450 = vsel %vm1236, %v1449, 0.0
        %1451 = vadd.xlane.f32.xlu0 %v1450
        %v1452 = vpop.xlane.xlu0 %1451
        %v1453 = vrcp.pop %v1452
        %v1454 = vmul.f32 %v1449, %v1453
        %v1455 = vpack.c.bf16 %v1454, %v1454
        %v1457 = vunpack.c.l.b16 %v1390
        %v1458 = vpack.c.b16 %v1457, %v1457
        %1459 = vrot.lane.b32.xlu0 %v1458, 32
        %v1460 = vpop.permute.xlu0 %1459
        %v1462 = vsel %vm1236, %v1455, 0
        %v1465 = vsel %vm1259, %v1460, 0
        %1467 = vmatpush.bf16.msra.mxu0 0
        %1468 = vmatpush.bf16.msra.mxu0 0
        %1469 = vmatpush.bf16.msra.mxu0 0
        %1470 = vmatpush.bf16.msra.mxu0 0
        %1471 = vmatpush.bf16.msra.mxu0 0
        %1472 = vmatpush.bf16.msra.mxu0 0
        %1473 = vmatpush.bf16.msra.mxu0 0
        %1474 = vmatpush.bf16.msra.mxu0 %v1465
        %1475 = vmatmul.bf16.gmra.mxu0 %v1462
        %v1476 = vpop.f32.mrf.mxu0
        %v1477 = vadd.f32 0.0, %v1476
        %v1478 = vpop.f32.mrf.mxu0
        %1479 = vdwg.mxu0
        %v1480 = vpack.c.bf16 %v1477, %v1477
        %s1481 = scalar_lea.vmem %s469, 32
        %v1482 = vld [vmem:[%s1481] sm:$0xff]
        %1484 = vrot.lane.b32.xlu0 %v1152, 96
        %v1485 = vpop.permute.xlu0 %1484
        %v1486 = vsel %vm1211, %v1485, 0
        %v1488 = vsel %vm1211, %v1152, 0
        %1490 = vmatpush.xpose.msra.mxu0 0.0
        %1491 = vmatpush.xpose.msra.mxu0 0.0
        %1492 = vmatpush.xpose.msra.mxu0 0.0
        %1493 = vmatpush.xpose.msra.mxu0 0.0
        %1494 = vmatpush.xpose.msra.mxu0 0.0
        %1495 = vmatpush.xpose.msra.mxu0 0.0
        %1496 = vmatpush.xpose.msra.mxu0 0.0
        %1497 = vmatpush.xpose.msra.mxu0 0.0
        %1498 = vmatpush.xpose.msra.mxu0 0.0
        %1499 = vmatpush.xpose.msra.mxu0 0.0
        %1500 = vmatpush.xpose.msra.mxu0 0.0
        %1501 = vmatpush.xpose.msra.mxu0 0.0
        %1502 = vmatpush.xpose.msra.mxu0 0.0
        %1503 = vmatpush.xpose.msra.mxu0 0.0
        %1504 = vmatpush.xpose.msra.mxu0 0.0
        %1505 = vmatpush.xpose.msra.mxu0 %v1488
        %1506 = vmatmul.f32.gmra.mxu0 %v1486
        %v1507 = vpop.f32.mrf.mxu0
        %v1508 = vadd.f32 %v1482, %v1507
        %1509 = vdwg.mxu0
        %s1510 = scalar_lea.vmem %s459, 32 [#allocation4]
        %1511 = vst.msk [vmem:[%s1510] sm:$0xff] %vm1236, %v1508
        %v1512 = vsel %vm1236, %v1508, -inf
        %1513 = vmax.xlane.f32.xlu0 %v1512
        %v1514 = vpop.xlane.xlu0 %1513
        %v1515 = vsub.f32 %v1508, %v1514
        %v1516 = vmul.f32 %v1515, 1.442695
        %v1517 = vpow.pop %v1516
        %v1518 = vsel %vm1236, %v1517, 0.0
        %1519 = vadd.xlane.f32.xlu0 %v1518
        %v1520 = vpop.xlane.xlu0 %1519
        %v1521 = vrcp.pop %v1520
        %v1522 = vmul.f32 %v1517, %v1521
        %v1523 = vpack.c.bf16 %v1522, %v1522
        %v1524 = vpack.c.bf16 %v1152, %v1152
        %v1526 = vunpack.c.l.b16 %v1524
        %v1527 = vpack.c.b16 %v1526, %v1526
        %1528 = vrot.lane.b32.xlu0 %v1527, 64
        %v1529 = vpop.permute.xlu0 %1528
        %v1531 = vsel %vm1236, %v1523, 0
        %v1534 = vsel %vm1259, %v1529, 0
        %1536 = vmatpush.bf16.msra.mxu0 0
        %1537 = vmatpush.bf16.msra.mxu0 0
        %1538 = vmatpush.bf16.msra.mxu0 0
        %1539 = vmatpush.bf16.msra.mxu0 0
        %1540 = vmatpush.bf16.msra.mxu0 0
        %1541 = vmatpush.bf16.msra.mxu0 0
        %1542 = vmatpush.bf16.msra.mxu0 0
        %1543 = vmatpush.bf16.msra.mxu0 %v1534
        %1544 = vmatmul.bf16.gmra.mxu0 %v1531
        %v1545 = vpop.f32.mrf.mxu0
        %v1546 = vadd.f32 0.0, %v1545
        %v1547 = vpop.f32.mrf.mxu0
        %1548 = vdwg.mxu0
        %v1549 = vpack.c.bf16 %v1546, %v1546
        %s1550 = scalar_lea.vmem %s469, 40
        %v1551 = vld [vmem:[%s1550] sm:$0xff]
        %1552 = vrot.lane.b32.xlu0 %v1152, 32
        %v1553 = vpop.permute.xlu0 %1552
        %v1555 = vsel %vm1211, %v1178, 0
        %v1557 = vsel %vm1211, %v1553, 0
        %1559 = vmatpush.xpose.msra.mxu0 0.0
        %1560 = vmatpush.xpose.msra.mxu0 0.0
        %1561 = vmatpush.xpose.msra.mxu0 0.0
        %1562 = vmatpush.xpose.msra.mxu0 0.0
        %1563 = vmatpush.xpose.msra.mxu0 0.0
        %1564 = vmatpush.xpose.msra.mxu0 0.0
        %1565 = vmatpush.xpose.msra.mxu0 0.0
        %1566 = vmatpush.xpose.msra.mxu0 0.0
        %1567 = vmatpush.xpose.msra.mxu0 0.0
        %1568 = vmatpush.xpose.msra.mxu0 0.0
        %1569 = vmatpush.xpose.msra.mxu0 0.0
        %1570 = vmatpush.xpose.msra.mxu0 0.0
        %1571 = vmatpush.xpose.msra.mxu0 0.0
        %1572 = vmatpush.xpose.msra.mxu0 0.0
        %1573 = vmatpush.xpose.msra.mxu0 0.0
        %1574 = vmatpush.xpose.msra.mxu0 %v1557
        %1575 = vmatmul.f32.gmra.mxu0 %v1555
        %v1576 = vpop.f32.mrf.mxu0
        %v1577 = vadd.f32 %v1551, %v1576
        %1578 = vdwg.mxu0
        %s1579 = scalar_lea.vmem %s459, 40 [#allocation4]
        %1580 = vst.msk [vmem:[%s1579] sm:$0xff] %vm1236, %v1577
        %v1581 = vsel %vm1236, %v1577, -inf
        %1582 = vmax.xlane.f32.xlu0 %v1581
        %v1583 = vpop.xlane.xlu0 %1582
        %v1584 = vsub.f32 %v1577, %v1583
        %v1585 = vmul.f32 %v1584, 1.442695
        %v1586 = vpow.pop %v1585
        %v1587 = vsel %vm1236, %v1586, 0.0
        %1588 = vadd.xlane.f32.xlu0 %v1587
        %v1589 = vpop.xlane.xlu0 %1588
        %v1590 = vrcp.pop %v1589
        %v1591 = vmul.f32 %v1586, %v1590
        %v1592 = vpack.c.bf16 %v1591, %v1591
        %v1593 = vpack.c.bf16 %v1178, %v1178
        %v1595 = vunpack.c.l.b16 %v1593
        %v1596 = vpack.c.b16 %v1595, %v1595
        %1597 = vrot.lane.b32.xlu0 %v1596, 96
        %v1598 = vpop.permute.xlu0 %1597
        %v1600 = vsel %vm1236, %v1592, 0
        %v1603 = vsel %vm1259, %v1598, 0
        %1605 = vmatpush.bf16.msra.mxu0 0
        %1606 = vmatpush.bf16.msra.mxu0 0
        %1607 = vmatpush.bf16.msra.mxu0 0
        %1608 = vmatpush.bf16.msra.mxu0 0
        %1609 = vmatpush.bf16.msra.mxu0 0
        %1610 = vmatpush.bf16.msra.mxu0 0
        %1611 = vmatpush.bf16.msra.mxu0 0
        %1612 = vmatpush.bf16.msra.mxu0 %v1603
        %1613 = vmatmul.bf16.gmra.mxu0 %v1600
        %v1614 = vpop.f32.mrf.mxu0
        %v1615 = vadd.f32 0.0, %v1614
        %v1616 = vpop.f32.mrf.mxu0
        %1617 = vdwg.mxu0
        %v1618 = vpack.c.bf16 %v1615, %v1615
        %s1619 = scalar_lea.vmem %s469, 48
        %v1620 = vld [vmem:[%s1619] sm:$0xff]
        %1621 = vrot.lane.b32.xlu0 %v1178, 32
        %v1622 = vpop.permute.xlu0 %1621
        %1623 = vrot.lane.b32.xlu0 %v1178, 64
        %v1624 = vpop.permute.xlu0 %1623
        %v1625 = vsel %vm1211, %v1622, 0
        %v1627 = vsel %vm1211, %v1624, 0
        %1629 = vmatpush.xpose.msra.mxu0 0.0
        %1630 = vmatpush.xpose.msra.mxu0 0.0
        %1631 = vmatpush.xpose.msra.mxu0 0.0
        %1632 = vmatpush.xpose.msra.mxu0 0.0
        %1633 = vmatpush.xpose.msra.mxu0 0.0
        %1634 = vmatpush.xpose.msra.mxu0 0.0
        %1635 = vmatpush.xpose.msra.mxu0 0.0
        %1636 = vmatpush.xpose.msra.mxu0 0.0
        %1637 = vmatpush.xpose.msra.mxu0 0.0
        %1638 = vmatpush.xpose.msra.mxu0 0.0
        %1639 = vmatpush.xpose.msra.mxu0 0.0
        %1640 = vmatpush.xpose.msra.mxu0 0.0
        %1641 = vmatpush.xpose.msra.mxu0 0.0
        %1642 = vmatpush.xpose.msra.mxu0 0.0
        %1643 = vmatpush.xpose.msra.mxu0 0.0
        %1644 = vmatpush.xpose.msra.mxu0 %v1627
        %1645 = vmatmul.f32.gmra.mxu0 %v1625
        %v1646 = vpop.f32.mrf.mxu0
        %v1647 = vadd.f32 %v1620, %v1646
        %1648 = vdwg.mxu0
        %s1649 = scalar_lea.vmem %s459, 48 [#allocation4]
        %1650 = vst.msk [vmem:[%s1649] sm:$0xff] %vm1236, %v1647
        %v1651 = vsel %vm1236, %v1647, -inf
        %1652 = vmax.xlane.f32.xlu0 %v1651
        %v1653 = vpop.xlane.xlu0 %1652
        %v1654 = vsub.f32 %v1647, %v1653
        %v1655 = vmul.f32 %v1654, 1.442695
        %v1656 = vpow.pop %v1655
        %v1657 = vsel %vm1236, %v1656, 0.0
        %1658 = vadd.xlane.f32.xlu0 %v1657
        %v1659 = vpop.xlane.xlu0 %1658
        %v1660 = vrcp.pop %v1659
        %v1661 = vmul.f32 %v1656, %v1660
        %v1662 = vpack.c.bf16 %v1661, %v1661
        %v1663 = vpack.c.bf16 %v1204, %v1204
        %v1665 = vsel %vm1236, %v1662, 0
        %v1668 = vsel %vm1259, %v1663, 0
        %1670 = vmatpush.bf16.msra.mxu0 0
        %1671 = vmatpush.bf16.msra.mxu0 0
        %1672 = vmatpush.bf16.msra.mxu0 0
        %1673 = vmatpush.bf16.msra.mxu0 0
        %1674 = vmatpush.bf16.msra.mxu0 0
        %1675 = vmatpush.bf16.msra.mxu0 0
        %1676 = vmatpush.bf16.msra.mxu0 0
        %1677 = vmatpush.bf16.msra.mxu0 %v1668
        %1678 = vmatmul.bf16.gmra.mxu0 %v1665
        %v1679 = vpop.f32.mrf.mxu0
        %v1680 = vadd.f32 0.0, %v1679
        %v1681 = vpop.f32.mrf.mxu0
        %1682 = vdwg.mxu0
        %v1683 = vpack.c.bf16 %v1680, %v1680
        %s1684 = scalar_lea.vmem %s469, 56
        %v1685 = vld [vmem:[%s1684] sm:$0xff]
        %1687 = vrot.lane.b32.xlu0 %v1204, 64
        %v1688 = vpop.permute.xlu0 %1687
        %1689 = vrot.lane.b32.xlu0 %v1204, 96
        %v1690 = vpop.permute.xlu0 %1689
        %v1691 = vsel %vm1211, %v1688, 0
        %v1693 = vsel %vm1211, %v1690, 0
        %1695 = vmatpush.xpose.msra.mxu0 0.0
        %1696 = vmatpush.xpose.msra.mxu0 0.0
        %1697 = vmatpush.xpose.msra.mxu0 0.0
        %1698 = vmatpush.xpose.msra.mxu0 0.0
        %1699 = vmatpush.xpose.msra.mxu0 0.0
        %1700 = vmatpush.xpose.msra.mxu0 0.0
        %1701 = vmatpush.xpose.msra.mxu0 0.0
        %1702 = vmatpush.xpose.msra.mxu0 0.0
        %1703 = vmatpush.xpose.msra.mxu0 0.0
        %1704 = vmatpush.xpose.msra.mxu0 0.0
        %1705 = vmatpush.xpose.msra.mxu0 0.0
        %1706 = vmatpush.xpose.msra.mxu0 0.0
        %1707 = vmatpush.xpose.msra.mxu0 0.0
        %1708 = vmatpush.xpose.msra.mxu0 0.0
        %1709 = vmatpush.xpose.msra.mxu0 0.0
        %1710 = vmatpush.xpose.msra.mxu0 %v1693
        %1711 = vmatmul.f32.gmra.mxu0 %v1691
        %v1712 = vpop.f32.mrf.mxu0
        %v1713 = vadd.f32 %v1685, %v1712
        %1714 = vdwg.mxu0
        %s1715 = scalar_lea.vmem %s459, 56 [#allocation4]
        %1716 = vst.msk [vmem:[%s1715] sm:$0xff] %vm1236, %v1713
        %v1717 = vsel %vm1236, %v1713, -inf
        %1718 = vmax.xlane.f32.xlu0 %v1717
        %v1719 = vpop.xlane.xlu0 %1718
        %v1720 = vsub.f32 %v1713, %v1719
        %v1721 = vmul.f32 %v1720, 1.442695
        %v1722 = vpow.pop %v1721
        %v1723 = vsel %vm1236, %v1722, 0.0
        %1724 = vadd.xlane.f32.xlu0 %v1723
        %v1725 = vpop.xlane.xlu0 %1724
        %v1726 = vrcp.pop %v1725
        %v1727 = vmul.f32 %v1722, %v1726
        %v1728 = vpack.c.bf16 %v1727, %v1727
        %v1730 = vunpack.c.l.b16 %v1663
        %v1731 = vpack.c.b16 %v1730, %v1730
        %1732 = vrot.lane.b32.xlu0 %v1731, 32
        %v1733 = vpop.permute.xlu0 %1732
        %v1735 = vsel %vm1236, %v1728, 0
        %v1738 = vsel %vm1259, %v1733, 0
        %1740 = vmatpush.bf16.msra.mxu0 0
        %1741 = vmatpush.bf16.msra.mxu0 0
        %1742 = vmatpush.bf16.msra.mxu0 0
        %1743 = vmatpush.bf16.msra.mxu0 0
        %1744 = vmatpush.bf16.msra.mxu0 0
        %1745 = vmatpush.bf16.msra.mxu0 0
        %1746 = vmatpush.bf16.msra.mxu0 0
        %1747 = vmatpush.bf16.msra.mxu0 %v1738
        %1748 = vmatmul.bf16.gmra.mxu0 %v1735
        %v1749 = vpop.f32.mrf.mxu0
        %v1750 = vadd.f32 0.0, %v1749
        %v1751 = vpop.f32.mrf.mxu0
        %1752 = vdwg.mxu0
        %v1753 = vpack.c.bf16 %v1750, %v1750
        %v1755 = vunpack.c.l.b16 %v1345
        %v1756 = vpack.c.b16 %v1755, %v1755
        %1757 = vrot.lane.b32.xlu0 %v1756, 32
        %v1758 = vpop.permute.xlu0 %1757
        %v1760 = vunpack.c.l.b16 %v1410
        %v1761 = vpack.c.b16 %v1760, %v1760
        %1762 = vrot.lane.b32.xlu0 %v1761, 64
        %v1763 = vpop.permute.xlu0 %1762
        %v1765 = vunpack.c.l.b16 %v1480
        %v1766 = vpack.c.b16 %v1765, %v1765
        %1767 = vrot.lane.b32.xlu0 %v1766, 96
        %v1768 = vpop.permute.xlu0 %1767
        %v1770 = vunpack.c.l.b16 %v1618
        %v1771 = vpack.c.b16 %v1770, %v1770
        %1772 = vrot.lane.b32.xlu0 %v1771, 32
        %v1773 = vpop.permute.xlu0 %1772
        %v1775 = vunpack.c.l.b16 %v1683
        %v1776 = vpack.c.b16 %v1775, %v1775
        %1777 = vrot.lane.b32.xlu0 %v1776, 64
        %v1778 = vpop.permute.xlu0 %1777
        %v1780 = vunpack.c.l.b16 %v1753
        %v1781 = vpack.c.b16 %v1780, %v1780
        %1782 = vrot.lane.b32.xlu0 %v1781, 96
        %v1783 = vpop.permute.xlu0 %1782
        %v1786 = vsel %vm1211, %v1276, %v1758
        %vm1787 = vcmask 523264
        %v1789 = vsel %vm1787, %v1786, %v1763
        %vm1790 = vcmask 785408
        %v1792 = vsel %vm1790, %v1789, %v1768
        %v1796 = vsel %vm1211, %v1549, %v1773
        %v1798 = vsel %vm1787, %v1796, %v1778
        %v1800 = vsel %vm1790, %v1798, %v1783
        %v1802 = vld [vmem:[%s3] sm:$0xff]
        %v1803 = vld [vmem:[%s3 + $0x8] sm:$0xff]
        %v1804 = vld [vmem:[%s3 + $0x10] sm:$0xff]
        %v1805 = vld [vmem:[%s3 + $0x18] sm:$0xff]
        %v1806 = vld [vmem:[%s3 + $0x20] sm:$0xff]
        %v1807 = vld [vmem:[%s3 + $0x28] sm:$0xff]
        %v1808 = vld [vmem:[%s3 + $0x30] sm:$0xff]
        %v1809 = vld [vmem:[%s3 + $0x38] sm:$0xff]
        %v1810 = vld [vmem:[%s3 + $0x40] sm:$0xff]
        %v1811 = vld [vmem:[%s3 + $0x48] sm:$0xff]
        %v1812 = vld [vmem:[%s3 + $0x50] sm:$0xff]
        %v1813 = vld [vmem:[%s3 + $0x58] sm:$0xff]
        %v1814 = vld [vmem:[%s3 + $0x60] sm:$0xff]
        %v1815 = vld [vmem:[%s3 + $0x68] sm:$0xff]
        %v1816 = vld [vmem:[%s3 + $0x70] sm:$0xff]
        %v1817 = vld [vmem:[%s3 + $0x78] sm:$0xff]
        %v1818 = vld [vmem:[%s3 + $0x80] sm:$0xff]
        %v1819 = vld [vmem:[%s3 + $0x88] sm:$0xff]
        %v1820 = vld [vmem:[%s3 + $0x90] sm:$0xff]
        %v1821 = vld [vmem:[%s3 + $0x98] sm:$0xff]
        %v1822 = vld [vmem:[%s3 + $0xa0] sm:$0xff]
        %v1823 = vld [vmem:[%s3 + $0xa8] sm:$0xff]
        %v1824 = vld [vmem:[%s3 + $0xb0] sm:$0xff]
        %v1825 = vld [vmem:[%s3 + $0xb8] sm:$0xff]
        %v1826 = vld [vmem:[%s3 + $0xc0] sm:$0xff]
        %v1827 = vld [vmem:[%s3 + $0xc8] sm:$0xff]
        %v1828 = vld [vmem:[%s3 + $0xd0] sm:$0xff]
        %v1829 = vld [vmem:[%s3 + $0xd8] sm:$0xff]
        %v1830 = vld [vmem:[%s3 + $0xe0] sm:$0xff]
        %v1831 = vld [vmem:[%s3 + $0xe8] sm:$0xff]
        %v1832 = vld [vmem:[%s3 + $0xf0] sm:$0xff]
        %v1833 = vld [vmem:[%s3 + $0xf8] sm:$0xff]
        %v1866 = vunpack.c.l.b16 %v1802
        %v1867 = vunpack.c.h.b16 %v1802
        %v1868 = vunpack.c.l.b16 %v1803
        %v1869 = vunpack.c.h.b16 %v1803
        %v1870 = vunpack.c.l.b16 %v1804
        %v1871 = vunpack.c.h.b16 %v1804
        %v1872 = vunpack.c.l.b16 %v1805
        %v1873 = vunpack.c.h.b16 %v1805
        %v1874 = vunpack.c.l.b16 %v1806
        %v1875 = vunpack.c.h.b16 %v1806
        %v1876 = vunpack.c.l.b16 %v1807
        %v1877 = vunpack.c.h.b16 %v1807
        %v1878 = vunpack.c.l.b16 %v1808
        %v1879 = vunpack.c.h.b16 %v1808
        %v1880 = vunpack.c.l.b16 %v1809
        %v1881 = vunpack.c.h.b16 %v1809
        %v1882 = vunpack.c.l.b16 %v1810
        %v1883 = vunpack.c.h.b16 %v1810
        %v1884 = vunpack.c.l.b16 %v1811
        %v1885 = vunpack.c.h.b16 %v1811
        %v1886 = vunpack.c.l.b16 %v1812
        %v1887 = vunpack.c.h.b16 %v1812
        %v1888 = vunpack.c.l.b16 %v1813
        %v1889 = vunpack.c.h.b16 %v1813
        %v1890 = vunpack.c.l.b16 %v1814
        %v1891 = vunpack.c.h.b16 %v1814
        %v1892 = vunpack.c.l.b16 %v1815
        %v1893 = vunpack.c.h.b16 %v1815
        %v1894 = vunpack.c.l.b16 %v1816
        %v1895 = vunpack.c.h.b16 %v1816
        %v1896 = vunpack.c.l.b16 %v1817
        %v1897 = vunpack.c.h.b16 %v1817
        %v1898 = vunpack.c.l.b16 %v1818
        %v1899 = vunpack.c.h.b16 %v1818
        %v1900 = vunpack.c.l.b16 %v1819
        %v1901 = vunpack.c.h.b16 %v1819
        %v1902 = vunpack.c.l.b16 %v1820
        %v1903 = vunpack.c.h.b16 %v1820
        %v1904 = vunpack.c.l.b16 %v1821
        %v1905 = vunpack.c.h.b16 %v1821
        %v1906 = vunpack.c.l.b16 %v1822
        %v1907 = vunpack.c.h.b16 %v1822
        %v1908 = vunpack.c.l.b16 %v1823
        %v1909 = vunpack.c.h.b16 %v1823
        %v1910 = vunpack.c.l.b16 %v1824
        %v1911 = vunpack.c.h.b16 %v1824
        %v1912 = vunpack.c.l.b16 %v1825
        %v1913 = vunpack.c.h.b16 %v1825
        %v1914 = vunpack.c.l.b16 %v1826
        %v1915 = vunpack.c.h.b16 %v1826
        %v1916 = vunpack.c.l.b16 %v1827
        %v1917 = vunpack.c.h.b16 %v1827
        %v1918 = vunpack.c.l.b16 %v1828
        %v1919 = vunpack.c.h.b16 %v1828
        %v1920 = vunpack.c.l.b16 %v1829
        %v1921 = vunpack.c.h.b16 %v1829
        %v1922 = vunpack.c.l.b16 %v1830
        %v1923 = vunpack.c.h.b16 %v1830
        %v1924 = vunpack.c.l.b16 %v1831
        %v1925 = vunpack.c.h.b16 %v1831
        %v1926 = vunpack.c.l.b16 %v1832
        %v1927 = vunpack.c.h.b16 %v1832
        %v1928 = vunpack.c.l.b16 %v1833
        %v1929 = vunpack.c.h.b16 %v1833
        %v1930 = vpack.c.b16 %v1868, %v1866
        %v1931 = vpack.c.b16 %v1869, %v1867
        %v1932 = vpack.c.b16 %v1872, %v1870
        %v1933 = vpack.c.b16 %v1873, %v1871
        %v1934 = vpack.c.b16 %v1876, %v1874
        %v1935 = vpack.c.b16 %v1877, %v1875
        %v1936 = vpack.c.b16 %v1880, %v1878
        %v1937 = vpack.c.b16 %v1881, %v1879
        %v1938 = vpack.c.b16 %v1884, %v1882
        %v1939 = vpack.c.b16 %v1885, %v1883
        %v1940 = vpack.c.b16 %v1888, %v1886
        %v1941 = vpack.c.b16 %v1889, %v1887
        %v1942 = vpack.c.b16 %v1892, %v1890
        %v1943 = vpack.c.b16 %v1893, %v1891
        %v1944 = vpack.c.b16 %v1896, %v1894
        %v1945 = vpack.c.b16 %v1897, %v1895
        %v1946 = vpack.c.b16 %v1900, %v1898
        %v1947 = vpack.c.b16 %v1901, %v1899
        %v1948 = vpack.c.b16 %v1904, %v1902
        %v1949 = vpack.c.b16 %v1905, %v1903
        %v1950 = vpack.c.b16 %v1908, %v1906
        %v1951 = vpack.c.b16 %v1909, %v1907
        %v1952 = vpack.c.b16 %v1912, %v1910
        %v1953 = vpack.c.b16 %v1913, %v1911
        %v1954 = vpack.c.b16 %v1916, %v1914
        %v1955 = vpack.c.b16 %v1917, %v1915
        %v1956 = vpack.c.b16 %v1920, %v1918
        %v1957 = vpack.c.b16 %v1921, %v1919
        %v1958 = vpack.c.b16 %v1924, %v1922
        %v1959 = vpack.c.b16 %v1925, %v1923
        %v1960 = vpack.c.b16 %v1928, %v1926
        %v1961 = vpack.c.b16 %v1929, %v1927
        %1994 = vmatpush.bf16.msra.mxu0 %v1944
        %1995 = vmatpush.bf16.msra.mxu0 %v1942
        %1996 = vmatpush.bf16.msra.mxu0 %v1940
        %1997 = vmatpush.bf16.msra.mxu0 %v1938
        %1998 = vmatpush.bf16.msra.mxu0 %v1936
        %1999 = vmatpush.bf16.msra.mxu0 %v1934
        %2000 = vmatpush.bf16.msra.mxu0 %v1932
        %2001 = vmatpush.bf16.msra.mxu0 %v1930
        %2002 = vmatmul.bf16.gmra.mxu0 %v1792
        %v2003 = vpop.f32.mrf.mxu0
        %v2004 = vadd.f32 0.0, %v2003
        %v2005 = vpop.f32.mrf.mxu0
        %2006 = vdwg.mxu0
        %2007 = vmatpush.bf16.msra.mxu0 %v1960
        %2008 = vmatpush.bf16.msra.mxu0 %v1958
        %2009 = vmatpush.bf16.msra.mxu0 %v1956
        %2010 = vmatpush.bf16.msra.mxu0 %v1954
        %2011 = vmatpush.bf16.msra.mxu0 %v1952
        %2012 = vmatpush.bf16.msra.mxu0 %v1950
        %2013 = vmatpush.bf16.msra.mxu0 %v1948
        %2014 = vmatpush.bf16.msra.mxu0 %v1946
        %2015 = vmatmul.bf16.gmra.mxu0 %v1800
        %v2016 = vpop.f32.mrf.mxu0
        %v2017 = vadd.f32 %v2004, %v2016
        %v2018 = vpop.f32.mrf.mxu0
        %2019 = vdwg.mxu0
        %2020 = vmatpush.bf16.msra.mxu0 %v1945
        %2021 = vmatpush.bf16.msra.mxu0 %v1943
        %2022 = vmatpush.bf16.msra.mxu0 %v1941
        %2023 = vmatpush.bf16.msra.mxu0 %v1939
        %2024 = vmatpush.bf16.msra.mxu0 %v1937
        %2025 = vmatpush.bf16.msra.mxu0 %v1935
        %2026 = vmatpush.bf16.msra.mxu0 %v1933
        %2027 = vmatpush.bf16.msra.mxu0 %v1931
        %2028 = vmatmul.bf16.gmra.mxu0 %v1792
        %v2029 = vpop.f32.mrf.mxu0
        %v2030 = vadd.f32 0.0, %v2029
        %v2031 = vpop.f32.mrf.mxu0
        %2032 = vdwg.mxu0
        %2033 = vmatpush.bf16.msra.mxu0 %v1961
        %2034 = vmatpush.bf16.msra.mxu0 %v1959
        %2035 = vmatpush.bf16.msra.mxu0 %v1957
        %2036 = vmatpush.bf16.msra.mxu0 %v1955
        %2037 = vmatpush.bf16.msra.mxu0 %v1953
        %2038 = vmatpush.bf16.msra.mxu0 %v1951
        %2039 = vmatpush.bf16.msra.mxu0 %v1949
        %2040 = vmatpush.bf16.msra.mxu0 %v1947
        %2041 = vmatmul.bf16.gmra.mxu0 %v1800
        %v2042 = vpop.f32.mrf.mxu0
        %v2043 = vadd.f32 %v2030, %v2042
        %v2044 = vpop.f32.mrf.mxu0
        %2045 = vdwg.mxu0
        %v2046 = vadd.f32 %v471, %v2017
        %v2047 = vadd.f32 %v472, %v2043
        %v2048 = vld [vmem:[%s4] sm:$0x3]
        %v2049 = vld [vmem:[%s5] sm:$0x3]
        %v2050 = vadd.f32 %v2046, %v2047
        %2051 = vadd.xlane.f32.xlu0 %v2050
        %v2052 = vpop.xlane.xlu0 %2051
        %v2053 = vrcp.pop 256.0
        %v2054 = vmul.f32 256.0, %v2053
        %v2055 = vsub.f32 1.0, %v2054
        %v2056 = vmul.f32 %v2053, %v2055
        %v2057 = vadd.f32 %v2053, %v2056
        %vm2058 = vweird.f32 %v2053
        %v2059 = vsel %vm2058, %v2053, %v2057
        %v2060 = vmul.f32 %v2052, %v2059
        %v2061 = vsub.f32 %v2046, %v2060
        %v2062 = vsub.f32 %v2047, %v2060
        %v2063 = vmul.f32 %v2061, %v2061
        %v2064 = vmul.f32 %v2062, %v2062
        %v2065 = vadd.f32 %v2063, %v2064
        %2066 = vadd.xlane.f32.xlu0 %v2065
        %v2067 = vpop.xlane.xlu0 %2066
        %v2068 = vmul.f32 %v2067, %v2059
        %v2069 = vadd.f32 %v2068, 1e-05
        %v2070 = vrsqrt.pop %v2069
        %v2071 = vmul.f32 %v2070, %v2069
        %v2072 = vmul.f32 %v2071, %v2070
        %v2073 = vmul.f32 0.5, %v2072
        %v2074 = vsub.f32 1.5, %v2073
        %v2075 = vmul.f32 %v2070, %v2074
        %vm2076 = vweird.f32 %v2069
        %vm2077 = vweird.f32 %v2070
        %vm2078 = vmor %vm2076, %vm2077
        %v2079 = vsel %vm2078, %v2070, %v2075
        %v2080 = vmul.f32 %v2061, %v2079
        %v2081 = vmul.f32 %v2062, %v2079
        %v2083 = vperm.slane %v2048, 0
        %v2084 = vperm.slane %v2048, 1
        %v2087 = vmul.f32 %v2080, %v2083
        %v2088 = vmul.f32 %v2081, %v2084
        %v2090 = vperm.slane %v2049, 0
        %v2091 = vperm.slane %v2049, 1
        %v2094 = vadd.f32 %v2087, %v2090
        %v2095 = vadd.f32 %v2088, %v2091
        %v2096 = vpack.c.bf16 %v2094, %v2094
        %v2097 = vpack.c.bf16 %v2095, %v2095
        %v2098 = vld [vmem:[%s6] sm:$0xff]
        %v2099 = vld [vmem:[%s6 + $0x8] sm:$0xff]
        %v2100 = vld [vmem:[%s6 + $0x10] sm:$0xff]
        %v2101 = vld [vmem:[%s6 + $0x18] sm:$0xff]
        %v2102 = vld [vmem:[%s6 + $0x20] sm:$0xff]
        %v2103 = vld [vmem:[%s6 + $0x28] sm:$0xff]
        %v2104 = vld [vmem:[%s6 + $0x30] sm:$0xff]
        %v2105 = vld [vmem:[%s6 + $0x38] sm:$0xff]
        %v2106 = vld [vmem:[%s6 + $0x40] sm:$0xff]
        %v2107 = vld [vmem:[%s6 + $0x48] sm:$0xff]
        %v2108 = vld [vmem:[%s6 + $0x50] sm:$0xff]
        %v2109 = vld [vmem:[%s6 + $0x58] sm:$0xff]
        %v2110 = vld [vmem:[%s6 + $0x60] sm:$0xff]
        %v2111 = vld [vmem:[%s6 + $0x68] sm:$0xff]
        %v2112 = vld [vmem:[%s6 + $0x70] sm:$0xff]
        %v2113 = vld [vmem:[%s6 + $0x78] sm:$0xff]
        %v2114 = vld [vmem:[%s6 + $0x80] sm:$0xff]
        %v2115 = vld [vmem:[%s6 + $0x88] sm:$0xff]
        %v2116 = vld [vmem:[%s6 + $0x90] sm:$0xff]
        %v2117 = vld [vmem:[%s6 + $0x98] sm:$0xff]
        %v2118 = vld [vmem:[%s6 + $0xa0] sm:$0xff]
        %v2119 = vld [vmem:[%s6 + $0xa8] sm:$0xff]
        %v2120 = vld [vmem:[%s6 + $0xb0] sm:$0xff]
        %v2121 = vld [vmem:[%s6 + $0xb8] sm:$0xff]
        %v2122 = vld [vmem:[%s6 + $0xc0] sm:$0xff]
        %v2123 = vld [vmem:[%s6 + $0xc8] sm:$0xff]
        %v2124 = vld [vmem:[%s6 + $0xd0] sm:$0xff]
        %v2125 = vld [vmem:[%s6 + $0xd8] sm:$0xff]
        %v2126 = vld [vmem:[%s6 + $0xe0] sm:$0xff]
        %v2127 = vld [vmem:[%s6 + $0xe8] sm:$0xff]
        %v2128 = vld [vmem:[%s6 + $0xf0] sm:$0xff]
        %v2129 = vld [vmem:[%s6 + $0xf8] sm:$0xff]
        %v2130 = vld [vmem:[%s6 + $0x100] sm:$0xff]
        %v2131 = vld [vmem:[%s6 + $0x108] sm:$0xff]
        %v2132 = vld [vmem:[%s6 + $0x110] sm:$0xff]
        %v2133 = vld [vmem:[%s6 + $0x118] sm:$0xff]
        %v2134 = vld [vmem:[%s6 + $0x120] sm:$0xff]
        %v2135 = vld [vmem:[%s6 + $0x128] sm:$0xff]
        %v2136 = vld [vmem:[%s6 + $0x130] sm:$0xff]
        %v2137 = vld [vmem:[%s6 + $0x138] sm:$0xff]
        %v2138 = vld [vmem:[%s6 + $0x140] sm:$0xff]
        %v2139 = vld [vmem:[%s6 + $0x148] sm:$0xff]
        %v2140 = vld [vmem:[%s6 + $0x150] sm:$0xff]
        %v2141 = vld [vmem:[%s6 + $0x158] sm:$0xff]
        %v2142 = vld [vmem:[%s6 + $0x160] sm:$0xff]
        %v2143 = vld [vmem:[%s6 + $0x168] sm:$0xff]
        %v2144 = vld [vmem:[%s6 + $0x170] sm:$0xff]
        %v2145 = vld [vmem:[%s6 + $0x178] sm:$0xff]
        %v2146 = vld [vmem:[%s6 + $0x180] sm:$0xff]
        %v2147 = vld [vmem:[%s6 + $0x188] sm:$0xff]
        %v2148 = vld [vmem:[%s6 + $0x190] sm:$0xff]
        %v2149 = vld [vmem:[%s6 + $0x198] sm:$0xff]
        %v2150 = vld [vmem:[%s6 + $0x1a0] sm:$0xff]
        %v2151 = vld [vmem:[%s6 + $0x1a8] sm:$0xff]
        %v2152 = vld [vmem:[%s6 + $0x1b0] sm:$0xff]
        %v2153 = vld [vmem:[%s6 + $0x1b8] sm:$0xff]
        %v2154 = vld [vmem:[%s6 + $0x1c0] sm:$0xff]
        %v2155 = vld [vmem:[%s6 + $0x1c8] sm:$0xff]
        %v2156 = vld [vmem:[%s6 + $0x1d0] sm:$0xff]
        %v2157 = vld [vmem:[%s6 + $0x1d8] sm:$0xff]
        %v2158 = vld [vmem:[%s6 + $0x1e0] sm:$0xff]
        %v2159 = vld [vmem:[%s6 + $0x1e8] sm:$0xff]
        %v2160 = vld [vmem:[%s6 + $0x1f0] sm:$0xff]
        %v2161 = vld [vmem:[%s6 + $0x1f8] sm:$0xff]
        %v2162 = vld [vmem:[%s6 + $0x200] sm:$0xff]
        %v2163 = vld [vmem:[%s6 + $0x208] sm:$0xff]
        %v2164 = vld [vmem:[%s6 + $0x210] sm:$0xff]
        %v2165 = vld [vmem:[%s6 + $0x218] sm:$0xff]
        %v2166 = vld [vmem:[%s6 + $0x220] sm:$0xff]
        %v2167 = vld [vmem:[%s6 + $0x228] sm:$0xff]
        %v2168 = vld [vmem:[%s6 + $0x230] sm:$0xff]
        %v2169 = vld [vmem:[%s6 + $0x238] sm:$0xff]
        %v2170 = vld [vmem:[%s6 + $0x240] sm:$0xff]
        %v2171 = vld [vmem:[%s6 + $0x248] sm:$0xff]
        %v2172 = vld [vmem:[%s6 + $0x250] sm:$0xff]
        %v2173 = vld [vmem:[%s6 + $0x258] sm:$0xff]
        %v2174 = vld [vmem:[%s6 + $0x260] sm:$0xff]
        %v2175 = vld [vmem:[%s6 + $0x268] sm:$0xff]
        %v2176 = vld [vmem:[%s6 + $0x270] sm:$0xff]
        %v2177 = vld [vmem:[%s6 + $0x278] sm:$0xff]
        %v2178 = vld [vmem:[%s6 + $0x280] sm:$0xff]
        %v2179 = vld [vmem:[%s6 + $0x288] sm:$0xff]
        %v2180 = vld [vmem:[%s6 + $0x290] sm:$0xff]
        %v2181 = vld [vmem:[%s6 + $0x298] sm:$0xff]
        %v2182 = vld [vmem:[%s6 + $0x2a0] sm:$0xff]
        %v2183 = vld [vmem:[%s6 + $0x2a8] sm:$0xff]
        %v2184 = vld [vmem:[%s6 + $0x2b0] sm:$0xff]
        %v2185 = vld [vmem:[%s6 + $0x2b8] sm:$0xff]
        %v2186 = vld [vmem:[%s6 + $0x2c0] sm:$0xff]
        %v2187 = vld [vmem:[%s6 + $0x2c8] sm:$0xff]
        %v2188 = vld [vmem:[%s6 + $0x2d0] sm:$0xff]
        %v2189 = vld [vmem:[%s6 + $0x2d8] sm:$0xff]
        %v2190 = vld [vmem:[%s6 + $0x2e0] sm:$0xff]
        %v2191 = vld [vmem:[%s6 + $0x2e8] sm:$0xff]
        %v2192 = vld [vmem:[%s6 + $0x2f0] sm:$0xff]
        %v2193 = vld [vmem:[%s6 + $0x2f8] sm:$0xff]
        %v2194 = vld [vmem:[%s6 + $0x300] sm:$0xff]
        %v2195 = vld [vmem:[%s6 + $0x308] sm:$0xff]
        %v2196 = vld [vmem:[%s6 + $0x310] sm:$0xff]
        %v2197 = vld [vmem:[%s6 + $0x318] sm:$0xff]
        %v2198 = vld [vmem:[%s6 + $0x320] sm:$0xff]
        %v2199 = vld [vmem:[%s6 + $0x328] sm:$0xff]
        %v2200 = vld [vmem:[%s6 + $0x330] sm:$0xff]
        %v2201 = vld [vmem:[%s6 + $0x338] sm:$0xff]
        %v2202 = vld [vmem:[%s6 + $0x340] sm:$0xff]
        %v2203 = vld [vmem:[%s6 + $0x348] sm:$0xff]
        %v2204 = vld [vmem:[%s6 + $0x350] sm:$0xff]
        %v2205 = vld [vmem:[%s6 + $0x358] sm:$0xff]
        %v2206 = vld [vmem:[%s6 + $0x360] sm:$0xff]
        %v2207 = vld [vmem:[%s6 + $0x368] sm:$0xff]
        %v2208 = vld [vmem:[%s6 + $0x370] sm:$0xff]
        %v2209 = vld [vmem:[%s6 + $0x378] sm:$0xff]
        %v2210 = vld [vmem:[%s6 + $0x380] sm:$0xff]
        %v2211 = vld [vmem:[%s6 + $0x388] sm:$0xff]
        %v2212 = vld [vmem:[%s6 + $0x390] sm:$0xff]
        %v2213 = vld [vmem:[%s6 + $0x398] sm:$0xff]
        %v2214 = vld [vmem:[%s6 + $0x3a0] sm:$0xff]
        %v2215 = vld [vmem:[%s6 + $0x3a8] sm:$0xff]
        %v2216 = vld [vmem:[%s6 + $0x3b0] sm:$0xff]
        %v2217 = vld [vmem:[%s6 + $0x3b8] sm:$0xff]
        %v2218 = vld [vmem:[%s6 + $0x3c0] sm:$0xff]
        %v2219 = vld [vmem:[%s6 + $0x3c8] sm:$0xff]
        %v2220 = vld [vmem:[%s6 + $0x3d0] sm:$0xff]
        %v2221 = vld [vmem:[%s6 + $0x3d8] sm:$0xff]
        %v2222 = vld [vmem:[%s6 + $0x3e0] sm:$0xff]
        %v2223 = vld [vmem:[%s6 + $0x3e8] sm:$0xff]
        %v2224 = vld [vmem:[%s6 + $0x3f0] sm:$0xff]
        %v2225 = vld [vmem:[%s6 + $0x3f8] sm:$0xff]
        %v2226 = vld [vmem:[%s7] sm:$0xff]
        %v2228 = vperm.slane %v2226, 0
        %v2229 = vperm.slane %v2226, 1
        %v2230 = vperm.slane %v2226, 2
        %v2231 = vperm.slane %v2226, 3
        %v2232 = vperm.slane %v2226, 4
        %v2233 = vperm.slane %v2226, 5
        %v2234 = vperm.slane %v2226, 6
        %v2235 = vperm.slane %v2226, 7
        %v2372 = vunpack.c.l.b16 %v2098
        %v2373 = vunpack.c.h.b16 %v2098
        %v2374 = vunpack.c.l.b16 %v2099
        %v2375 = vunpack.c.h.b16 %v2099
        %v2376 = vunpack.c.l.b16 %v2100
        %v2377 = vunpack.c.h.b16 %v2100
        %v2378 = vunpack.c.l.b16 %v2101
        %v2379 = vunpack.c.h.b16 %v2101
        %v2380 = vunpack.c.l.b16 %v2102
        %v2381 = vunpack.c.h.b16 %v2102
        %v2382 = vunpack.c.l.b16 %v2103
        %v2383 = vunpack.c.h.b16 %v2103
        %v2384 = vunpack.c.l.b16 %v2104
        %v2385 = vunpack.c.h.b16 %v2104
        %v2386 = vunpack.c.l.b16 %v2105
        %v2387 = vunpack.c.h.b16 %v2105
        %v2388 = vunpack.c.l.b16 %v2106
        %v2389 = vunpack.c.h.b16 %v2106
        %v2390 = vunpack.c.l.b16 %v2107
        %v2391 = vunpack.c.h.b16 %v2107
        %v2392 = vunpack.c.l.b16 %v2108
        %v2393 = vunpack.c.h.b16 %v2108
        %v2394 = vunpack.c.l.b16 %v2109
        %v2395 = vunpack.c.h.b16 %v2109
        %v2396 = vunpack.c.l.b16 %v2110
        %v2397 = vunpack.c.h.b16 %v2110
        %v2398 = vunpack.c.l.b16 %v2111
        %v2399 = vunpack.c.h.b16 %v2111
        %v2400 = vunpack.c.l.b16 %v2112
        %v2401 = vunpack.c.h.b16 %v2112
        %v2402 = vunpack.c.l.b16 %v2113
        %v2403 = vunpack.c.h.b16 %v2113
        %v2404 = vunpack.c.l.b16 %v2114
        %v2405 = vunpack.c.h.b16 %v2114
        %v2406 = vunpack.c.l.b16 %v2115
        %v2407 = vunpack.c.h.b16 %v2115
        %v2408 = vunpack.c.l.b16 %v2116
        %v2409 = vunpack.c.h.b16 %v2116
        %v2410 = vunpack.c.l.b16 %v2117
        %v2411 = vunpack.c.h.b16 %v2117
        %v2412 = vunpack.c.l.b16 %v2118
        %v2413 = vunpack.c.h.b16 %v2118
        %v2414 = vunpack.c.l.b16 %v2119
        %v2415 = vunpack.c.h.b16 %v2119
        %v2416 = vunpack.c.l.b16 %v2120
        %v2417 = vunpack.c.h.b16 %v2120
        %v2418 = vunpack.c.l.b16 %v2121
        %v2419 = vunpack.c.h.b16 %v2121
        %v2420 = vunpack.c.l.b16 %v2122
        %v2421 = vunpack.c.h.b16 %v2122
        %v2422 = vunpack.c.l.b16 %v2123
        %v2423 = vunpack.c.h.b16 %v2123
        %v2424 = vunpack.c.l.b16 %v2124
        %v2425 = vunpack.c.h.b16 %v2124
        %v2426 = vunpack.c.l.b16 %v2125
        %v2427 = vunpack.c.h.b16 %v2125
        %v2428 = vunpack.c.l.b16 %v2126
        %v2429 = vunpack.c.h.b16 %v2126
        %v2430 = vunpack.c.l.b16 %v2127
        %v2431 = vunpack.c.h.b16 %v2127
        %v2432 = vunpack.c.l.b16 %v2128
        %v2433 = vunpack.c.h.b16 %v2128
        %v2434 = vunpack.c.l.b16 %v2129
        %v2435 = vunpack.c.h.b16 %v2129
        %v2436 = vunpack.c.l.b16 %v2130
        %v2437 = vunpack.c.h.b16 %v2130
        %v2438 = vunpack.c.l.b16 %v2131
        %v2439 = vunpack.c.h.b16 %v2131
        %v2440 = vunpack.c.l.b16 %v2132
        %v2441 = vunpack.c.h.b16 %v2132
        %v2442 = vunpack.c.l.b16 %v2133
        %v2443 = vunpack.c.h.b16 %v2133
        %v2444 = vunpack.c.l.b16 %v2134
        %v2445 = vunpack.c.h.b16 %v2134
        %v2446 = vunpack.c.l.b16 %v2135
        %v2447 = vunpack.c.h.b16 %v2135
        %v2448 = vunpack.c.l.b16 %v2136
        %v2449 = vunpack.c.h.b16 %v2136
        %v2450 = vunpack.c.l.b16 %v2137
        %v2451 = vunpack.c.h.b16 %v2137
        %v2452 = vunpack.c.l.b16 %v2138
        %v2453 = vunpack.c.h.b16 %v2138
        %v2454 = vunpack.c.l.b16 %v2139
        %v2455 = vunpack.c.h.b16 %v2139
        %v2456 = vunpack.c.l.b16 %v2140
        %v2457 = vunpack.c.h.b16 %v2140
        %v2458 = vunpack.c.l.b16 %v2141
        %v2459 = vunpack.c.h.b16 %v2141
        %v2460 = vunpack.c.l.b16 %v2142
        %v2461 = vunpack.c.h.b16 %v2142
        %v2462 = vunpack.c.l.b16 %v2143
        %v2463 = vunpack.c.h.b16 %v2143
        %v2464 = vunpack.c.l.b16 %v2144
        %v2465 = vunpack.c.h.b16 %v2144
        %v2466 = vunpack.c.l.b16 %v2145
        %v2467 = vunpack.c.h.b16 %v2145
        %v2468 = vunpack.c.l.b16 %v2146
        %v2469 = vunpack.c.h.b16 %v2146
        %v2470 = vunpack.c.l.b16 %v2147
        %v2471 = vunpack.c.h.b16 %v2147
        %v2472 = vunpack.c.l.b16 %v2148
        %v2473 = vunpack.c.h.b16 %v2148
        %v2474 = vunpack.c.l.b16 %v2149
        %v2475 = vunpack.c.h.b16 %v2149
        %v2476 = vunpack.c.l.b16 %v2150
        %v2477 = vunpack.c.h.b16 %v2150
        %v2478 = vunpack.c.l.b16 %v2151
        %v2479 = vunpack.c.h.b16 %v2151
        %v2480 = vunpack.c.l.b16 %v2152
        %v2481 = vunpack.c.h.b16 %v2152
        %v2482 = vunpack.c.l.b16 %v2153
        %v2483 = vunpack.c.h.b16 %v2153
        %v2484 = vunpack.c.l.b16 %v2154
        %v2485 = vunpack.c.h.b16 %v2154
        %v2486 = vunpack.c.l.b16 %v2155
        %v2487 = vunpack.c.h.b16 %v2155
        %v2488 = vunpack.c.l.b16 %v2156
        %v2489 = vunpack.c.h.b16 %v2156
        %v2490 = vunpack.c.l.b16 %v2157
        %v2491 = vunpack.c.h.b16 %v2157
        %v2492 = vunpack.c.l.b16 %v2158
        %v2493 = vunpack.c.h.b16 %v2158
        %v2494 = vunpack.c.l.b16 %v2159
        %v2495 = vunpack.c.h.b16 %v2159
        %v2496 = vunpack.c.l.b16 %v2160
        %v2497 = vunpack.c.h.b16 %v2160
        %v2498 = vunpack.c.l.b16 %v2161
        %v2499 = vunpack.c.h.b16 %v2161
        %v2500 = vunpack.c.l.b16 %v2162
        %v2501 = vunpack.c.h.b16 %v2162
        %v2502 = vunpack.c.l.b16 %v2163
        %v2503 = vunpack.c.h.b16 %v2163
        %v2504 = vunpack.c.l.b16 %v2164
        %v2505 = vunpack.c.h.b16 %v2164
        %v2506 = vunpack.c.l.b16 %v2165
        %v2507 = vunpack.c.h.b16 %v2165
        %v2508 = vunpack.c.l.b16 %v2166
        %v2509 = vunpack.c.h.b16 %v2166
        %v2510 = vunpack.c.l.b16 %v2167
        %v2511 = vunpack.c.h.b16 %v2167
        %v2512 = vunpack.c.l.b16 %v2168
        %v2513 = vunpack.c.h.b16 %v2168
        %v2514 = vunpack.c.l.b16 %v2169
        %v2515 = vunpack.c.h.b16 %v2169
        %v2516 = vunpack.c.l.b16 %v2170
        %v2517 = vunpack.c.h.b16 %v2170
        %v2518 = vunpack.c.l.b16 %v2171
        %v2519 = vunpack.c.h.b16 %v2171
        %v2520 = vunpack.c.l.b16 %v2172
        %v2521 = vunpack.c.h.b16 %v2172
        %v2522 = vunpack.c.l.b16 %v2173
        %v2523 = vunpack.c.h.b16 %v2173
        %v2524 = vunpack.c.l.b16 %v2174
        %v2525 = vunpack.c.h.b16 %v2174
        %v2526 = vunpack.c.l.b16 %v2175
        %v2527 = vunpack.c.h.b16 %v2175
        %v2528 = vunpack.c.l.b16 %v2176
        %v2529 = vunpack.c.h.b16 %v2176
        %v2530 = vunpack.c.l.b16 %v2177
        %v2531 = vunpack.c.h.b16 %v2177
        %v2532 = vunpack.c.l.b16 %v2178
        %v2533 = vunpack.c.h.b16 %v2178
        %v2534 = vunpack.c.l.b16 %v2179
        %v2535 = vunpack.c.h.b16 %v2179
        %v2536 = vunpack.c.l.b16 %v2180
        %v2537 = vunpack.c.h.b16 %v2180
        %v2538 = vunpack.c.l.b16 %v2181
        %v2539 = vunpack.c.h.b16 %v2181
        %v2540 = vunpack.c.l.b16 %v2182
        %v2541 = vunpack.c.h.b16 %v2182
        %v2542 = vunpack.c.l.b16 %v2183
        %v2543 = vunpack.c.h.b16 %v2183
        %v2544 = vunpack.c.l.b16 %v2184
        %v2545 = vunpack.c.h.b16 %v2184
        %v2546 = vunpack.c.l.b16 %v2185
        %v2547 = vunpack.c.h.b16 %v2185
        %v2548 = vunpack.c.l.b16 %v2186
        %v2549 = vunpack.c.h.b16 %v2186
        %v2550 = vunpack.c.l.b16 %v2187
        %v2551 = vunpack.c.h.b16 %v2187
        %v2552 = vunpack.c.l.b16 %v2188
        %v2553 = vunpack.c.h.b16 %v2188
        %v2554 = vunpack.c.l.b16 %v2189
        %v2555 = vunpack.c.h.b16 %v2189
        %v2556 = vunpack.c.l.b16 %v2190
        %v2557 = vunpack.c.h.b16 %v2190
        %v2558 = vunpack.c.l.b16 %v2191
        %v2559 = vunpack.c.h.b16 %v2191
        %v2560 = vunpack.c.l.b16 %v2192
        %v2561 = vunpack.c.h.b16 %v2192
        %v2562 = vunpack.c.l.b16 %v2193
        %v2563 = vunpack.c.h.b16 %v2193
        %v2564 = vunpack.c.l.b16 %v2194
        %v2565 = vunpack.c.h.b16 %v2194
        %v2566 = vunpack.c.l.b16 %v2195
        %v2567 = vunpack.c.h.b16 %v2195
        %v2568 = vunpack.c.l.b16 %v2196
        %v2569 = vunpack.c.h.b16 %v2196
        %v2570 = vunpack.c.l.b16 %v2197
        %v2571 = vunpack.c.h.b16 %v2197
        %v2572 = vunpack.c.l.b16 %v2198
        %v2573 = vunpack.c.h.b16 %v2198
        %v2574 = vunpack.c.l.b16 %v2199
        %v2575 = vunpack.c.h.b16 %v2199
        %v2576 = vunpack.c.l.b16 %v2200
        %v2577 = vunpack.c.h.b16 %v2200
        %v2578 = vunpack.c.l.b16 %v2201
        %v2579 = vunpack.c.h.b16 %v2201
        %v2580 = vunpack.c.l.b16 %v2202
        %v2581 = vunpack.c.h.b16 %v2202
        %v2582 = vunpack.c.l.b16 %v2203
        %v2583 = vunpack.c.h.b16 %v2203
        %v2584 = vunpack.c.l.b16 %v2204
        %v2585 = vunpack.c.h.b16 %v2204
        %v2586 = vunpack.c.l.b16 %v2205
        %v2587 = vunpack.c.h.b16 %v2205
        %v2588 = vunpack.c.l.b16 %v2206
        %v2589 = vunpack.c.h.b16 %v2206
        %v2590 = vunpack.c.l.b16 %v2207
        %v2591 = vunpack.c.h.b16 %v2207
        %v2592 = vunpack.c.l.b16 %v2208
        %v2593 = vunpack.c.h.b16 %v2208
        %v2594 = vunpack.c.l.b16 %v2209
        %v2595 = vunpack.c.h.b16 %v2209
        %v2596 = vunpack.c.l.b16 %v2210
        %v2597 = vunpack.c.h.b16 %v2210
        %v2598 = vunpack.c.l.b16 %v2211
        %v2599 = vunpack.c.h.b16 %v2211
        %v2600 = vunpack.c.l.b16 %v2212
        %v2601 = vunpack.c.h.b16 %v2212
        %v2602 = vunpack.c.l.b16 %v2213
        %v2603 = vunpack.c.h.b16 %v2213
        %v2604 = vunpack.c.l.b16 %v2214
        %v2605 = vunpack.c.h.b16 %v2214
        %v2606 = vunpack.c.l.b16 %v2215
        %v2607 = vunpack.c.h.b16 %v2215
        %v2608 = vunpack.c.l.b16 %v2216
        %v2609 = vunpack.c.h.b16 %v2216
        %v2610 = vunpack.c.l.b16 %v2217
        %v2611 = vunpack.c.h.b16 %v2217
        %v2612 = vunpack.c.l.b16 %v2218
        %v2613 = vunpack.c.h.b16 %v2218
        %v2614 = vunpack.c.l.b16 %v2219
        %v2615 = vunpack.c.h.b16 %v2219
        %v2616 = vunpack.c.l.b16 %v2220
        %v2617 = vunpack.c.h.b16 %v2220
        %v2618 = vunpack.c.l.b16 %v2221
        %v2619 = vunpack.c.h.b16 %v2221
        %v2620 = vunpack.c.l.b16 %v2222
        %v2621 = vunpack.c.h.b16 %v2222
        %v2622 = vunpack.c.l.b16 %v2223
        %v2623 = vunpack.c.h.b16 %v2223
        %v2624 = vunpack.c.l.b16 %v2224
        %v2625 = vunpack.c.h.b16 %v2224
        %v2626 = vunpack.c.l.b16 %v2225
        %v2627 = vunpack.c.h.b16 %v2225
        %v2628 = vpack.c.b16 %v2380, %v2372
        %v2629 = vpack.c.b16 %v2381, %v2373
        %v2630 = vpack.c.b16 %v2382, %v2374
        %v2631 = vpack.c.b16 %v2383, %v2375
        %v2632 = vpack.c.b16 %v2384, %v2376
        %v2633 = vpack.c.b16 %v2385, %v2377
        %v2634 = vpack.c.b16 %v2386, %v2378
        %v2635 = vpack.c.b16 %v2387, %v2379
        %v2636 = vpack.c.b16 %v2396, %v2388
        %v2637 = vpack.c.b16 %v2397, %v2389
        %v2638 = vpack.c.b16 %v2398, %v2390
        %v2639 = vpack.c.b16 %v2399, %v2391
        %v2640 = vpack.c.b16 %v2400, %v2392
        %v2641 = vpack.c.b16 %v2401, %v2393
        %v2642 = vpack.c.b16 %v2402, %v2394
        %v2643 = vpack.c.b16 %v2403, %v2395
        %v2644 = vpack.c.b16 %v2412, %v2404
        %v2645 = vpack.c.b16 %v2413, %v2405
        %v2646 = vpack.c.b16 %v2414, %v2406
        %v2647 = vpack.c.b16 %v2415, %v2407
        %v2648 = vpack.c.b16 %v2416, %v2408
        %v2649 = vpack.c.b16 %v2417, %v2409
        %v2650 = vpack.c.b16 %v2418, %v2410
        %v2651 = vpack.c.b16 %v2419, %v2411
        %v2652 = vpack.c.b16 %v2428, %v2420
        %v2653 = vpack.c.b16 %v2429, %v2421
        %v2654 = vpack.c.b16 %v2430, %v2422
        %v2655 = vpack.c.b16 %v2431, %v2423
        %v2656 = vpack.c.b16 %v2432, %v2424
        %v2657 = vpack.c.b16 %v2433, %v2425
        %v2658 = vpack.c.b16 %v2434, %v2426
        %v2659 = vpack.c.b16 %v2435, %v2427
        %v2660 = vpack.c.b16 %v2444, %v2436
        %v2661 = vpack.c.b16 %v2445, %v2437
        %v2662 = vpack.c.b16 %v2446, %v2438
        %v2663 = vpack.c.b16 %v2447, %v2439
        %v2664 = vpack.c.b16 %v2448, %v2440
        %v2665 = vpack.c.b16 %v2449, %v2441
        %v2666 = vpack.c.b16 %v2450, %v2442
        %v2667 = vpack.c.b16 %v2451, %v2443
        %v2668 = vpack.c.b16 %v2460, %v2452
        %v2669 = vpack.c.b16 %v2461, %v2453
        %v2670 = vpack.c.b16 %v2462, %v2454
        %v2671 = vpack.c.b16 %v2463, %v2455
        %v2672 = vpack.c.b16 %v2464, %v2456
        %v2673 = vpack.c.b16 %v2465, %v2457
        %v2674 = vpack.c.b16 %v2466, %v2458
        %v2675 = vpack.c.b16 %v2467, %v2459
        %v2676 = vpack.c.b16 %v2476, %v2468
        %v2677 = vpack.c.b16 %v2477, %v2469
        %v2678 = vpack.c.b16 %v2478, %v2470
        %v2679 = vpack.c.b16 %v2479, %v2471
        %v2680 = vpack.c.b16 %v2480, %v2472
        %v2681 = vpack.c.b16 %v2481, %v2473
        %v2682 = vpack.c.b16 %v2482, %v2474
        %v2683 = vpack.c.b16 %v2483, %v2475
        %v2684 = vpack.c.b16 %v2492, %v2484
        %v2685 = vpack.c.b16 %v2493, %v2485
        %v2686 = vpack.c.b16 %v2494, %v2486
        %v2687 = vpack.c.b16 %v2495, %v2487
        %v2688 = vpack.c.b16 %v2496, %v2488
        %v2689 = vpack.c.b16 %v2497, %v2489
        %v2690 = vpack.c.b16 %v2498, %v2490
        %v2691 = vpack.c.b16 %v2499, %v2491
        %v2692 = vpack.c.b16 %v2508, %v2500
        %v2693 = vpack.c.b16 %v2509, %v2501
        %v2694 = vpack.c.b16 %v2510, %v2502
        %v2695 = vpack.c.b16 %v2511, %v2503
        %v2696 = vpack.c.b16 %v2512, %v2504
        %v2697 = vpack.c.b16 %v2513, %v2505
        %v2698 = vpack.c.b16 %v2514, %v2506
        %v2699 = vpack.c.b16 %v2515, %v2507
        %v2700 = vpack.c.b16 %v2524, %v2516
        %v2701 = vpack.c.b16 %v2525, %v2517
        %v2702 = vpack.c.b16 %v2526, %v2518
        %v2703 = vpack.c.b16 %v2527, %v2519
        %v2704 = vpack.c.b16 %v2528, %v2520
        %v2705 = vpack.c.b16 %v2529, %v2521
        %v2706 = vpack.c.b16 %v2530, %v2522
        %v2707 = vpack.c.b16 %v2531, %v2523
        %v2708 = vpack.c.b16 %v2540, %v2532
        %v2709 = vpack.c.b16 %v2541, %v2533
        %v2710 = vpack.c.b16 %v2542, %v2534
        %v2711 = vpack.c.b16 %v2543, %v2535
        %v2712 = vpack.c.b16 %v2544, %v2536
        %v2713 = vpack.c.b16 %v2545, %v2537
        %v2714 = vpack.c.b16 %v2546, %v2538
        %v2715 = vpack.c.b16 %v2547, %v2539
        %v2716 = vpack.c.b16 %v2556, %v2548
        %v2717 = vpack.c.b16 %v2557, %v2549
        %v2718 = vpack.c.b16 %v2558, %v2550
        %v2719 = vpack.c.b16 %v2559, %v2551
        %v2720 = vpack.c.b16 %v2560, %v2552
        %v2721 = vpack.c.b16 %v2561, %v2553
        %v2722 = vpack.c.b16 %v2562, %v2554
        %v2723 = vpack.c.b16 %v2563, %v2555
        %v2724 = vpack.c.b16 %v2572, %v2564
        %v2725 = vpack.c.b16 %v2573, %v2565
        %v2726 = vpack.c.b16 %v2574, %v2566
        %v2727 = vpack.c.b16 %v2575, %v2567
        %v2728 = vpack.c.b16 %v2576, %v2568
        %v2729 = vpack.c.b16 %v2577, %v2569
        %v2730 = vpack.c.b16 %v2578, %v2570
        %v2731 = vpack.c.b16 %v2579, %v2571
        %v2732 = vpack.c.b16 %v2588, %v2580
        %v2733 = vpack.c.b16 %v2589, %v2581
        %v2734 = vpack.c.b16 %v2590, %v2582
        %v2735 = vpack.c.b16 %v2591, %v2583
        %v2736 = vpack.c.b16 %v2592, %v2584
        %v2737 = vpack.c.b16 %v2593, %v2585
        %v2738 = vpack.c.b16 %v2594, %v2586
        %v2739 = vpack.c.b16 %v2595, %v2587
        %v2740 = vpack.c.b16 %v2604, %v2596
        %v2741 = vpack.c.b16 %v2605, %v2597
        %v2742 = vpack.c.b16 %v2606, %v2598
        %v2743 = vpack.c.b16 %v2607, %v2599
        %v2744 = vpack.c.b16 %v2608, %v2600
        %v2745 = vpack.c.b16 %v2609, %v2601
        %v2746 = vpack.c.b16 %v2610, %v2602
        %v2747 = vpack.c.b16 %v2611, %v2603
        %v2748 = vpack.c.b16 %v2620, %v2612
        %v2749 = vpack.c.b16 %v2621, %v2613
        %v2750 = vpack.c.b16 %v2622, %v2614
        %v2751 = vpack.c.b16 %v2623, %v2615
        %v2752 = vpack.c.b16 %v2624, %v2616
        %v2753 = vpack.c.b16 %v2625, %v2617
        %v2754 = vpack.c.b16 %v2626, %v2618
        %v2755 = vpack.c.b16 %v2627, %v2619
        %2884 = vmatpush.bf16.msra.mxu0 %v2684
        %2885 = vmatpush.bf16.msra.mxu0 %v2676
        %2886 = vmatpush.bf16.msra.mxu0 %v2668
        %2887 = vmatpush.bf16.msra.mxu0 %v2660
        %2888 = vmatpush.bf16.msra.mxu0 %v2652
        %2889 = vmatpush.bf16.msra.mxu0 %v2644
        %2890 = vmatpush.bf16.msra.mxu0 %v2636
        %2891 = vmatpush.bf16.msra.mxu0 %v2628
        %2892 = vmatmul.bf16.gmra.mxu0 %v2096
        %v2893 = vpop.f32.mrf.mxu0
        %v2894 = vadd.f32 %v2228, %v2893
        %v2895 = vpop.f32.mrf.mxu0
        %2896 = vdwg.mxu0
        %2897 = vmatpush.bf16.msra.mxu0 %v2748
        %2898 = vmatpush.bf16.msra.mxu0 %v2740
        %2899 = vmatpush.bf16.msra.mxu0 %v2732
        %2900 = vmatpush.bf16.msra.mxu0 %v2724
        %2901 = vmatpush.bf16.msra.mxu0 %v2716
        %2902 = vmatpush.bf16.msra.mxu0 %v2708
        %2903 = vmatpush.bf16.msra.mxu0 %v2700
        %2904 = vmatpush.bf16.msra.mxu0 %v2692
        %2905 = vmatmul.bf16.gmra.mxu0 %v2097
        %v2906 = vpop.f32.mrf.mxu0
        %v2907 = vadd.f32 %v2894, %v2906
        %v2908 = vpop.f32.mrf.mxu0
        %2909 = vdwg.mxu0
        %2910 = vmatpush.bf16.msra.mxu0 %v2685
        %2911 = vmatpush.bf16.msra.mxu0 %v2677
        %2912 = vmatpush.bf16.msra.mxu0 %v2669
        %2913 = vmatpush.bf16.msra.mxu0 %v2661
        %2914 = vmatpush.bf16.msra.mxu0 %v2653
        %2915 = vmatpush.bf16.msra.mxu0 %v2645
        %2916 = vmatpush.bf16.msra.mxu0 %v2637
        %2917 = vmatpush.bf16.msra.mxu0 %v2629
        %2918 = vmatmul.bf16.gmra.mxu0 %v2096
        %v2919 = vpop.f32.mrf.mxu0
        %v2920 = vadd.f32 %v2229, %v2919
        %v2921 = vpop.f32.mrf.mxu0
        %2922 = vdwg.mxu0
        %2923 = vmatpush.bf16.msra.mxu0 %v2749
        %2924 = vmatpush.bf16.msra.mxu0 %v2741
        %2925 = vmatpush.bf16.msra.mxu0 %v2733
        %2926 = vmatpush.bf16.msra.mxu0 %v2725
        %2927 = vmatpush.bf16.msra.mxu0 %v2717
        %2928 = vmatpush.bf16.msra.mxu0 %v2709
        %2929 = vmatpush.bf16.msra.mxu0 %v2701
        %2930 = vmatpush.bf16.msra.mxu0 %v2693
        %2931 = vmatmul.bf16.gmra.mxu0 %v2097
        %v2932 = vpop.f32.mrf.mxu0
        %v2933 = vadd.f32 %v2920, %v2932
        %v2934 = vpop.f32.mrf.mxu0
        %2935 = vdwg.mxu0
        %2936 = vmatpush.bf16.msra.mxu0 %v2686
        %2937 = vmatpush.bf16.msra.mxu0 %v2678
        %2938 = vmatpush.bf16.msra.mxu0 %v2670
        %2939 = vmatpush.bf16.msra.mxu0 %v2662
        %2940 = vmatpush.bf16.msra.mxu0 %v2654
        %2941 = vmatpush.bf16.msra.mxu0 %v2646
        %2942 = vmatpush.bf16.msra.mxu0 %v2638
        %2943 = vmatpush.bf16.msra.mxu0 %v2630
        %2944 = vmatmul.bf16.gmra.mxu0 %v2096
        %v2945 = vpop.f32.mrf.mxu0
        %v2946 = vadd.f32 %v2230, %v2945
        %v2947 = vpop.f32.mrf.mxu0
        %2948 = vdwg.mxu0
        %2949 = vmatpush.bf16.msra.mxu0 %v2750
        %2950 = vmatpush.bf16.msra.mxu0 %v2742
        %2951 = vmatpush.bf16.msra.mxu0 %v2734
        %2952 = vmatpush.bf16.msra.mxu0 %v2726
        %2953 = vmatpush.bf16.msra.mxu0 %v2718
        %2954 = vmatpush.bf16.msra.mxu0 %v2710
        %2955 = vmatpush.bf16.msra.mxu0 %v2702
        %2956 = vmatpush.bf16.msra.mxu0 %v2694
        %2957 = vmatmul.bf16.gmra.mxu0 %v2097
        %v2958 = vpop.f32.mrf.mxu0
        %v2959 = vadd.f32 %v2946, %v2958
        %v2960 = vpop.f32.mrf.mxu0
        %2961 = vdwg.mxu0
        %2962 = vmatpush.bf16.msra.mxu0 %v2687
        %2963 = vmatpush.bf16.msra.mxu0 %v2679
        %2964 = vmatpush.bf16.msra.mxu0 %v2671
        %2965 = vmatpush.bf16.msra.mxu0 %v2663
        %2966 = vmatpush.bf16.msra.mxu0 %v2655
        %2967 = vmatpush.bf16.msra.mxu0 %v2647
        %2968 = vmatpush.bf16.msra.mxu0 %v2639
        %2969 = vmatpush.bf16.msra.mxu0 %v2631
        %2970 = vmatmul.bf16.gmra.mxu0 %v2096
        %v2971 = vpop.f32.mrf.mxu0
        %v2972 = vadd.f32 %v2231, %v2971
        %v2973 = vpop.f32.mrf.mxu0
        %2974 = vdwg.mxu0
        %2975 = vmatpush.bf16.msra.mxu0 %v2751
        %2976 = vmatpush.bf16.msra.mxu0 %v2743
        %2977 = vmatpush.bf16.msra.mxu0 %v2735
        %2978 = vmatpush.bf16.msra.mxu0 %v2727
        %2979 = vmatpush.bf16.msra.mxu0 %v2719
        %2980 = vmatpush.bf16.msra.mxu0 %v2711
        %2981 = vmatpush.bf16.msra.mxu0 %v2703
        %2982 = vmatpush.bf16.msra.mxu0 %v2695
        %2983 = vmatmul.bf16.gmra.mxu0 %v2097
        %v2984 = vpop.f32.mrf.mxu0
        %v2985 = vadd.f32 %v2972, %v2984
        %v2986 = vpop.f32.mrf.mxu0
        %2987 = vdwg.mxu0
        %2988 = vmatpush.bf16.msra.mxu0 %v2688
        %2989 = vmatpush.bf16.msra.mxu0 %v2680
        %2990 = vmatpush.bf16.msra.mxu0 %v2672
        %2991 = vmatpush.bf16.msra.mxu0 %v2664
        %2992 = vmatpush.bf16.msra.mxu0 %v2656
        %2993 = vmatpush.bf16.msra.mxu0 %v2648
        %2994 = vmatpush.bf16.msra.mxu0 %v2640
        %2995 = vmatpush.bf16.msra.mxu0 %v2632
        %2996 = vmatmul.bf16.gmra.mxu0 %v2096
        %v2997 = vpop.f32.mrf.mxu0
        %v2998 = vadd.f32 %v2232, %v2997
        %v2999 = vpop.f32.mrf.mxu0
        %3000 = vdwg.mxu0
        %3001 = vmatpush.bf16.msra.mxu0 %v2752
        %3002 = vmatpush.bf16.msra.mxu0 %v2744
        %3003 = vmatpush.bf16.msra.mxu0 %v2736
        %3004 = vmatpush.bf16.msra.mxu0 %v2728
        %3005 = vmatpush.bf16.msra.mxu0 %v2720
        %3006 = vmatpush.bf16.msra.mxu0 %v2712
        %3007 = vmatpush.bf16.msra.mxu0 %v2704
        %3008 = vmatpush.bf16.msra.mxu0 %v2696
        %3009 = vmatmul.bf16.gmra.mxu0 %v2097
        %v3010 = vpop.f32.mrf.mxu0
        %v3011 = vadd.f32 %v2998, %v3010
        %v3012 = vpop.f32.mrf.mxu0
        %3013 = vdwg.mxu0
        %3014 = vmatpush.bf16.msra.mxu0 %v2689
        %3015 = vmatpush.bf16.msra.mxu0 %v2681
        %3016 = vmatpush.bf16.msra.mxu0 %v2673
        %3017 = vmatpush.bf16.msra.mxu0 %v2665
        %3018 = vmatpush.bf16.msra.mxu0 %v2657
        %3019 = vmatpush.bf16.msra.mxu0 %v2649
        %3020 = vmatpush.bf16.msra.mxu0 %v2641
        %3021 = vmatpush.bf16.msra.mxu0 %v2633
        %3022 = vmatmul.bf16.gmra.mxu0 %v2096
        %v3023 = vpop.f32.mrf.mxu0
        %v3024 = vadd.f32 %v2233, %v3023
        %v3025 = vpop.f32.mrf.mxu0
        %3026 = vdwg.mxu0
        %3027 = vmatpush.bf16.msra.mxu0 %v2753
        %3028 = vmatpush.bf16.msra.mxu0 %v2745
        %3029 = vmatpush.bf16.msra.mxu0 %v2737
        %3030 = vmatpush.bf16.msra.mxu0 %v2729
        %3031 = vmatpush.bf16.msra.mxu0 %v2721
        %3032 = vmatpush.bf16.msra.mxu0 %v2713
        %3033 = vmatpush.bf16.msra.mxu0 %v2705
        %3034 = vmatpush.bf16.msra.mxu0 %v2697
        %3035 = vmatmul.bf16.gmra.mxu0 %v2097
        %v3036 = vpop.f32.mrf.mxu0
        %v3037 = vadd.f32 %v3024, %v3036
        %v3038 = vpop.f32.mrf.mxu0
        %3039 = vdwg.mxu0
        %3040 = vmatpush.bf16.msra.mxu0 %v2690
        %3041 = vmatpush.bf16.msra.mxu0 %v2682
        %3042 = vmatpush.bf16.msra.mxu0 %v2674
        %3043 = vmatpush.bf16.msra.mxu0 %v2666
        %3044 = vmatpush.bf16.msra.mxu0 %v2658
        %3045 = vmatpush.bf16.msra.mxu0 %v2650
        %3046 = vmatpush.bf16.msra.mxu0 %v2642
        %3047 = vmatpush.bf16.msra.mxu0 %v2634
        %3048 = vmatmul.bf16.gmra.mxu0 %v2096
        %v3049 = vpop.f32.mrf.mxu0
        %v3050 = vadd.f32 %v2234, %v3049
        %v3051 = vpop.f32.mrf.mxu0
        %3052 = vdwg.mxu0
        %3053 = vmatpush.bf16.msra.mxu0 %v2754
        %3054 = vmatpush.bf16.msra.mxu0 %v2746
        %3055 = vmatpush.bf16.msra.mxu0 %v2738
        %3056 = vmatpush.bf16.msra.mxu0 %v2730
        %3057 = vmatpush.bf16.msra.mxu0 %v2722
        %3058 = vmatpush.bf16.msra.mxu0 %v2714
        %3059 = vmatpush.bf16.msra.mxu0 %v2706
        %3060 = vmatpush.bf16.msra.mxu0 %v2698
        %3061 = vmatmul.bf16.gmra.mxu0 %v2097
        %v3062 = vpop.f32.mrf.mxu0
        %v3063 = vadd.f32 %v3050, %v3062
        %v3064 = vpop.f32.mrf.mxu0
        %3065 = vdwg.mxu0
        %3066 = vmatpush.bf16.msra.mxu0 %v2691
        %3067 = vmatpush.bf16.msra.mxu0 %v2683
        %3068 = vmatpush.bf16.msra.mxu0 %v2675
        %3069 = vmatpush.bf16.msra.mxu0 %v2667
        %3070 = vmatpush.bf16.msra.mxu0 %v2659
        %3071 = vmatpush.bf16.msra.mxu0 %v2651
        %3072 = vmatpush.bf16.msra.mxu0 %v2643
        %3073 = vmatpush.bf16.msra.mxu0 %v2635
        %3074 = vmatmul.bf16.gmra.mxu0 %v2096
        %v3075 = vpop.f32.mrf.mxu0
        %v3076 = vadd.f32 %v2235, %v3075
        %v3077 = vpop.f32.mrf.mxu0
        %3078 = vdwg.mxu0
        %3079 = vmatpush.bf16.msra.mxu0 %v2755
        %3080 = vmatpush.bf16.msra.mxu0 %v2747
        %3081 = vmatpush.bf16.msra.mxu0 %v2739
        %3082 = vmatpush.bf16.msra.mxu0 %v2731
        %3083 = vmatpush.bf16.msra.mxu0 %v2723
        %3084 = vmatpush.bf16.msra.mxu0 %v2715
        %3085 = vmatpush.bf16.msra.mxu0 %v2707
        %3086 = vmatpush.bf16.msra.mxu0 %v2699
        %3087 = vmatmul.bf16.gmra.mxu0 %v2097
        %v3088 = vpop.f32.mrf.mxu0
        %v3089 = vadd.f32 %v3076, %v3088
        %v3090 = vpop.f32.mrf.mxu0
        %3091 = vdwg.mxu0
        %v3092 = vmax.f32 %v2907, 0.0
        %v3093 = vmax.f32 %v2933, 0.0
        %v3094 = vmax.f32 %v2959, 0.0
        %v3095 = vmax.f32 %v2985, 0.0
        %v3096 = vmax.f32 %v3011, 0.0
        %v3097 = vmax.f32 %v3037, 0.0
        %v3098 = vmax.f32 %v3063, 0.0
        %v3099 = vmax.f32 %v3089, 0.0
        %v3100 = vand.u32 2147483647, %v2907
        %v3101 = vand.u32 2147483647, %v2933
        %v3102 = vand.u32 2147483647, %v2959
        %v3103 = vand.u32 2147483647, %v2985
        %v3104 = vand.u32 2147483647, %v3011
        %v3105 = vand.u32 2147483647, %v3037
        %v3106 = vand.u32 2147483647, %v3063
        %v3107 = vand.u32 2147483647, %v3089
        %v3108 = vsub.f32 0.0, %v3100
        %v3109 = vsub.f32 0.0, %v3101
        %v3110 = vsub.f32 0.0, %v3102
        %v3111 = vsub.f32 0.0, %v3103
        %v3112 = vsub.f32 0.0, %v3104
        %v3113 = vsub.f32 0.0, %v3105
        %v3114 = vsub.f32 0.0, %v3106
        %v3115 = vsub.f32 0.0, %v3107
        %v3116 = vmul.f32 %v3108, 1.442695
        %v3117 = vpow.pop %v3116
        %v3118 = vmul.f32 %v3109, 1.442695
        %v3119 = vpow.pop %v3118
        %v3120 = vmul.f32 %v3110, 1.442695
        %v3121 = vpow.pop %v3120
        %v3122 = vmul.f32 %v3111, 1.442695
        %v3123 = vpow.pop %v3122
        %v3124 = vmul.f32 %v3112, 1.442695
        %v3125 = vpow.pop %v3124
        %v3126 = vmul.f32 %v3113, 1.442695
        %v3127 = vpow.pop %v3126
        %v3128 = vmul.f32 %v3114, 1.442695
        %v3129 = vpow.pop %v3128
        %v3130 = vmul.f32 %v3115, 1.442695
        %v3131 = vpow.pop %v3130
        %v3132 = vadd.f32 %v3117, 1.0
        %v3133 = vadd.f32 %v3119, 1.0
        %v3134 = vadd.f32 %v3121, 1.0
        %v3135 = vadd.f32 %v3123, 1.0
        %v3136 = vadd.f32 %v3125, 1.0
        %v3137 = vadd.f32 %v3127, 1.0
        %v3138 = vadd.f32 %v3129, 1.0
        %v3139 = vadd.f32 %v3131, 1.0
        %v3140 = vlog2.pop %v3132
        %v3141 = vmul.f32 %v3140, 0.6931472
        %v3142 = vlog2.pop %v3133
        %v3143 = vmul.f32 %v3142, 0.6931472
        %v3144 = vlog2.pop %v3134
        %v3145 = vmul.f32 %v3144, 0.6931472
        %v3146 = vlog2.pop %v3135
        %v3147 = vmul.f32 %v3146, 0.6931472
        %v3148 = vlog2.pop %v3136
        %v3149 = vmul.f32 %v3148, 0.6931472
        %v3150 = vlog2.pop %v3137
        %v3151 = vmul.f32 %v3150, 0.6931472
        %v3152 = vlog2.pop %v3138
        %v3153 = vmul.f32 %v3152, 0.6931472
        %v3154 = vlog2.pop %v3139
        %v3155 = vmul.f32 %v3154, 0.6931472
        %v3156 = vadd.f32 %v3092, %v3141
        %v3157 = vadd.f32 %v3093, %v3143
        %v3158 = vadd.f32 %v3094, %v3145
        %v3159 = vadd.f32 %v3095, %v3147
        %v3160 = vadd.f32 %v3096, %v3149
        %v3161 = vadd.f32 %v3097, %v3151
        %v3162 = vadd.f32 %v3098, %v3153
        %v3163 = vadd.f32 %v3099, %v3155
        %v3164 = vmul.f32 %v3156, 0.3275911
        %v3165 = vmul.f32 %v3157, 0.3275911
        %v3166 = vmul.f32 %v3158, 0.3275911
        %v3167 = vmul.f32 %v3159, 0.3275911
        %v3168 = vmul.f32 %v3160, 0.3275911
        %v3169 = vmul.f32 %v3161, 0.3275911
        %v3170 = vmul.f32 %v3162, 0.3275911
        %v3171 = vmul.f32 %v3163, 0.3275911
        %v3172 = vadd.f32 %v3164, 1.0
        %v3173 = vadd.f32 %v3165, 1.0
        %v3174 = vadd.f32 %v3166, 1.0
        %v3175 = vadd.f32 %v3167, 1.0
        %v3176 = vadd.f32 %v3168, 1.0
        %v3177 = vadd.f32 %v3169, 1.0
        %v3178 = vadd.f32 %v3170, 1.0
        %v3179 = vadd.f32 %v3171, 1.0
        %v3180 = vrcp.pop %v3172
        %v3181 = vrcp.pop %v3173
        %v3182 = vrcp.pop %v3174
        %v3183 = vrcp.pop %v3175
        %v3184 = vrcp.pop %v3176
        %v3185 = vrcp.pop %v3177
        %v3186 = vrcp.pop %v3178
        %v3187 = vrcp.pop %v3179
        %v3188 = vmul.f32 %v3180, 1.0614054
        %v3189 = vmul.f32 %v3181, 1.0614054
        %v3190 = vmul.f32 %v3182, 1.0614054
        %v3191 = vmul.f32 %v3183, 1.0614054
        %v3192 = vmul.f32 %v3184, 1.0614054
        %v3193 = vmul.f32 %v3185, 1.0614054
        %v3194 = vmul.f32 %v3186, 1.0614054
        %v3195 = vmul.f32 %v3187, 1.0614054
        %v3196 = vadd.f32 %v3188, -1.4531521
        %v3197 = vadd.f32 %v3189, -1.4531521
        %v3198 = vadd.f32 %v3190, -1.4531521
        %v3199 = vadd.f32 %v3191, -1.4531521
        %v3200 = vadd.f32 %v3192, -1.4531521
        %v3201 = vadd.f32 %v3193, -1.4531521
        %v3202 = vadd.f32 %v3194, -1.4531521
        %v3203 = vadd.f32 %v3195, -1.4531521
        %v3204 = vmul.f32 %v3196, %v3180
        %v3205 = vmul.f32 %v3197, %v3181
        %v3206 = vmul.f32 %v3198, %v3182
        %v3207 = vmul.f32 %v3199, %v3183
        %v3208 = vmul.f32 %v3200, %v3184
        %v3209 = vmul.f32 %v3201, %v3185
        %v3210 = vmul.f32 %v3202, %v3186
        %v3211 = vmul.f32 %v3203, %v3187
        %v3212 = vadd.f32 %v3204, 1.4214138
        %v3213 = vadd.f32 %v3205, 1.4214138
        %v3214 = vadd.f32 %v3206, 1.4214138
        %v3215 = vadd.f32 %v3207, 1.4214138
        %v3216 = vadd.f32 %v3208, 1.4214138
        %v3217 = vadd.f32 %v3209, 1.4214138
        %v3218 = vadd.f32 %v3210, 1.4214138
        %v3219 = vadd.f32 %v3211, 1.4214138
        %v3220 = vmul.f32 %v3212, %v3180
        %v3221 = vmul.f32 %v3213, %v3181
        %v3222 = vmul.f32 %v3214, %v3182
        %v3223 = vmul.f32 %v3215, %v3183
        %v3224 = vmul.f32 %v3216, %v3184
        %v3225 = vmul.f32 %v3217, %v3185
        %v3226 = vmul.f32 %v3218, %v3186
        %v3227 = vmul.f32 %v3219, %v3187
        %v3228 = vadd.f32 %v3220, -0.28449672
        %v3229 = vadd.f32 %v3221, -0.28449672
        %v3230 = vadd.f32 %v3222, -0.28449672
        %v3231 = vadd.f32 %v3223, -0.28449672
        %v3232 = vadd.f32 %v3224, -0.28449672
        %v3233 = vadd.f32 %v3225, -0.28449672
        %v3234 = vadd.f32 %v3226, -0.28449672
        %v3235 = vadd.f32 %v3227, -0.28449672
        %v3236 = vmul.f32 %v3228, %v3180
        %v3237 = vmul.f32 %v3229, %v3181
        %v3238 = vmul.f32 %v3230, %v3182
        %v3239 = vmul.f32 %v3231, %v3183
        %v3240 = vmul.f32 %v3232, %v3184
        %v3241 = vmul.f32 %v3233, %v3185
        %v3242 = vmul.f32 %v3234, %v3186
        %v3243 = vmul.f32 %v3235, %v3187
        %v3244 = vadd.f32 %v3236, 0.2548296
        %v3245 = vadd.f32 %v3237, 0.2548296
        %v3246 = vadd.f32 %v3238, 0.2548296
        %v3247 = vadd.f32 %v3239, 0.2548296
        %v3248 = vadd.f32 %v3240, 0.2548296
        %v3249 = vadd.f32 %v3241, 0.2548296
        %v3250 = vadd.f32 %v3242, 0.2548296
        %v3251 = vadd.f32 %v3243, 0.2548296
        %v3252 = vmul.f32 %v3244, %v3180
        %v3253 = vmul.f32 %v3245, %v3181
        %v3254 = vmul.f32 %v3246, %v3182
        %v3255 = vmul.f32 %v3247, %v3183
        %v3256 = vmul.f32 %v3248, %v3184
        %v3257 = vmul.f32 %v3249, %v3185
        %v3258 = vmul.f32 %v3250, %v3186
        %v3259 = vmul.f32 %v3251, %v3187
        %v3260 = vsub.f32 0.0, %v3156
        %v3261 = vsub.f32 0.0, %v3157
        %v3262 = vsub.f32 0.0, %v3158
        %v3263 = vsub.f32 0.0, %v3159
        %v3264 = vsub.f32 0.0, %v3160
        %v3265 = vsub.f32 0.0, %v3161
        %v3266 = vsub.f32 0.0, %v3162
        %v3267 = vsub.f32 0.0, %v3163
        %v3268 = vmul.f32 %v3260, %v3156
        %v3269 = vmul.f32 %v3261, %v3157
        %v3270 = vmul.f32 %v3262, %v3158
        %v3271 = vmul.f32 %v3263, %v3159
        %v3272 = vmul.f32 %v3264, %v3160
        %v3273 = vmul.f32 %v3265, %v3161
        %v3274 = vmul.f32 %v3266, %v3162
        %v3275 = vmul.f32 %v3267, %v3163
        %v3276 = vmul.f32 %v3268, 1.442695
        %v3277 = vpow.pop %v3276
        %v3278 = vmul.f32 %v3269, 1.442695
        %v3279 = vpow.pop %v3278
        %v3280 = vmul.f32 %v3270, 1.442695
        %v3281 = vpow.pop %v3280
        %v3282 = vmul.f32 %v3271, 1.442695
        %v3283 = vpow.pop %v3282
        %v3284 = vmul.f32 %v3272, 1.442695
        %v3285 = vpow.pop %v3284
        %v3286 = vmul.f32 %v3273, 1.442695
        %v3287 = vpow.pop %v3286
        %v3288 = vmul.f32 %v3274, 1.442695
        %v3289 = vpow.pop %v3288
        %v3290 = vmul.f32 %v3275, 1.442695
        %v3291 = vpow.pop %v3290
        %v3292 = vmul.f32 %v3252, %v3277
        %v3293 = vmul.f32 %v3253, %v3279
        %v3294 = vmul.f32 %v3254, %v3281
        %v3295 = vmul.f32 %v3255, %v3283
        %v3296 = vmul.f32 %v3256, %v3285
        %v3297 = vmul.f32 %v3257, %v3287
        %v3298 = vmul.f32 %v3258, %v3289
        %v3299 = vmul.f32 %v3259, %v3291
        %v3300 = vsub.f32 1.0, %v3292
        %v3301 = vsub.f32 1.0, %v3293
        %v3302 = vsub.f32 1.0, %v3294
        %v3303 = vsub.f32 1.0, %v3295
        %v3304 = vsub.f32 1.0, %v3296
        %v3305 = vsub.f32 1.0, %v3297
        %v3306 = vsub.f32 1.0, %v3298
        %v3307 = vsub.f32 1.0, %v3299
        %v3308 = vmul.f32 %v2907, %v3300
        %v3309 = vmul.f32 %v2933, %v3301
        %v3310 = vmul.f32 %v2959, %v3302
        %v3311 = vmul.f32 %v2985, %v3303
        %v3312 = vmul.f32 %v3011, %v3304
        %v3313 = vmul.f32 %v3037, %v3305
        %v3314 = vmul.f32 %v3063, %v3306
        %v3315 = vmul.f32 %v3089, %v3307
        %v3316 = vpack.c.bf16 %v3308, %v3308
        %v3317 = vpack.c.bf16 %v3309, %v3309
        %v3318 = vpack.c.bf16 %v3310, %v3310
        %v3319 = vpack.c.bf16 %v3311, %v3311
        %v3320 = vpack.c.bf16 %v3312, %v3312
        %v3321 = vpack.c.bf16 %v3313, %v3313
        %v3322 = vpack.c.bf16 %v3314, %v3314
        %v3323 = vpack.c.bf16 %v3315, %v3315
        %v3324 = vld [vmem:[%s8] sm:$0xff]
        %v3325 = vld [vmem:[%s8 + $0x8] sm:$0xff]
        %v3326 = vld [vmem:[%s8 + $0x10] sm:$0xff]
        %v3327 = vld [vmem:[%s8 + $0x18] sm:$0xff]
        %v3328 = vld [vmem:[%s8 + $0x20] sm:$0xff]
        %v3329 = vld [vmem:[%s8 + $0x28] sm:$0xff]
        %v3330 = vld [vmem:[%s8 + $0x30] sm:$0xff]
        %v3331 = vld [vmem:[%s8 + $0x38] sm:$0xff]
        %v3332 = vld [vmem:[%s8 + $0x40] sm:$0xff]
        %v3333 = vld [vmem:[%s8 + $0x48] sm:$0xff]
        %v3334 = vld [vmem:[%s8 + $0x50] sm:$0xff]
        %v3335 = vld [vmem:[%s8 + $0x58] sm:$0xff]
        %v3336 = vld [vmem:[%s8 + $0x60] sm:$0xff]
        %v3337 = vld [vmem:[%s8 + $0x68] sm:$0xff]
        %v3338 = vld [vmem:[%s8 + $0x70] sm:$0xff]
        %v3339 = vld [vmem:[%s8 + $0x78] sm:$0xff]
        %v3340 = vld [vmem:[%s8 + $0x80] sm:$0xff]
        %v3341 = vld [vmem:[%s8 + $0x88] sm:$0xff]
        %v3342 = vld [vmem:[%s8 + $0x90] sm:$0xff]
        %v3343 = vld [vmem:[%s8 + $0x98] sm:$0xff]
        %v3344 = vld [vmem:[%s8 + $0xa0] sm:$0xff]
        %v3345 = vld [vmem:[%s8 + $0xa8] sm:$0xff]
        %v3346 = vld [vmem:[%s8 + $0xb0] sm:$0xff]
        %v3347 = vld [vmem:[%s8 + $0xb8] sm:$0xff]
        %v3348 = vld [vmem:[%s8 + $0xc0] sm:$0xff]
        %v3349 = vld [vmem:[%s8 + $0xc8] sm:$0xff]
        %v3350 = vld [vmem:[%s8 + $0xd0] sm:$0xff]
        %v3351 = vld [vmem:[%s8 + $0xd8] sm:$0xff]
        %v3352 = vld [vmem:[%s8 + $0xe0] sm:$0xff]
        %v3353 = vld [vmem:[%s8 + $0xe8] sm:$0xff]
        %v3354 = vld [vmem:[%s8 + $0xf0] sm:$0xff]
        %v3355 = vld [vmem:[%s8 + $0xf8] sm:$0xff]
        %v3356 = vld [vmem:[%s8 + $0x100] sm:$0xff]
        %v3357 = vld [vmem:[%s8 + $0x108] sm:$0xff]
        %v3358 = vld [vmem:[%s8 + $0x110] sm:$0xff]
        %v3359 = vld [vmem:[%s8 + $0x118] sm:$0xff]
        %v3360 = vld [vmem:[%s8 + $0x120] sm:$0xff]
        %v3361 = vld [vmem:[%s8 + $0x128] sm:$0xff]
        %v3362 = vld [vmem:[%s8 + $0x130] sm:$0xff]
        %v3363 = vld [vmem:[%s8 + $0x138] sm:$0xff]
        %v3364 = vld [vmem:[%s8 + $0x140] sm:$0xff]
        %v3365 = vld [vmem:[%s8 + $0x148] sm:$0xff]
        %v3366 = vld [vmem:[%s8 + $0x150] sm:$0xff]
        %v3367 = vld [vmem:[%s8 + $0x158] sm:$0xff]
        %v3368 = vld [vmem:[%s8 + $0x160] sm:$0xff]
        %v3369 = vld [vmem:[%s8 + $0x168] sm:$0xff]
        %v3370 = vld [vmem:[%s8 + $0x170] sm:$0xff]
        %v3371 = vld [vmem:[%s8 + $0x178] sm:$0xff]
        %v3372 = vld [vmem:[%s8 + $0x180] sm:$0xff]
        %v3373 = vld [vmem:[%s8 + $0x188] sm:$0xff]
        %v3374 = vld [vmem:[%s8 + $0x190] sm:$0xff]
        %v3375 = vld [vmem:[%s8 + $0x198] sm:$0xff]
        %v3376 = vld [vmem:[%s8 + $0x1a0] sm:$0xff]
        %v3377 = vld [vmem:[%s8 + $0x1a8] sm:$0xff]
        %v3378 = vld [vmem:[%s8 + $0x1b0] sm:$0xff]
        %v3379 = vld [vmem:[%s8 + $0x1b8] sm:$0xff]
        %v3380 = vld [vmem:[%s8 + $0x1c0] sm:$0xff]
        %v3381 = vld [vmem:[%s8 + $0x1c8] sm:$0xff]
        %v3382 = vld [vmem:[%s8 + $0x1d0] sm:$0xff]
        %v3383 = vld [vmem:[%s8 + $0x1d8] sm:$0xff]
        %v3384 = vld [vmem:[%s8 + $0x1e0] sm:$0xff]
        %v3385 = vld [vmem:[%s8 + $0x1e8] sm:$0xff]
        %v3386 = vld [vmem:[%s8 + $0x1f0] sm:$0xff]
        %v3387 = vld [vmem:[%s8 + $0x1f8] sm:$0xff]
        %v3388 = vld [vmem:[%s8 + $0x200] sm:$0xff]
        %v3389 = vld [vmem:[%s8 + $0x208] sm:$0xff]
        %v3390 = vld [vmem:[%s8 + $0x210] sm:$0xff]
        %v3391 = vld [vmem:[%s8 + $0x218] sm:$0xff]
        %v3392 = vld [vmem:[%s8 + $0x220] sm:$0xff]
        %v3393 = vld [vmem:[%s8 + $0x228] sm:$0xff]
        %v3394 = vld [vmem:[%s8 + $0x230] sm:$0xff]
        %v3395 = vld [vmem:[%s8 + $0x238] sm:$0xff]
        %v3396 = vld [vmem:[%s8 + $0x240] sm:$0xff]
        %v3397 = vld [vmem:[%s8 + $0x248] sm:$0xff]
        %v3398 = vld [vmem:[%s8 + $0x250] sm:$0xff]
        %v3399 = vld [vmem:[%s8 + $0x258] sm:$0xff]
        %v3400 = vld [vmem:[%s8 + $0x260] sm:$0xff]
        %v3401 = vld [vmem:[%s8 + $0x268] sm:$0xff]
        %v3402 = vld [vmem:[%s8 + $0x270] sm:$0xff]
        %v3403 = vld [vmem:[%s8 + $0x278] sm:$0xff]
        %v3404 = vld [vmem:[%s8 + $0x280] sm:$0xff]
        %v3405 = vld [vmem:[%s8 + $0x288] sm:$0xff]
        %v3406 = vld [vmem:[%s8 + $0x290] sm:$0xff]
        %v3407 = vld [vmem:[%s8 + $0x298] sm:$0xff]
        %v3408 = vld [vmem:[%s8 + $0x2a0] sm:$0xff]
        %v3409 = vld [vmem:[%s8 + $0x2a8] sm:$0xff]
        %v3410 = vld [vmem:[%s8 + $0x2b0] sm:$0xff]
        %v3411 = vld [vmem:[%s8 + $0x2b8] sm:$0xff]
        %v3412 = vld [vmem:[%s8 + $0x2c0] sm:$0xff]
        %v3413 = vld [vmem:[%s8 + $0x2c8] sm:$0xff]
        %v3414 = vld [vmem:[%s8 + $0x2d0] sm:$0xff]
        %v3415 = vld [vmem:[%s8 + $0x2d8] sm:$0xff]
        %v3416 = vld [vmem:[%s8 + $0x2e0] sm:$0xff]
        %v3417 = vld [vmem:[%s8 + $0x2e8] sm:$0xff]
        %v3418 = vld [vmem:[%s8 + $0x2f0] sm:$0xff]
        %v3419 = vld [vmem:[%s8 + $0x2f8] sm:$0xff]
        %v3420 = vld [vmem:[%s8 + $0x300] sm:$0xff]
        %v3421 = vld [vmem:[%s8 + $0x308] sm:$0xff]
        %v3422 = vld [vmem:[%s8 + $0x310] sm:$0xff]
        %v3423 = vld [vmem:[%s8 + $0x318] sm:$0xff]
        %v3424 = vld [vmem:[%s8 + $0x320] sm:$0xff]
        %v3425 = vld [vmem:[%s8 + $0x328] sm:$0xff]
        %v3426 = vld [vmem:[%s8 + $0x330] sm:$0xff]
        %v3427 = vld [vmem:[%s8 + $0x338] sm:$0xff]
        %v3428 = vld [vmem:[%s8 + $0x340] sm:$0xff]
        %v3429 = vld [vmem:[%s8 + $0x348] sm:$0xff]
        %v3430 = vld [vmem:[%s8 + $0x350] sm:$0xff]
        %v3431 = vld [vmem:[%s8 + $0x358] sm:$0xff]
        %v3432 = vld [vmem:[%s8 + $0x360] sm:$0xff]
        %v3433 = vld [vmem:[%s8 + $0x368] sm:$0xff]
        %v3434 = vld [vmem:[%s8 + $0x370] sm:$0xff]
        %v3435 = vld [vmem:[%s8 + $0x378] sm:$0xff]
        %v3436 = vld [vmem:[%s8 + $0x380] sm:$0xff]
        %v3437 = vld [vmem:[%s8 + $0x388] sm:$0xff]
        %v3438 = vld [vmem:[%s8 + $0x390] sm:$0xff]
        %v3439 = vld [vmem:[%s8 + $0x398] sm:$0xff]
        %v3440 = vld [vmem:[%s8 + $0x3a0] sm:$0xff]
        %v3441 = vld [vmem:[%s8 + $0x3a8] sm:$0xff]
        %v3442 = vld [vmem:[%s8 + $0x3b0] sm:$0xff]
        %v3443 = vld [vmem:[%s8 + $0x3b8] sm:$0xff]
        %v3444 = vld [vmem:[%s8 + $0x3c0] sm:$0xff]
        %v3445 = vld [vmem:[%s8 + $0x3c8] sm:$0xff]
        %v3446 = vld [vmem:[%s8 + $0x3d0] sm:$0xff]
        %v3447 = vld [vmem:[%s8 + $0x3d8] sm:$0xff]
        %v3448 = vld [vmem:[%s8 + $0x3e0] sm:$0xff]
        %v3449 = vld [vmem:[%s8 + $0x3e8] sm:$0xff]
        %v3450 = vld [vmem:[%s8 + $0x3f0] sm:$0xff]
        %v3451 = vld [vmem:[%s8 + $0x3f8] sm:$0xff]
        %v3452 = vld [vmem:[%s9] sm:$0x3]
        %v3454 = vperm.slane %v3452, 0
        %v3455 = vperm.slane %v3452, 1
        %v3586 = vunpack.c.l.b16 %v3324
        %v3587 = vunpack.c.h.b16 %v3324
        %v3588 = vunpack.c.l.b16 %v3325
        %v3589 = vunpack.c.h.b16 %v3325
        %v3590 = vunpack.c.l.b16 %v3326
        %v3591 = vunpack.c.h.b16 %v3326
        %v3592 = vunpack.c.l.b16 %v3327
        %v3593 = vunpack.c.h.b16 %v3327
        %v3594 = vunpack.c.l.b16 %v3328
        %v3595 = vunpack.c.h.b16 %v3328
        %v3596 = vunpack.c.l.b16 %v3329
        %v3597 = vunpack.c.h.b16 %v3329
        %v3598 = vunpack.c.l.b16 %v3330
        %v3599 = vunpack.c.h.b16 %v3330
        %v3600 = vunpack.c.l.b16 %v3331
        %v3601 = vunpack.c.h.b16 %v3331
        %v3602 = vunpack.c.l.b16 %v3332
        %v3603 = vunpack.c.h.b16 %v3332
        %v3604 = vunpack.c.l.b16 %v3333
        %v3605 = vunpack.c.h.b16 %v3333
        %v3606 = vunpack.c.l.b16 %v3334
        %v3607 = vunpack.c.h.b16 %v3334
        %v3608 = vunpack.c.l.b16 %v3335
        %v3609 = vunpack.c.h.b16 %v3335
        %v3610 = vunpack.c.l.b16 %v3336
        %v3611 = vunpack.c.h.b16 %v3336
        %v3612 = vunpack.c.l.b16 %v3337
        %v3613 = vunpack.c.h.b16 %v3337
        %v3614 = vunpack.c.l.b16 %v3338
        %v3615 = vunpack.c.h.b16 %v3338
        %v3616 = vunpack.c.l.b16 %v3339
        %v3617 = vunpack.c.h.b16 %v3339
        %v3618 = vunpack.c.l.b16 %v3340
        %v3619 = vunpack.c.h.b16 %v3340
        %v3620 = vunpack.c.l.b16 %v3341
        %v3621 = vunpack.c.h.b16 %v3341
        %v3622 = vunpack.c.l.b16 %v3342
        %v3623 = vunpack.c.h.b16 %v3342
        %v3624 = vunpack.c.l.b16 %v3343
        %v3625 = vunpack.c.h.b16 %v3343
        %v3626 = vunpack.c.l.b16 %v3344
        %v3627 = vunpack.c.h.b16 %v3344
        %v3628 = vunpack.c.l.b16 %v3345
        %v3629 = vunpack.c.h.b16 %v3345
        %v3630 = vunpack.c.l.b16 %v3346
        %v3631 = vunpack.c.h.b16 %v3346
        %v3632 = vunpack.c.l.b16 %v3347
        %v3633 = vunpack.c.h.b16 %v3347
        %v3634 = vunpack.c.l.b16 %v3348
        %v3635 = vunpack.c.h.b16 %v3348
        %v3636 = vunpack.c.l.b16 %v3349
        %v3637 = vunpack.c.h.b16 %v3349
        %v3638 = vunpack.c.l.b16 %v3350
        %v3639 = vunpack.c.h.b16 %v3350
        %v3640 = vunpack.c.l.b16 %v3351
        %v3641 = vunpack.c.h.b16 %v3351
        %v3642 = vunpack.c.l.b16 %v3352
        %v3643 = vunpack.c.h.b16 %v3352
        %v3644 = vunpack.c.l.b16 %v3353
        %v3645 = vunpack.c.h.b16 %v3353
        %v3646 = vunpack.c.l.b16 %v3354
        %v3647 = vunpack.c.h.b16 %v3354
        %v3648 = vunpack.c.l.b16 %v3355
        %v3649 = vunpack.c.h.b16 %v3355
        %v3650 = vunpack.c.l.b16 %v3356
        %v3651 = vunpack.c.h.b16 %v3356
        %v3652 = vunpack.c.l.b16 %v3357
        %v3653 = vunpack.c.h.b16 %v3357
        %v3654 = vunpack.c.l.b16 %v3358
        %v3655 = vunpack.c.h.b16 %v3358
        %v3656 = vunpack.c.l.b16 %v3359
        %v3657 = vunpack.c.h.b16 %v3359
        %v3658 = vunpack.c.l.b16 %v3360
        %v3659 = vunpack.c.h.b16 %v3360
        %v3660 = vunpack.c.l.b16 %v3361
        %v3661 = vunpack.c.h.b16 %v3361
        %v3662 = vunpack.c.l.b16 %v3362
        %v3663 = vunpack.c.h.b16 %v3362
        %v3664 = vunpack.c.l.b16 %v3363
        %v3665 = vunpack.c.h.b16 %v3363
        %v3666 = vunpack.c.l.b16 %v3364
        %v3667 = vunpack.c.h.b16 %v3364
        %v3668 = vunpack.c.l.b16 %v3365
        %v3669 = vunpack.c.h.b16 %v3365
        %v3670 = vunpack.c.l.b16 %v3366
        %v3671 = vunpack.c.h.b16 %v3366
        %v3672 = vunpack.c.l.b16 %v3367
        %v3673 = vunpack.c.h.b16 %v3367
        %v3674 = vunpack.c.l.b16 %v3368
        %v3675 = vunpack.c.h.b16 %v3368
        %v3676 = vunpack.c.l.b16 %v3369
        %v3677 = vunpack.c.h.b16 %v3369
        %v3678 = vunpack.c.l.b16 %v3370
        %v3679 = vunpack.c.h.b16 %v3370
        %v3680 = vunpack.c.l.b16 %v3371
        %v3681 = vunpack.c.h.b16 %v3371
        %v3682 = vunpack.c.l.b16 %v3372
        %v3683 = vunpack.c.h.b16 %v3372
        %v3684 = vunpack.c.l.b16 %v3373
        %v3685 = vunpack.c.h.b16 %v3373
        %v3686 = vunpack.c.l.b16 %v3374
        %v3687 = vunpack.c.h.b16 %v3374
        %v3688 = vunpack.c.l.b16 %v3375
        %v3689 = vunpack.c.h.b16 %v3375
        %v3690 = vunpack.c.l.b16 %v3376
        %v3691 = vunpack.c.h.b16 %v3376
        %v3692 = vunpack.c.l.b16 %v3377
        %v3693 = vunpack.c.h.b16 %v3377
        %v3694 = vunpack.c.l.b16 %v3378
        %v3695 = vunpack.c.h.b16 %v3378
        %v3696 = vunpack.c.l.b16 %v3379
        %v3697 = vunpack.c.h.b16 %v3379
        %v3698 = vunpack.c.l.b16 %v3380
        %v3699 = vunpack.c.h.b16 %v3380
        %v3700 = vunpack.c.l.b16 %v3381
        %v3701 = vunpack.c.h.b16 %v3381
        %v3702 = vunpack.c.l.b16 %v3382
        %v3703 = vunpack.c.h.b16 %v3382
        %v3704 = vunpack.c.l.b16 %v3383
        %v3705 = vunpack.c.h.b16 %v3383
        %v3706 = vunpack.c.l.b16 %v3384
        %v3707 = vunpack.c.h.b16 %v3384
        %v3708 = vunpack.c.l.b16 %v3385
        %v3709 = vunpack.c.h.b16 %v3385
        %v3710 = vunpack.c.l.b16 %v3386
        %v3711 = vunpack.c.h.b16 %v3386
        %v3712 = vunpack.c.l.b16 %v3387
        %v3713 = vunpack.c.h.b16 %v3387
        %v3714 = vunpack.c.l.b16 %v3388
        %v3715 = vunpack.c.h.b16 %v3388
        %v3716 = vunpack.c.l.b16 %v3389
        %v3717 = vunpack.c.h.b16 %v3389
        %v3718 = vunpack.c.l.b16 %v3390
        %v3719 = vunpack.c.h.b16 %v3390
        %v3720 = vunpack.c.l.b16 %v3391
        %v3721 = vunpack.c.h.b16 %v3391
        %v3722 = vunpack.c.l.b16 %v3392
        %v3723 = vunpack.c.h.b16 %v3392
        %v3724 = vunpack.c.l.b16 %v3393
        %v3725 = vunpack.c.h.b16 %v3393
        %v3726 = vunpack.c.l.b16 %v3394
        %v3727 = vunpack.c.h.b16 %v3394
        %v3728 = vunpack.c.l.b16 %v3395
        %v3729 = vunpack.c.h.b16 %v3395
        %v3730 = vunpack.c.l.b16 %v3396
        %v3731 = vunpack.c.h.b16 %v3396
        %v3732 = vunpack.c.l.b16 %v3397
        %v3733 = vunpack.c.h.b16 %v3397
        %v3734 = vunpack.c.l.b16 %v3398
        %v3735 = vunpack.c.h.b16 %v3398
        %v3736 = vunpack.c.l.b16 %v3399
        %v3737 = vunpack.c.h.b16 %v3399
        %v3738 = vunpack.c.l.b16 %v3400
        %v3739 = vunpack.c.h.b16 %v3400
        %v3740 = vunpack.c.l.b16 %v3401
        %v3741 = vunpack.c.h.b16 %v3401
        %v3742 = vunpack.c.l.b16 %v3402
        %v3743 = vunpack.c.h.b16 %v3402
        %v3744 = vunpack.c.l.b16 %v3403
        %v3745 = vunpack.c.h.b16 %v3403
        %v3746 = vunpack.c.l.b16 %v3404
        %v3747 = vunpack.c.h.b16 %v3404
        %v3748 = vunpack.c.l.b16 %v3405
        %v3749 = vunpack.c.h.b16 %v3405
        %v3750 = vunpack.c.l.b16 %v3406
        %v3751 = vunpack.c.h.b16 %v3406
        %v3752 = vunpack.c.l.b16 %v3407
        %v3753 = vunpack.c.h.b16 %v3407
        %v3754 = vunpack.c.l.b16 %v3408
        %v3755 = vunpack.c.h.b16 %v3408
        %v3756 = vunpack.c.l.b16 %v3409
        %v3757 = vunpack.c.h.b16 %v3409
        %v3758 = vunpack.c.l.b16 %v3410
        %v3759 = vunpack.c.h.b16 %v3410
        %v3760 = vunpack.c.l.b16 %v3411
        %v3761 = vunpack.c.h.b16 %v3411
        %v3762 = vunpack.c.l.b16 %v3412
        %v3763 = vunpack.c.h.b16 %v3412
        %v3764 = vunpack.c.l.b16 %v3413
        %v3765 = vunpack.c.h.b16 %v3413
        %v3766 = vunpack.c.l.b16 %v3414
        %v3767 = vunpack.c.h.b16 %v3414
        %v3768 = vunpack.c.l.b16 %v3415
        %v3769 = vunpack.c.h.b16 %v3415
        %v3770 = vunpack.c.l.b16 %v3416
        %v3771 = vunpack.c.h.b16 %v3416
        %v3772 = vunpack.c.l.b16 %v3417
        %v3773 = vunpack.c.h.b16 %v3417
        %v3774 = vunpack.c.l.b16 %v3418
        %v3775 = vunpack.c.h.b16 %v3418
        %v3776 = vunpack.c.l.b16 %v3419
        %v3777 = vunpack.c.h.b16 %v3419
        %v3778 = vunpack.c.l.b16 %v3420
        %v3779 = vunpack.c.h.b16 %v3420
        %v3780 = vunpack.c.l.b16 %v3421
        %v3781 = vunpack.c.h.b16 %v3421
        %v3782 = vunpack.c.l.b16 %v3422
        %v3783 = vunpack.c.h.b16 %v3422
        %v3784 = vunpack.c.l.b16 %v3423
        %v3785 = vunpack.c.h.b16 %v3423
        %v3786 = vunpack.c.l.b16 %v3424
        %v3787 = vunpack.c.h.b16 %v3424
        %v3788 = vunpack.c.l.b16 %v3425
        %v3789 = vunpack.c.h.b16 %v3425
        %v3790 = vunpack.c.l.b16 %v3426
        %v3791 = vunpack.c.h.b16 %v3426
        %v3792 = vunpack.c.l.b16 %v3427
        %v3793 = vunpack.c.h.b16 %v3427
        %v3794 = vunpack.c.l.b16 %v3428
        %v3795 = vunpack.c.h.b16 %v3428
        %v3796 = vunpack.c.l.b16 %v3429
        %v3797 = vunpack.c.h.b16 %v3429
        %v3798 = vunpack.c.l.b16 %v3430
        %v3799 = vunpack.c.h.b16 %v3430
        %v3800 = vunpack.c.l.b16 %v3431
        %v3801 = vunpack.c.h.b16 %v3431
        %v3802 = vunpack.c.l.b16 %v3432
        %v3803 = vunpack.c.h.b16 %v3432
        %v3804 = vunpack.c.l.b16 %v3433
        %v3805 = vunpack.c.h.b16 %v3433
        %v3806 = vunpack.c.l.b16 %v3434
        %v3807 = vunpack.c.h.b16 %v3434
        %v3808 = vunpack.c.l.b16 %v3435
        %v3809 = vunpack.c.h.b16 %v3435
        %v3810 = vunpack.c.l.b16 %v3436
        %v3811 = vunpack.c.h.b16 %v3436
        %v3812 = vunpack.c.l.b16 %v3437
        %v3813 = vunpack.c.h.b16 %v3437
        %v3814 = vunpack.c.l.b16 %v3438
        %v3815 = vunpack.c.h.b16 %v3438
        %v3816 = vunpack.c.l.b16 %v3439
        %v3817 = vunpack.c.h.b16 %v3439
        %v3818 = vunpack.c.l.b16 %v3440
        %v3819 = vunpack.c.h.b16 %v3440
        %v3820 = vunpack.c.l.b16 %v3441
        %v3821 = vunpack.c.h.b16 %v3441
        %v3822 = vunpack.c.l.b16 %v3442
        %v3823 = vunpack.c.h.b16 %v3442
        %v3824 = vunpack.c.l.b16 %v3443
        %v3825 = vunpack.c.h.b16 %v3443
        %v3826 = vunpack.c.l.b16 %v3444
        %v3827 = vunpack.c.h.b16 %v3444
        %v3828 = vunpack.c.l.b16 %v3445
        %v3829 = vunpack.c.h.b16 %v3445
        %v3830 = vunpack.c.l.b16 %v3446
        %v3831 = vunpack.c.h.b16 %v3446
        %v3832 = vunpack.c.l.b16 %v3447
        %v3833 = vunpack.c.h.b16 %v3447
        %v3834 = vunpack.c.l.b16 %v3448
        %v3835 = vunpack.c.h.b16 %v3448
        %v3836 = vunpack.c.l.b16 %v3449
        %v3837 = vunpack.c.h.b16 %v3449
        %v3838 = vunpack.c.l.b16 %v3450
        %v3839 = vunpack.c.h.b16 %v3450
        %v3840 = vunpack.c.l.b16 %v3451
        %v3841 = vunpack.c.h.b16 %v3451
        %v3842 = vpack.c.b16 %v3588, %v3586
        %v3843 = vpack.c.b16 %v3589, %v3587
        %v3844 = vpack.c.b16 %v3592, %v3590
        %v3845 = vpack.c.b16 %v3593, %v3591
        %v3846 = vpack.c.b16 %v3596, %v3594
        %v3847 = vpack.c.b16 %v3597, %v3595
        %v3848 = vpack.c.b16 %v3600, %v3598
        %v3849 = vpack.c.b16 %v3601, %v3599
        %v3850 = vpack.c.b16 %v3604, %v3602
        %v3851 = vpack.c.b16 %v3605, %v3603
        %v3852 = vpack.c.b16 %v3608, %v3606
        %v3853 = vpack.c.b16 %v3609, %v3607
        %v3854 = vpack.c.b16 %v3612, %v3610
        %v3855 = vpack.c.b16 %v3613, %v3611
        %v3856 = vpack.c.b16 %v3616, %v3614
        %v3857 = vpack.c.b16 %v3617, %v3615
        %v3858 = vpack.c.b16 %v3620, %v3618
        %v3859 = vpack.c.b16 %v3621, %v3619
        %v3860 = vpack.c.b16 %v3624, %v3622
        %v3861 = vpack.c.b16 %v3625, %v3623
        %v3862 = vpack.c.b16 %v3628, %v3626
        %v3863 = vpack.c.b16 %v3629, %v3627
        %v3864 = vpack.c.b16 %v3632, %v3630
        %v3865 = vpack.c.b16 %v3633, %v3631
        %v3866 = vpack.c.b16 %v3636, %v3634
        %v3867 = vpack.c.b16 %v3637, %v3635
        %v3868 = vpack.c.b16 %v3640, %v3638
        %v3869 = vpack.c.b16 %v3641, %v3639
        %v3870 = vpack.c.b16 %v3644, %v3642
        %v3871 = vpack.c.b16 %v3645, %v3643
        %v3872 = vpack.c.b16 %v3648, %v3646
        %v3873 = vpack.c.b16 %v3649, %v3647
        %v3874 = vpack.c.b16 %v3652, %v3650
        %v3875 = vpack.c.b16 %v3653, %v3651
        %v3876 = vpack.c.b16 %v3656, %v3654
        %v3877 = vpack.c.b16 %v3657, %v3655
        %v3878 = vpack.c.b16 %v3660, %v3658
        %v3879 = vpack.c.b16 %v3661, %v3659
        %v3880 = vpack.c.b16 %v3664, %v3662
        %v3881 = vpack.c.b16 %v3665, %v3663
        %v3882 = vpack.c.b16 %v3668, %v3666
        %v3883 = vpack.c.b16 %v3669, %v3667
        %v3884 = vpack.c.b16 %v3672, %v3670
        %v3885 = vpack.c.b16 %v3673, %v3671
        %v3886 = vpack.c.b16 %v3676, %v3674
        %v3887 = vpack.c.b16 %v3677, %v3675
        %v3888 = vpack.c.b16 %v3680, %v3678
        %v3889 = vpack.c.b16 %v3681, %v3679
        %v3890 = vpack.c.b16 %v3684, %v3682
        %v3891 = vpack.c.b16 %v3685, %v3683
        %v3892 = vpack.c.b16 %v3688, %v3686
        %v3893 = vpack.c.b16 %v3689, %v3687
        %v3894 = vpack.c.b16 %v3692, %v3690
        %v3895 = vpack.c.b16 %v3693, %v3691
        %v3896 = vpack.c.b16 %v3696, %v3694
        %v3897 = vpack.c.b16 %v3697, %v3695
        %v3898 = vpack.c.b16 %v3700, %v3698
        %v3899 = vpack.c.b16 %v3701, %v3699
        %v3900 = vpack.c.b16 %v3704, %v3702
        %v3901 = vpack.c.b16 %v3705, %v3703
        %v3902 = vpack.c.b16 %v3708, %v3706
        %v3903 = vpack.c.b16 %v3709, %v3707
        %v3904 = vpack.c.b16 %v3712, %v3710
        %v3905 = vpack.c.b16 %v3713, %v3711
        %v3906 = vpack.c.b16 %v3716, %v3714
        %v3907 = vpack.c.b16 %v3717, %v3715
        %v3908 = vpack.c.b16 %v3720, %v3718
        %v3909 = vpack.c.b16 %v3721, %v3719
        %v3910 = vpack.c.b16 %v3724, %v3722
        %v3911 = vpack.c.b16 %v3725, %v3723
        %v3912 = vpack.c.b16 %v3728, %v3726
        %v3913 = vpack.c.b16 %v3729, %v3727
        %v3914 = vpack.c.b16 %v3732, %v3730
        %v3915 = vpack.c.b16 %v3733, %v3731
        %v3916 = vpack.c.b16 %v3736, %v3734
        %v3917 = vpack.c.b16 %v3737, %v3735
        %v3918 = vpack.c.b16 %v3740, %v3738
        %v3919 = vpack.c.b16 %v3741, %v3739
        %v3920 = vpack.c.b16 %v3744, %v3742
        %v3921 = vpack.c.b16 %v3745, %v3743
        %v3922 = vpack.c.b16 %v3748, %v3746
        %v3923 = vpack.c.b16 %v3749, %v3747
        %v3924 = vpack.c.b16 %v3752, %v3750
        %v3925 = vpack.c.b16 %v3753, %v3751
        %v3926 = vpack.c.b16 %v3756, %v3754
        %v3927 = vpack.c.b16 %v3757, %v3755
        %v3928 = vpack.c.b16 %v3760, %v3758
        %v3929 = vpack.c.b16 %v3761, %v3759
        %v3930 = vpack.c.b16 %v3764, %v3762
        %v3931 = vpack.c.b16 %v3765, %v3763
        %v3932 = vpack.c.b16 %v3768, %v3766
        %v3933 = vpack.c.b16 %v3769, %v3767
        %v3934 = vpack.c.b16 %v3772, %v3770
        %v3935 = vpack.c.b16 %v3773, %v3771
        %v3936 = vpack.c.b16 %v3776, %v3774
        %v3937 = vpack.c.b16 %v3777, %v3775
        %v3938 = vpack.c.b16 %v3780, %v3778
        %v3939 = vpack.c.b16 %v3781, %v3779
        %v3940 = vpack.c.b16 %v3784, %v3782
        %v3941 = vpack.c.b16 %v3785, %v3783
        %v3942 = vpack.c.b16 %v3788, %v3786
        %v3943 = vpack.c.b16 %v3789, %v3787
        %v3944 = vpack.c.b16 %v3792, %v3790
        %v3945 = vpack.c.b16 %v3793, %v3791
        %v3946 = vpack.c.b16 %v3796, %v3794
        %v3947 = vpack.c.b16 %v3797, %v3795
        %v3948 = vpack.c.b16 %v3800, %v3798
        %v3949 = vpack.c.b16 %v3801, %v3799
        %v3950 = vpack.c.b16 %v3804, %v3802
        %v3951 = vpack.c.b16 %v3805, %v3803
        %v3952 = vpack.c.b16 %v3808, %v3806
        %v3953 = vpack.c.b16 %v3809, %v3807
        %v3954 = vpack.c.b16 %v3812, %v3810
        %v3955 = vpack.c.b16 %v3813, %v3811
        %v3956 = vpack.c.b16 %v3816, %v3814
        %v3957 = vpack.c.b16 %v3817, %v3815
        %v3958 = vpack.c.b16 %v3820, %v3818
        %v3959 = vpack.c.b16 %v3821, %v3819
        %v3960 = vpack.c.b16 %v3824, %v3822
        %v3961 = vpack.c.b16 %v3825, %v3823
        %v3962 = vpack.c.b16 %v3828, %v3826
        %v3963 = vpack.c.b16 %v3829, %v3827
        %v3964 = vpack.c.b16 %v3832, %v3830
        %v3965 = vpack.c.b16 %v3833, %v3831
        %v3966 = vpack.c.b16 %v3836, %v3834
        %v3967 = vpack.c.b16 %v3837, %v3835
        %v3968 = vpack.c.b16 %v3840, %v3838
        %v3969 = vpack.c.b16 %v3841, %v3839
        %4098 = vmatpush.bf16.msra.mxu0 %v3856
        %4099 = vmatpush.bf16.msra.mxu0 %v3854
        %4100 = vmatpush.bf16.msra.mxu0 %v3852
        %4101 = vmatpush.bf16.msra.mxu0 %v3850
        %4102 = vmatpush.bf16.msra.mxu0 %v3848
        %4103 = vmatpush.bf16.msra.mxu0 %v3846
        %4104 = vmatpush.bf16.msra.mxu0 %v3844
        %4105 = vmatpush.bf16.msra.mxu0 %v3842
        %4106 = vmatmul.bf16.gmra.mxu0 %v3316
        %v4107 = vpop.f32.mrf.mxu0
        %v4108 = vadd.f32 %v3454, %v4107
        %v4109 = vpop.f32.mrf.mxu0
        %4110 = vdwg.mxu0
        %4111 = vmatpush.bf16.msra.mxu0 %v3872
        %4112 = vmatpush.bf16.msra.mxu0 %v3870
        %4113 = vmatpush.bf16.msra.mxu0 %v3868
        %4114 = vmatpush.bf16.msra.mxu0 %v3866
        %4115 = vmatpush.bf16.msra.mxu0 %v3864
        %4116 = vmatpush.bf16.msra.mxu0 %v3862
        %4117 = vmatpush.bf16.msra.mxu0 %v3860
        %4118 = vmatpush.bf16.msra.mxu0 %v3858
        %4119 = vmatmul.bf16.gmra.mxu0 %v3317
        %v4120 = vpop.f32.mrf.mxu0
        %v4121 = vadd.f32 %v4108, %v4120
        %v4122 = vpop.f32.mrf.mxu0
        %4123 = vdwg.mxu0
        %4124 = vmatpush.bf16.msra.mxu0 %v3888
        %4125 = vmatpush.bf16.msra.mxu0 %v3886
        %4126 = vmatpush.bf16.msra.mxu0 %v3884
        %4127 = vmatpush.bf16.msra.mxu0 %v3882
        %4128 = vmatpush.bf16.msra.mxu0 %v3880
        %4129 = vmatpush.bf16.msra.mxu0 %v3878
        %4130 = vmatpush.bf16.msra.mxu0 %v3876
        %4131 = vmatpush.bf16.msra.mxu0 %v3874
        %4132 = vmatmul.bf16.gmra.mxu0 %v3318
        %v4133 = vpop.f32.mrf.mxu0
        %v4134 = vadd.f32 %v4121, %v4133
        %v4135 = vpop.f32.mrf.mxu0
        %4136 = vdwg.mxu0
        %4137 = vmatpush.bf16.msra.mxu0 %v3904
        %4138 = vmatpush.bf16.msra.mxu0 %v3902
        %4139 = vmatpush.bf16.msra.mxu0 %v3900
        %4140 = vmatpush.bf16.msra.mxu0 %v3898
        %4141 = vmatpush.bf16.msra.mxu0 %v3896
        %4142 = vmatpush.bf16.msra.mxu0 %v3894
        %4143 = vmatpush.bf16.msra.mxu0 %v3892
        %4144 = vmatpush.bf16.msra.mxu0 %v3890
        %4145 = vmatmul.bf16.gmra.mxu0 %v3319
        %v4146 = vpop.f32.mrf.mxu0
        %v4147 = vadd.f32 %v4134, %v4146
        %v4148 = vpop.f32.mrf.mxu0
        %4149 = vdwg.mxu0
        %4150 = vmatpush.bf16.msra.mxu0 %v3920
        %4151 = vmatpush.bf16.msra.mxu0 %v3918
        %4152 = vmatpush.bf16.msra.mxu0 %v3916
        %4153 = vmatpush.bf16.msra.mxu0 %v3914
        %4154 = vmatpush.bf16.msra.mxu0 %v3912
        %4155 = vmatpush.bf16.msra.mxu0 %v3910
        %4156 = vmatpush.bf16.msra.mxu0 %v3908
        %4157 = vmatpush.bf16.msra.mxu0 %v3906
        %4158 = vmatmul.bf16.gmra.mxu0 %v3320
        %v4159 = vpop.f32.mrf.mxu0
        %v4160 = vadd.f32 %v4147, %v4159
        %v4161 = vpop.f32.mrf.mxu0
        %4162 = vdwg.mxu0
        %4163 = vmatpush.bf16.msra.mxu0 %v3936
        %4164 = vmatpush.bf16.msra.mxu0 %v3934
        %4165 = vmatpush.bf16.msra.mxu0 %v3932
        %4166 = vmatpush.bf16.msra.mxu0 %v3930
        %4167 = vmatpush.bf16.msra.mxu0 %v3928
        %4168 = vmatpush.bf16.msra.mxu0 %v3926
        %4169 = vmatpush.bf16.msra.mxu0 %v3924
        %4170 = vmatpush.bf16.msra.mxu0 %v3922
        %4171 = vmatmul.bf16.gmra.mxu0 %v3321
        %v4172 = vpop.f32.mrf.mxu0
        %v4173 = vadd.f32 %v4160, %v4172
        %v4174 = vpop.f32.mrf.mxu0
        %4175 = vdwg.mxu0
        %4176 = vmatpush.bf16.msra.mxu0 %v3952
        %4177 = vmatpush.bf16.msra.mxu0 %v3950
        %4178 = vmatpush.bf16.msra.mxu0 %v3948
        %4179 = vmatpush.bf16.msra.mxu0 %v3946
        %4180 = vmatpush.bf16.msra.mxu0 %v3944
        %4181 = vmatpush.bf16.msra.mxu0 %v3942
        %4182 = vmatpush.bf16.msra.mxu0 %v3940
        %4183 = vmatpush.bf16.msra.mxu0 %v3938
        %4184 = vmatmul.bf16.gmra.mxu0 %v3322
        %v4185 = vpop.f32.mrf.mxu0
        %v4186 = vadd.f32 %v4173, %v4185
        %v4187 = vpop.f32.mrf.mxu0
        %4188 = vdwg.mxu0
        %4189 = vmatpush.bf16.msra.mxu0 %v3968
        %4190 = vmatpush.bf16.msra.mxu0 %v3966
        %4191 = vmatpush.bf16.msra.mxu0 %v3964
        %4192 = vmatpush.bf16.msra.mxu0 %v3962
        %4193 = vmatpush.bf16.msra.mxu0 %v3960
        %4194 = vmatpush.bf16.msra.mxu0 %v3958
        %4195 = vmatpush.bf16.msra.mxu0 %v3956
        %4196 = vmatpush.bf16.msra.mxu0 %v3954
        %4197 = vmatmul.bf16.gmra.mxu0 %v3323
        %v4198 = vpop.f32.mrf.mxu0
        %v4199 = vadd.f32 %v4186, %v4198
        %v4200 = vpop.f32.mrf.mxu0
        %4201 = vdwg.mxu0
        %4202 = vmatpush.bf16.msra.mxu0 %v3857
        %4203 = vmatpush.bf16.msra.mxu0 %v3855
        %4204 = vmatpush.bf16.msra.mxu0 %v3853
        %4205 = vmatpush.bf16.msra.mxu0 %v3851
        %4206 = vmatpush.bf16.msra.mxu0 %v3849
        %4207 = vmatpush.bf16.msra.mxu0 %v3847
        %4208 = vmatpush.bf16.msra.mxu0 %v3845
        %4209 = vmatpush.bf16.msra.mxu0 %v3843
        %4210 = vmatmul.bf16.gmra.mxu0 %v3316
        %v4211 = vpop.f32.mrf.mxu0
        %v4212 = vadd.f32 %v3455, %v4211
        %v4213 = vpop.f32.mrf.mxu0
        %4214 = vdwg.mxu0
        %4215 = vmatpush.bf16.msra.mxu0 %v3873
        %4216 = vmatpush.bf16.msra.mxu0 %v3871
        %4217 = vmatpush.bf16.msra.mxu0 %v3869
        %4218 = vmatpush.bf16.msra.mxu0 %v3867
        %4219 = vmatpush.bf16.msra.mxu0 %v3865
        %4220 = vmatpush.bf16.msra.mxu0 %v3863
        %4221 = vmatpush.bf16.msra.mxu0 %v3861
        %4222 = vmatpush.bf16.msra.mxu0 %v3859
        %4223 = vmatmul.bf16.gmra.mxu0 %v3317
        %v4224 = vpop.f32.mrf.mxu0
        %v4225 = vadd.f32 %v4212, %v4224
        %v4226 = vpop.f32.mrf.mxu0
        %4227 = vdwg.mxu0
        %4228 = vmatpush.bf16.msra.mxu0 %v3889
        %4229 = vmatpush.bf16.msra.mxu0 %v3887
        %4230 = vmatpush.bf16.msra.mxu0 %v3885
        %4231 = vmatpush.bf16.msra.mxu0 %v3883
        %4232 = vmatpush.bf16.msra.mxu0 %v3881
        %4233 = vmatpush.bf16.msra.mxu0 %v3879
        %4234 = vmatpush.bf16.msra.mxu0 %v3877
        %4235 = vmatpush.bf16.msra.mxu0 %v3875
        %4236 = vmatmul.bf16.gmra.mxu0 %v3318
        %v4237 = vpop.f32.mrf.mxu0
        %v4238 = vadd.f32 %v4225, %v4237
        %v4239 = vpop.f32.mrf.mxu0
        %4240 = vdwg.mxu0
        %4241 = vmatpush.bf16.msra.mxu0 %v3905
        %4242 = vmatpush.bf16.msra.mxu0 %v3903
        %4243 = vmatpush.bf16.msra.mxu0 %v3901
        %4244 = vmatpush.bf16.msra.mxu0 %v3899
        %4245 = vmatpush.bf16.msra.mxu0 %v3897
        %4246 = vmatpush.bf16.msra.mxu0 %v3895
        %4247 = vmatpush.bf16.msra.mxu0 %v3893
        %4248 = vmatpush.bf16.msra.mxu0 %v3891
        %4249 = vmatmul.bf16.gmra.mxu0 %v3319
        %v4250 = vpop.f32.mrf.mxu0
        %v4251 = vadd.f32 %v4238, %v4250
        %v4252 = vpop.f32.mrf.mxu0
        %4253 = vdwg.mxu0
        %4254 = vmatpush.bf16.msra.mxu0 %v3921
        %4255 = vmatpush.bf16.msra.mxu0 %v3919
        %4256 = vmatpush.bf16.msra.mxu0 %v3917
        %4257 = vmatpush.bf16.msra.mxu0 %v3915
        %4258 = vmatpush.bf16.msra.mxu0 %v3913
        %4259 = vmatpush.bf16.msra.mxu0 %v3911
        %4260 = vmatpush.bf16.msra.mxu0 %v3909
        %4261 = vmatpush.bf16.msra.mxu0 %v3907
        %4262 = vmatmul.bf16.gmra.mxu0 %v3320
        %v4263 = vpop.f32.mrf.mxu0
        %v4264 = vadd.f32 %v4251, %v4263
        %v4265 = vpop.f32.mrf.mxu0
        %4266 = vdwg.mxu0
        %4267 = vmatpush.bf16.msra.mxu0 %v3937
        %4268 = vmatpush.bf16.msra.mxu0 %v3935
        %4269 = vmatpush.bf16.msra.mxu0 %v3933
        %4270 = vmatpush.bf16.msra.mxu0 %v3931
        %4271 = vmatpush.bf16.msra.mxu0 %v3929
        %4272 = vmatpush.bf16.msra.mxu0 %v3927
        %4273 = vmatpush.bf16.msra.mxu0 %v3925
        %4274 = vmatpush.bf16.msra.mxu0 %v3923
        %4275 = vmatmul.bf16.gmra.mxu0 %v3321
        %v4276 = vpop.f32.mrf.mxu0
        %v4277 = vadd.f32 %v4264, %v4276
        %v4278 = vpop.f32.mrf.mxu0
        %4279 = vdwg.mxu0
        %4280 = vmatpush.bf16.msra.mxu0 %v3953
        %4281 = vmatpush.bf16.msra.mxu0 %v3951
        %4282 = vmatpush.bf16.msra.mxu0 %v3949
        %4283 = vmatpush.bf16.msra.mxu0 %v3947
        %4284 = vmatpush.bf16.msra.mxu0 %v3945
        %4285 = vmatpush.bf16.msra.mxu0 %v3943
        %4286 = vmatpush.bf16.msra.mxu0 %v3941
        %4287 = vmatpush.bf16.msra.mxu0 %v3939
        %4288 = vmatmul.bf16.gmra.mxu0 %v3322
        %v4289 = vpop.f32.mrf.mxu0
        %v4290 = vadd.f32 %v4277, %v4289
        %v4291 = vpop.f32.mrf.mxu0
        %4292 = vdwg.mxu0
        %4293 = vmatpush.bf16.msra.mxu0 %v3969
        %4294 = vmatpush.bf16.msra.mxu0 %v3967
        %4295 = vmatpush.bf16.msra.mxu0 %v3965
        %4296 = vmatpush.bf16.msra.mxu0 %v3963
        %4297 = vmatpush.bf16.msra.mxu0 %v3961
        %4298 = vmatpush.bf16.msra.mxu0 %v3959
        %4299 = vmatpush.bf16.msra.mxu0 %v3957
        %4300 = vmatpush.bf16.msra.mxu0 %v3955
        %4301 = vmatmul.bf16.gmra.mxu0 %v3323
        %v4302 = vpop.f32.mrf.mxu0
        %v4303 = vadd.f32 %v4290, %v4302
        %v4304 = vpop.f32.mrf.mxu0
        %4305 = vdwg.mxu0
        %v4306 = vadd.f32 %v2094, %v4199
        %v4307 = vadd.f32 %v2095, %v4303
        %v4308 = vld [vmem:[%s10] sm:$0x3]
        %v4309 = vld [vmem:[%s11] sm:$0x3]
        %v4310 = vadd.f32 %v4306, %v4307
        %4311 = vadd.xlane.f32.xlu0 %v4310
        %v4312 = vpop.xlane.xlu0 %4311
        %v4313 = vmul.f32 %v4312, %v2059
        %v4314 = vsub.f32 %v4306, %v4313
        %v4315 = vsub.f32 %v4307, %v4313
        %v4316 = vmul.f32 %v4314, %v4314
        %v4317 = vmul.f32 %v4315, %v4315
        %v4318 = vadd.f32 %v4316, %v4317
        %4319 = vadd.xlane.f32.xlu0 %v4318
        %v4320 = vpop.xlane.xlu0 %4319
        %v4321 = vmul.f32 %v4320, %v2059
        %v4322 = vadd.f32 %v4321, 1e-05
        %v4323 = vrsqrt.pop %v4322
        %v4324 = vmul.f32 %v4323, %v4322
        %v4325 = vmul.f32 %v4324, %v4323
        %v4326 = vmul.f32 0.5, %v4325
        %v4327 = vsub.f32 1.5, %v4326
        %v4328 = vmul.f32 %v4323, %v4327
        %vm4329 = vweird.f32 %v4322
        %vm4330 = vweird.f32 %v4323
        %vm4331 = vmor %vm4329, %vm4330
        %v4332 = vsel %vm4331, %v4323, %v4328
        %v4333 = vmul.f32 %v4314, %v4332
        %v4334 = vmul.f32 %v4315, %v4332
        %v4336 = vperm.slane %v4308, 0
        %v4337 = vperm.slane %v4308, 1
        %v4340 = vmul.f32 %v4333, %v4336
        %v4341 = vmul.f32 %v4334, %v4337
        %v4343 = vperm.slane %v4309, 0
        %v4344 = vperm.slane %v4309, 1
        %v4347 = vadd.f32 %v4340, %v4343
        %v4348 = vadd.f32 %v4341, %v4344
        %4349 = vst [vmem:[%s452] sm:$0xff] %v4347
        %4350 = vst [vmem:[%s452 + $0x8] sm:$0xff] %v4348
        %s4351 = sand.u32 %s301, 1
        %s4352 = scalar_lea.sflag [#allocation3], %s4351
        %s4353 = sand.u32 %s301, 1
        %s4354 = smul.addr %s4353, 16
        %s4355 = scalar_lea.vmem [#allocation2], %s4354
        %s4356 = sand.u32 %s327, 1
        %s4357 = scalar_lea.sflag [#allocation5], %s4356
        %s4358 = sand.u32 %s327, 1
        %s4359 = smul.addr %s4358, 64
        %s4360 = scalar_lea.vmem [#allocation4], %s4359
        // Predicated region
        $region69: #{_res_encoder_block_call.1} parent=67 // pred_check
          %p4361 = pneg %p311
        $region70: #{_res_encoder_block_call.1} parent=67 // pred_check_branch
          %4363 = sbr.rel (%p4361) target = $region72
        $region71: #{_res_encoder_block_call.1} parent=67 // pred_region
          %4365 = vsyncadd %s4352, 0
          %s4366 = smul.addr %s31, 2
          %s4367 = smul.addr %s4366, 8
          %s4368 = scalar_lea.hbm %s12, %s4367
          %s4370 = sshll.u32 %s4355, 4
          %s4371 = int_to_ptr.vmem [resolvable:$true] %s4370
          %s4372 = sshll.u32 %s4368, 4
          %s4373 = int_to_ptr.hbm [resolvable:$true] %s4372
          %4375 = dma.vmem_to_hbm [thread:$0]  %s4371, 256, %s4373, %s4352
        $region72: #{_res_encoder_block_call.1} parent=67 // pred_fallthru
          _
        // Predicated region
        $region73: #{_res_encoder_block_call.1} parent=67 // pred_check
          %p4376 = pneg %p337
        $region74: #{_res_encoder_block_call.1} parent=67 // pred_check_branch
          %4378 = sbr.rel (%p4376) target = $region76
        $region75: #{_res_encoder_block_call.1} parent=67 // pred_region
          %4380 = vsyncadd %s4357, 0
          %s4381 = smul.addr %s31, 8
          %s4382 = smul.addr %s4381, 8
          %s4383 = scalar_lea.hbm %s13, %s4382
          %s4384 = sshll.u32 %s4360, 4
          %s4385 = int_to_ptr.vmem [resolvable:$true] %s4384
          %s4386 = sshll.u32 %s4383, 4
          %s4387 = int_to_ptr.hbm [resolvable:$true] %s4386
          %4392 = dma.vmem_to_hbm [thread:$0]  %s4385, 1024, %s4387, %s4357, 128, 128, 8
        $region76: #{_res_encoder_block_call.1} parent=67 // pred_fallthru
          _
      $region68: #{_res_encoder_block_call.1} parent=5 // pred_fallthru
        _
      %p4393 = scmp.le.s32.totalorder 2, %s26
      // Predicated region
      $region77: #{_res_encoder_block_call.1} parent=5 // pred_check
        %p4394 = pneg %p4393
      $region78: #{_res_encoder_block_call.1} parent=5 // pred_check_branch
        %4396 = sbr.rel (%p4394) target = $region80
      $region79: #{_res_encoder_block_call.1} parent=5 // pred_region
        %s4397 = ssub.s32 %s26, 2
        // Predicated region
        $region81: #{_res_encoder_block_call.1} parent=79 // pred_check
          %p4398 = pneg %p317
        $region82: #{_res_encoder_block_call.1} parent=79 // pred_check_branch
          %4400 = sbr.rel (%p4398) target = $region84
        $region83: #{_res_encoder_block_call.1} parent=79 // pred_region
          %s4401 = sand.u32 %s302, 1
          %s4402 = scalar_lea.sflag [#allocation3], %s4401
          %s4403 = sand.u32 %s302, 1
          %s4404 = smul.addr %s4403, 16
          %s4405 = scalar_lea.vmem [#allocation2], %s4404
          %4407 = dma.done %s4402, 256
        $region84: #{_res_encoder_block_call.1} parent=79 // pred_fallthru
          _
        // Predicated region
        $region85: #{_res_encoder_block_call.1} parent=79 // pred_check
          %p4408 = pneg %p343
        $region86: #{_res_encoder_block_call.1} parent=79 // pred_check_branch
          %4410 = sbr.rel (%p4408) target = $region88
        $region87: #{_res_encoder_block_call.1} parent=79 // pred_region
          %s4411 = sand.u32 %s328, 1
          %s4412 = scalar_lea.sflag [#allocation5], %s4411
          %s4413 = sand.u32 %s328, 1
          %s4414 = smul.addr %s4413, 64
          %s4415 = scalar_lea.vmem [#allocation4], %s4414
          %4417 = dma.done %s4412, 1024
        $region88: #{_res_encoder_block_call.1} parent=79 // pred_fallthru
          _
      $region80: #{_res_encoder_block_call.1} parent=5 // pred_fallthru
        _
    $region6: #{_res_encoder_block_call.1} parent=1 // loop_footer
      %s30 = sadd.s32 1, %s26
    $region7: #{_res_encoder_block_call.1} parent=1 // loop_footer_branch
      %25 = sbr.rel target = $region3
    $region8: #{_res_encoder_block_call.1} parent=1 // loop_exit
      _
    %4418 = vsyncpa [#allocation3], 1
    %s4419 = scalar_lea.sflag [#allocation3], 1
    %4420 = vsyncpa %s4419, 1
    %4421 = vsyncpa [#allocation5], 1
    %s4422 = scalar_lea.sflag [#allocation5], 1
    %4423 = vsyncpa %s4422, 1

</llo_original>
